<compile_context>
chip_gen: v7x
topology: tpu7x:2x2x1
jax: 0.10.0
libtpu: 0.0.40
codegen_flags: <defaults>
</compile_context>

<pallas_src>
import numpy as np

import jax
import jax.numpy as jnp
from jax.experimental import pallas as pl
from jax.experimental.pallas import tpu as pltpu

# ----------------------------- configuration --------------------------------
IN_CHANNELS = 3
N_CLASSES = 4
IMAGE_SIZE = (16, 16)
LATENT_DIM = 8
CHANNEL_MULTIPLIERS = [1, 2]                    # as passed to __init__
BASE_CHANNELS = 8
BN_EPS = 1e-5
LRELU_SLOPE = 0.2

CM_REV = list(reversed(CHANNEL_MULTIPLIERS))    # [2, 1] (module reverses in place)
REDUCED = tuple(s // (2 ** len(CHANNEL_MULTIPLIERS)) for s in IMAGE_SIZE)   # (4, 4)

C_LIN = BASE_CHANNELS * CM_REV[0]               # 16 channels after the initial Linear
C_MID = BASE_CHANNELS * CM_REV[1]               # 8  channels after the mid ConvTranspose
H_IN, W_IN = REDUCED                            # 4, 4
H_MID, W_MID = 2 * H_IN, 2 * W_IN               # 8, 8   (ConvTranspose stride 2)
H_OUT, W_OUT = IMAGE_SIZE                       # 16, 16 (after Upsample x2)

D_IN = LATENT_DIM + N_CLASSES                   # 12
D_LIN = C_LIN * H_IN * W_IN                     # 256
D_MID = C_MID * H_MID * W_MID                   # 512
D_OUT = IN_CHANNELS * H_OUT * W_OUT             # 768 (= 6 * 128, lane-dense)


# ------------------------------- Pallas kernel -------------------------------
def _generator_kernel(z_ref, lab_ref, w0z_ref, w0l_ref, b0_ref,
                      wt_ref, g_ref, gamma_ref, beta_ref, wf_ref, o_ref):
    f32 = jnp.float32

    # (1) initial Linear on cat(z, labels): weight is split so cat() is just
    #     two matmuls (no in-kernel or glue concatenate).
    h0 = (jnp.dot(z_ref[...], w0z_ref[...], preferred_element_type=f32)
          + jnp.dot(lab_ref[...], w0l_ref[...], preferred_element_type=f32)
          + b0_ref[...])                                           # (B, 256) f32

    # (2) ConvTranspose2d(16->8, k=4, s=2, p=1) as ONE dense matmul over the
    #     NCHW-flattened feature map (bf16 weights, f32 accumulation).
    y1 = jnp.dot(h0.astype(wt_ref.dtype), wt_ref[...],
                 preferred_element_type=f32)                       # (B, 512) f32

    # (3) BatchNorm2d(C_MID) with training-mode (biased) batch statistics over
    #     (N, H, W).  Columns are NCHW-flat, so multiplying by the symmetric
    #     block-diagonal indicator matrix G both pools each channel's 64
    #     spatial columns and broadcasts the result back per column -> no
    #     in-kernel reshape / transpose needed.
    n_red = z_ref.shape[0] * H_MID * W_MID                         # N * H * W
    grp_sum = jnp.dot(y1, g_ref[...], preferred_element_type=f32)  # (B, 512)
    mean = jnp.sum(grp_sum, axis=0, keepdims=True) * (1.0 / n_red) # (1, 512)
    d = y1 - mean
    grp_sq = jnp.dot(d * d, g_ref[...], preferred_element_type=f32)
    var = jnp.sum(grp_sq, axis=0, keepdims=True) * (1.0 / n_red)   # (1, 512)
    a1 = d * (gamma_ref[...] * jax.lax.rsqrt(var + BN_EPS)) + beta_ref[...]
    # TODO(synk): BatchNorm2d running_mean / running_var buffer updates
    # (momentum, unbiased variance) are not modeled; they do not affect the
    # training-mode forward output.

    # (4) LeakyReLU(0.2) — kept in f32 (v5e has no bf16 VPU/EUP).
    a1 = jnp.where(a1 >= 0, a1, LRELU_SLOPE * a1)                  # (B, 512)

    # (5) Upsample(x2, nearest) + Conv2d(8->3, k=3, s=1, p=1) folded into ONE
    #     dense matmul, then Sigmoid.  Output columns are NCHW-flattened, so
    #     the store is lane-dense (768 = 6 * 128): no masked vst, no transpose.
    y2 = jnp.dot(a1.astype(wf_ref.dtype), wf_ref[...],
                 preferred_element_type=f32)                       # (B, 768) f32
    o_ref[...] = jax.nn.sigmoid(y2).astype(o_ref.dtype)


# ------------------- init-time lowering of the tiny convolutions -------------
def _build_convtranspose_matrix(w, h_in, w_in, stride, pad):
    """PyTorch ConvTranspose2d weight (Cin, Cout, KH, KW) -> dense matrix
    (Cin*h_in*w_in, Cout*h_out*w_out) acting on NCHW-flattened maps."""
    cin, cout, kh, kw = w.shape
    h_out = (h_in - 1) * stride - 2 * pad + kh
    w_out = (w_in - 1) * stride - 2 * pad + kw
    m = np.zeros((cin * h_in * w_in, cout * h_out * w_out), np.float32)
    for ci in range(cin):
        for iy in range(h_in):
            for ix in range(w_in):
                jin = (ci * h_in + iy) * w_in + ix
                for co in range(cout):
                    for ky in range(kh):
                        oy = iy * stride - pad + ky
                        if oy < 0 or oy >= h_out:
                            continue
                        for kx in range(kw):
                            ox = ix * stride - pad + kx
                            if ox < 0 or ox >= w_out:
                                continue
                            jout = (co * h_out + oy) * w_out + ox
                            m[jin, jout] += w[ci, co, ky, kx]
    return m


def _build_upsample_conv_matrix(w, h_in, w_in, scale, pad):
    """nearest Upsample(x scale) followed by PyTorch Conv2d (Cout, Cin, KH, KW)
    with stride 1 / padding `pad`, folded into one dense matrix
    (Cin*h_in*w_in, Cout*h_up*w_up) acting on NCHW-flattened maps."""
    cout, cin, kh, kw = w.shape
    h_up, w_up = h_in * scale, w_in * scale
    m = np.zeros((cin * h_in * w_in, cout * h_up * w_up), np.float32)
    for co in range(cout):
        for oy in range(h_up):
            for ox in range(w_up):
                jout = (co * h_up + oy) * w_up + ox
                for ci in range(cin):
                    for ky in range(kh):
                        uy = oy - pad + ky
                        if uy < 0 or uy >= h_up:
                            continue
                        iy = uy // scale            # nearest: floor(dst/scale)
                        for kx in range(kw):
                            ux = ox - pad + kx
                            if ux < 0 or ux >= w_up:
                                continue
                            ix = ux // scale
                            jin = (ci * h_in + iy) * w_in + ix
                            m[jin, jout] += w[co, ci, ky, kx]
    return m


def init_params(key):
    k0, k1, k2, k3 = jax.random.split(key, 4)
    # Random parameters in PyTorch layout (deterministic via PRNGKey).
    w0 = 0.05 * jax.random.normal(k0, (D_IN, D_LIN), jnp.float32)      # Linear W^T
    b0 = 0.01 * jax.random.normal(k1, (D_LIN,), jnp.float32)
    wt = 0.05 * jax.random.normal(k2, (C_LIN, C_MID, 4, 4), jnp.float32)         # ConvTranspose2d
    wf = 0.05 * jax.random.normal(k3, (IN_CHANNELS, C_MID, 3, 3), jnp.float32)   # final Conv2d

    # NOTE: this mirrored config has exactly one mid (ConvT+BN+LReLU) block
    # (zip([2,1],[1])); a longer channel_multipliers list would add one
    # (dense ConvT matrix, BN params) pair per extra block.
    wt_mat = _build_convtranspose_matrix(np.asarray(wt), H_IN, W_IN,
                                         stride=2, pad=1)           # (256, 512)
    wf_mat = _build_upsample_conv_matrix(np.asarray(wf), H_MID, W_MID,
                                         scale=2, pad=1)            # (512, 768)

    # Block-diagonal group indicator: G[j', j] = 1 iff columns j', j belong to
    # the same BatchNorm channel (64 spatial columns per channel).
    hw = H_MID * W_MID
    gmat = np.zeros((D_MID, D_MID), np.float32)
    for c in range(C_MID):
        gmat[c * hw:(c + 1) * hw, c * hw:(c + 1) * hw] = 1.0

    # BatchNorm affine params, pre-broadcast to the NCHW column layout.
    gamma_full = np.repeat(np.ones((C_MID,), np.float32), hw).reshape(1, D_MID)
    beta_full = np.repeat(np.zeros((C_MID,), np.float32), hw).reshape(1, D_MID)

    return {
        "w0z": w0[:LATENT_DIM, :],                    # (8, 256)  f32
        "w0l": w0[LATENT_DIM:, :],                    # (4, 256)  f32
        "b0": b0.reshape(1, D_LIN),                   # (1, 256)  f32
        "wt": jnp.asarray(wt_mat, jnp.bfloat16),      # (256, 512) bf16 (f32 acc in-kernel)
        "wf": jnp.asarray(wf_mat, jnp.bfloat16),      # (512, 768) bf16
        "gmat": jnp.asarray(gmat),                    # (512, 512) f32
        "gamma": jnp.asarray(gamma_full),             # (1, 512)   f32
        "beta": jnp.asarray(beta_full),               # (1, 512)   f32
    }


# --------------------------------- forward -----------------------------------
@jax.jit
def conditioned_generator_forward(z, labels, params):
    batch = z.shape[0]
    args = (z, labels, params["w0z"], params["w0l"], params["b0"],
            params["wt"], params["gmat"], params["gamma"], params["beta"],
            params["wf"])
    out_flat = pl.pallas_call(
        _generator_kernel,
        out_shape=jax.ShapeDtypeStruct((batch, D_OUT), jnp.float32),
        grid=(1,),                      # whole problem in one VMEM-resident step
        in_specs=[pl.BlockSpec(a.shape, lambda i: (0, 0)) for a in args],
        out_specs=pl.BlockSpec((batch, D_OUT), lambda i: (0, 0)),
        compiler_params=pltpu.CompilerParams(
            dimension_semantics=("arbitrary",)),
        # VMEM footprint ~2 MiB (dominated by the fixed dense weights), far
        # under the scoped default on v5e/v6e/v7x -> no vmem_limit_bytes
        # override needed at this batch.  If batch were scaled by O(1000x),
        # tile the batch dimension instead of growing this single block.
    )(*args)
    # Columns are already NCHW-flattened -> free metadata reshape, no transpose.
    return out_flat.reshape(batch, IN_CHANNELS, H_OUT, W_OUT)


# ----------------------------------- main ------------------------------------
if __name__ == "__main__":
    key = jax.random.PRNGKey(0)
    kz, kl, kp = jax.random.split(key, 3)

    batch = 2
    z = jax.random.normal(kz, (batch, LATENT_DIM), jnp.float32)
    label_ids = jax.random.randint(kl, (batch,), 0, N_CLASSES)
    labels = jax.nn.one_hot(label_ids, N_CLASSES, dtype=jnp.float32)

    params = init_params(kp)

    out = conditioned_generator_forward(z, labels, params)
    out = jax.block_until_ready(out)

    expected_shape = (batch, IN_CHANNELS, IMAGE_SIZE[0], IMAGE_SIZE[1])
    assert out.shape == expected_shape, (out.shape, expected_shape)
    assert bool(jnp.all(jnp.isfinite(out)))
    assert bool(jnp.all((out >= 0.0) & (out <= 1.0)))     # sigmoid range

    print("KERNEL_OK")
</pallas_src>

<mosaic_0001>
module attributes {stable_mosaic.version = 11 : i64} {
  func.func @_generator_kernel(%arg0: i32, %arg1: memref<2x8xf32, #tpu.memory_space<vmem>>, %arg2: memref<2x4xf32, #tpu.memory_space<vmem>>, %arg3: memref<8x256xf32, #tpu.memory_space<vmem>>, %arg4: memref<4x256xf32, #tpu.memory_space<vmem>>, %arg5: memref<1x256xf32, #tpu.memory_space<vmem>>, %arg6: memref<256x512xbf16, #tpu.memory_space<vmem>>, %arg7: memref<512x512xf32, #tpu.memory_space<vmem>>, %arg8: memref<1x512xf32, #tpu.memory_space<vmem>>, %arg9: memref<1x512xf32, #tpu.memory_space<vmem>>, %arg10: memref<512x768xbf16, #tpu.memory_space<vmem>>, %arg11: memref<2x768xf32, #tpu.memory_space<vmem>>) attributes {dimension_semantics = [#tpu.dimension_semantics<arbitrary>], iteration_bounds = array<i64: 1>, scalar_prefetch = 0 : i64, scratch_operands = 0 : i64, tpu.core_type = #tpu.core_type<tc>, window_params = [{pipeline_mode = #tpu.pipeline_mode<synchronous>, transform_indices = @transform_0, window_bounds = array<i64: 2, 8>}, {pipeline_mode = #tpu.pipeline_mode<synchronous>, transform_indices = @transform_1, window_bounds = array<i64: 2, 4>}, {pipeline_mode = #tpu.pipeline_mode<synchronous>, transform_indices = @transform_2, window_bounds = array<i64: 8, 256>}, {pipeline_mode = #tpu.pipeline_mode<synchronous>, transform_indices = @transform_3, window_bounds = array<i64: 4, 256>}, {pipeline_mode = #tpu.pipeline_mode<synchronous>, transform_indices = @transform_4, window_bounds = array<i64: 1, 256>}, {pipeline_mode = #tpu.pipeline_mode<synchronous>, transform_indices = @transform_5, window_bounds = array<i64: 256, 512>}, {pipeline_mode = #tpu.pipeline_mode<synchronous>, transform_indices = @transform_6, window_bounds = array<i64: 512, 512>}, {pipeline_mode = #tpu.pipeline_mode<synchronous>, transform_indices = @transform_7, window_bounds = array<i64: 1, 512>}, {pipeline_mode = #tpu.pipeline_mode<synchronous>, transform_indices = @transform_8, window_bounds = array<i64: 1, 512>}, {pipeline_mode = #tpu.pipeline_mode<synchronous>, transform_indices = @transform_9, window_bounds = array<i64: 512, 768>}, {pipeline_mode = #tpu.pipeline_mode<synchronous>, transform_indices = @transform_10, window_bounds = array<i64: 2, 768>}]} {
    %c0 = arith.constant 0 : index
    %c0_0 = arith.constant 0 : index
    %0 = vector.load %arg1[%c0, %c0_0] : memref<2x8xf32, #tpu.memory_space<vmem>>, vector<2x8xf32>
    %c0_1 = arith.constant 0 : index
    %c0_2 = arith.constant 0 : index
    %1 = vector.load %arg3[%c0_1, %c0_2] : memref<8x256xf32, #tpu.memory_space<vmem>>, vector<8x256xf32>
    %cst = arith.constant dense<0.000000e+00> : vector<2x256xf32>
    %2 = tpu.matmul %0, %1, %cst {dimension_numbers = #tpu.dot_dimension_numbers<[1], [0], [0], [1], [0, 0, 1, 1], [], []>} : vector<2x8xf32>, vector<8x256xf32>, vector<2x256xf32> -> vector<2x256xf32>
    %c0_3 = arith.constant 0 : index
    %c0_4 = arith.constant 0 : index
    %3 = vector.load %arg2[%c0_3, %c0_4] : memref<2x4xf32, #tpu.memory_space<vmem>>, vector<2x4xf32>
    %c0_5 = arith.constant 0 : index
    %c0_6 = arith.constant 0 : index
    %4 = vector.load %arg4[%c0_5, %c0_6] : memref<4x256xf32, #tpu.memory_space<vmem>>, vector<4x256xf32>
    %cst_7 = arith.constant dense<0.000000e+00> : vector<2x256xf32>
    %5 = tpu.matmul %3, %4, %cst_7 {dimension_numbers = #tpu.dot_dimension_numbers<[1], [0], [0], [1], [0, 0, 1, 1], [], []>} : vector<2x4xf32>, vector<4x256xf32>, vector<2x256xf32> -> vector<2x256xf32>
    %6 = arith.addf %2, %5 : vector<2x256xf32>
    %c0_8 = arith.constant 0 : index
    %c0_9 = arith.constant 0 : index
    %7 = vector.load %arg5[%c0_8, %c0_9] : memref<1x256xf32, #tpu.memory_space<vmem>>, vector<1x256xf32>
    %8 = vector.broadcast %7 : vector<1x256xf32> to vector<2x256xf32>
    %9 = arith.addf %6, %8 : vector<2x256xf32>
    %10 = arith.truncf %9 : vector<2x256xf32> to vector<2x256xbf16>
    %c0_10 = arith.constant 0 : index
    %c0_11 = arith.constant 0 : index
    %11 = vector.load %arg6[%c0_10, %c0_11] : memref<256x512xbf16, #tpu.memory_space<vmem>>, vector<256x512xbf16>
    %cst_12 = arith.constant dense<0.000000e+00> : vector<2x512xf32>
    %12 = tpu.matmul %10, %11, %cst_12 {dimension_numbers = #tpu.dot_dimension_numbers<[1], [0], [0], [1], [0, 0, 1, 1], [], []>} : vector<2x256xbf16>, vector<256x512xbf16>, vector<2x512xf32> -> vector<2x512xf32>
    %c0_13 = arith.constant 0 : index
    %c0_14 = arith.constant 0 : index
    %13 = vector.load %arg7[%c0_13, %c0_14] : memref<512x512xf32, #tpu.memory_space<vmem>>, vector<512x512xf32>
    %cst_15 = arith.constant dense<0.000000e+00> : vector<2x512xf32>
    %14 = tpu.matmul %12, %13, %cst_15 {dimension_numbers = #tpu.dot_dimension_numbers<[1], [0], [0], [1], [0, 0, 1, 1], [], []>} : vector<2x512xf32>, vector<512x512xf32>, vector<2x512xf32> -> vector<2x512xf32>
    %cst_16 = arith.constant dense<0.000000e+00> : vector<512xf32>
    %15 = vector.multi_reduction <add>, %14, %cst_16 [0] : vector<2x512xf32> to vector<512xf32>
    %16 = vector.shape_cast %15 : vector<512xf32> to vector<1x512xf32>
    %cst_17 = arith.constant 7.812500e-03 : f32
    %17 = vector.broadcast %cst_17 : f32 to vector<1x512xf32>
    %18 = arith.mulf %16, %17 : vector<1x512xf32>
    %19 = vector.broadcast %18 : vector<1x512xf32> to vector<2x512xf32>
    %20 = arith.subf %12, %19 : vector<2x512xf32>
    %21 = arith.mulf %20, %20 : vector<2x512xf32>
    %c0_18 = arith.constant 0 : index
    %c0_19 = arith.constant 0 : index
    %22 = vector.load %arg7[%c0_18, %c0_19] : memref<512x512xf32, #tpu.memory_space<vmem>>, vector<512x512xf32>
    %cst_20 = arith.constant dense<0.000000e+00> : vector<2x512xf32>
    %23 = tpu.matmul %21, %22, %cst_20 {dimension_numbers = #tpu.dot_dimension_numbers<[1], [0], [0], [1], [0, 0, 1, 1], [], []>} : vector<2x512xf32>, vector<512x512xf32>, vector<2x512xf32> -> vector<2x512xf32>
    %cst_21 = arith.constant dense<0.000000e+00> : vector<512xf32>
    %24 = vector.multi_reduction <add>, %23, %cst_21 [0] : vector<2x512xf32> to vector<512xf32>
    %25 = vector.shape_cast %24 : vector<512xf32> to vector<1x512xf32>
    %cst_22 = arith.constant 7.812500e-03 : f32
    %26 = vector.broadcast %cst_22 : f32 to vector<1x512xf32>
    %27 = arith.mulf %25, %26 : vector<1x512xf32>
    %c0_23 = arith.constant 0 : index
    %c0_24 = arith.constant 0 : index
    %28 = vector.load %arg8[%c0_23, %c0_24] : memref<1x512xf32, #tpu.memory_space<vmem>>, vector<1x512xf32>
    %cst_25 = arith.constant 9.99999974E-6 : f32
    %29 = vector.broadcast %cst_25 : f32 to vector<1x512xf32>
    %30 = arith.addf %27, %29 : vector<1x512xf32>
    %31 = math.rsqrt %30 : vector<1x512xf32>
    %32 = arith.mulf %28, %31 : vector<1x512xf32>
    %33 = vector.broadcast %32 : vector<1x512xf32> to vector<2x512xf32>
    %34 = arith.mulf %20, %33 : vector<2x512xf32>
    %c0_26 = arith.constant 0 : index
    %c0_27 = arith.constant 0 : index
    %35 = vector.load %arg9[%c0_26, %c0_27] : memref<1x512xf32, #tpu.memory_space<vmem>>, vector<1x512xf32>
    %36 = vector.broadcast %35 : vector<1x512xf32> to vector<2x512xf32>
    %37 = arith.addf %34, %36 : vector<2x512xf32>
    %cst_28 = arith.constant 0.000000e+00 : f32
    %38 = vector.broadcast %cst_28 : f32 to vector<2x512xf32>
    %39 = arith.cmpf oge, %37, %38 : vector<2x512xf32>
    %cst_29 = arith.constant 2.000000e-01 : f32
    %40 = vector.broadcast %cst_29 : f32 to vector<2x512xf32>
    %41 = arith.mulf %40, %37 : vector<2x512xf32>
    %42 = arith.select %39, %37, %41 : vector<2x512xi1>, vector<2x512xf32>
    %43 = arith.truncf %42 : vector<2x512xf32> to vector<2x512xbf16>
    %c0_30 = arith.constant 0 : index
    %c0_31 = arith.constant 0 : index
    %44 = vector.load %arg10[%c0_30, %c0_31] : memref<512x768xbf16, #tpu.memory_space<vmem>>, vector<512x768xbf16>
    %cst_32 = arith.constant dense<0.000000e+00> : vector<2x768xf32>
    %45 = tpu.matmul %43, %44, %cst_32 {dimension_numbers = #tpu.dot_dimension_numbers<[1], [0], [0], [1], [0, 0, 1, 1], [], []>} : vector<2x512xbf16>, vector<512x768xbf16>, vector<2x768xf32> -> vector<2x768xf32>
    %46 = arith.negf %45 : vector<2x768xf32>
    %47 = math.exp %46 : vector<2x768xf32>
    %cst_33 = arith.constant 1.000000e+00 : f32
    %48 = vector.broadcast %cst_33 : f32 to vector<2x768xf32>
    %49 = arith.addf %48, %47 : vector<2x768xf32>
    %50 = arith.divf %48, %49 : vector<2x768xf32>
    %c0_34 = arith.constant 0 : index
    %c0_35 = arith.constant 0 : index
    %51 = vector.load %arg11[%c0_34, %c0_35] : memref<2x768xf32, #tpu.memory_space<vmem>>, vector<2x768xf32>
    tpu.vector_store %arg11[%c0_34, %c0_35], %50 {strides = array<i32>} : memref<2x768xf32, #tpu.memory_space<vmem>>, vector<2x768xf32>,
    return
  }
  func.func @transform_0(%arg0: i32) -> (i32, i32) {
    %c0_i32 = arith.constant 0 : i32
    %c0_i32_0 = arith.constant 0 : i32
    %c0_i32_1 = arith.constant 0 : i32
    return %c0_i32, %c0_i32_0 : i32, i32
  }
  func.func @transform_1(%arg0: i32) -> (i32, i32) {
    %c0_i32 = arith.constant 0 : i32
    %c0_i32_0 = arith.constant 0 : i32
    %c0_i32_1 = arith.constant 0 : i32
    return %c0_i32, %c0_i32_0 : i32, i32
  }
  func.func @transform_2(%arg0: i32) -> (i32, i32) {
    %c0_i32 = arith.constant 0 : i32
    %c0_i32_0 = arith.constant 0 : i32
    %c0_i32_1 = arith.constant 0 : i32
    return %c0_i32, %c0_i32_0 : i32, i32
  }
  func.func @transform_3(%arg0: i32) -> (i32, i32) {
    %c0_i32 = arith.constant 0 : i32
    %c0_i32_0 = arith.constant 0 : i32
    %c0_i32_1 = arith.constant 0 : i32
    return %c0_i32, %c0_i32_0 : i32, i32
  }
  func.func @transform_4(%arg0: i32) -> (i32, i32) {
    %c0_i32 = arith.constant 0 : i32
    %c0_i32_0 = arith.constant 0 : i32
    %c0_i32_1 = arith.constant 0 : i32
    return %c0_i32, %c0_i32_0 : i32, i32
  }
  func.func @transform_5(%arg0: i32) -> (i32, i32) {
    %c0_i32 = arith.constant 0 : i32
    %c0_i32_0 = arith.constant 0 : i32
    %c0_i32_1 = arith.constant 0 : i32
    return %c0_i32, %c0_i32_0 : i32, i32
  }
  func.func @transform_6(%arg0: i32) -> (i32, i32) {
    %c0_i32 = arith.constant 0 : i32
    %c0_i32_0 = arith.constant 0 : i32
    %c0_i32_1 = arith.constant 0 : i32
    return %c0_i32, %c0_i32_0 : i32, i32
  }
  func.func @transform_7(%arg0: i32) -> (i32, i32) {
    %c0_i32 = arith.constant 0 : i32
    %c0_i32_0 = arith.constant 0 : i32
    %c0_i32_1 = arith.constant 0 : i32
    return %c0_i32, %c0_i32_0 : i32, i32
  }
  func.func @transform_8(%arg0: i32) -> (i32, i32) {
    %c0_i32 = arith.constant 0 : i32
    %c0_i32_0 = arith.constant 0 : i32
    %c0_i32_1 = arith.constant 0 : i32
    return %c0_i32, %c0_i32_0 : i32, i32
  }
  func.func @transform_9(%arg0: i32) -> (i32, i32) {
    %c0_i32 = arith.constant 0 : i32
    %c0_i32_0 = arith.constant 0 : i32
    %c0_i32_1 = arith.constant 0 : i32
    return %c0_i32, %c0_i32_0 : i32, i32
  }
  func.func @transform_10(%arg0: i32) -> (i32, i32) {
    %c0_i32 = arith.constant 0 : i32
    %c0_i32_0 = arith.constant 0 : i32
    %c0_i32_1 = arith.constant 0 : i32
    return %c0_i32, %c0_i32_0 : i32, i32
  }
}

</mosaic_0001>

<llo_original>
// kernel: conditioned_generator_forward.1
$region0: #{conditioned_generator_forward.1}
  #allocation0 [shape = 'u32[]', space=smem, size = 0x4, offset = 0x4, fixed_abs, tag = 'smem constant byte address 0x4 - core index']
  #allocation1 [shape = 'u32[144,128]{1,0:T(1,128)}', space=vmem, size = 0x12000, scoped, tag = 'internal scratch']
  %s0 = inlined_call_operand.hbm [shape: f32[2,8], index: 0, kind: input, shape index: {}]
  %s1 = inlined_call_operand.vmem [shape: f32[2,4], index: 1, kind: input, shape index: {}]
  %s2 = inlined_call_operand.vmem [shape: f32[8,256], index: 2, kind: input, shape index: {}]
  %s3 = inlined_call_operand.vmem [shape: f32[4,256], index: 3, kind: input, shape index: {}]
  %s4 = inlined_call_operand.hbm [shape: f32[1,256], index: 4, kind: input, shape index: {}]
  %s5 = inlined_call_operand.hbm [shape: bf16[256,512], index: 5, kind: input, shape index: {}]
  %s6 = inlined_call_operand.hbm [shape: f32[512,512], index: 6, kind: input, shape index: {}]
  %s7 = inlined_call_operand.hbm [shape: f32[1,512], index: 7, kind: input, shape index: {}]
  %s8 = inlined_call_operand.hbm [shape: f32[1,512], index: 8, kind: input, shape index: {}]
  %s9 = inlined_call_operand.hbm [shape: bf16[512,768], index: 9, kind: input, shape index: {}]
  %s10 = inlined_call_operand.vmem [shape: f32[2,768], index: 10, kind: output, shape index: {}]
  %s11 = sld [smem:[#allocation0]]
  $region78: #{conditioned_generator_forward.1} parent=0
    _
  %s13 = ssub.s32 1, %s11
  %s14 = scalar_select 0, %s13, %s11
  $region1: #{conditioned_generator_forward.1} parent=0
    #allocation2 [shape = 'u8[1024]{0}', space=vmem, size = 0x400, scoped, tag = 'input window, operand 0, single buffered']
    #allocation3 [shape = 's32[1]{0}', space=sflag, size = 0x4, scoped, tag = 'scoped memory for conditioned_generator_forward.1']
    #allocation4 [shape = 'u8[1024]{0}', space=vmem, size = 0x400, scoped, tag = 'input window, operand 4, single buffered']
    #allocation5 [shape = 's32[1]{0}', space=sflag, size = 0x4, scoped, tag = 'scoped memory for conditioned_generator_forward.1']
    #allocation6 [shape = 'u8[262144]{0}', space=vmem, size = 0x40000, scoped, tag = 'input window, operand 5, single buffered']
    #allocation7 [shape = 'u8[1048576]{0}', space=vmem, size = 0x100000, scoped, tag = 'input window, operand 6, single buffered']
    #allocation8 [shape = 's32[1]{0}', space=sflag, size = 0x4, scoped, tag = 'scoped memory for conditioned_generator_forward.1']
    #allocation9 [shape = 'u8[2048]{0}', space=vmem, size = 0x800, scoped, tag = 'input window, operand 7, single buffered']
    #allocation10 [shape = 'u8[2048]{0}', space=vmem, size = 0x800, scoped, tag = 'input window, operand 8, single buffered']
    #allocation11 [shape = 's32[1]{0}', space=sflag, size = 0x4, scoped, tag = 'scoped memory for conditioned_generator_forward.1']
    #allocation12 [shape = 'u8[786432]{0}', space=vmem, size = 0xc0000, scoped, tag = 'input window, operand 9, single buffered']
    %15 = vsyncpa [#allocation3], 0
    %16 = vsyncpa [#allocation5], 0
    %17 = vsyncpa [#allocation8], 0
    %18 = vsyncpa [#allocation11], 0
    // Predicated region
    $region2: #{conditioned_generator_forward.1} parent=1 // pred_check
      _
    $region3: #{conditioned_generator_forward.1} parent=1 // pred_check_branch
      %20 = sbr.rel (0) target = $region5
    $region4: #{conditioned_generator_forward.1} parent=1 // pred_region
      %s22 = ssub.s32 32, 32
      %23 = vsyncadd [#allocation3], %s22
      %s25 = sshll.u32 [#allocation2], 4
      %s26 = int_to_ptr.vmem [resolvable:$true] %s25
      %28 = dma.hbm_to_vmem [thread:$0]  %s0, 32, %s26, [#allocation3]
    $region5: #{conditioned_generator_forward.1} parent=1 // pred_fallthru
      _
    // Predicated region
    $region6: #{conditioned_generator_forward.1} parent=1 // pred_check
      _
    $region7: #{conditioned_generator_forward.1} parent=1 // pred_check_branch
      %30 = sbr.rel (0) target = $region9
    $region8: #{conditioned_generator_forward.1} parent=1 // pred_region
      _
    $region9: #{conditioned_generator_forward.1} parent=1 // pred_fallthru
      _
    // Predicated region
    $region10: #{conditioned_generator_forward.1} parent=1 // pred_check
      _
    $region11: #{conditioned_generator_forward.1} parent=1 // pred_check_branch
      %32 = sbr.rel (0) target = $region13
    $region12: #{conditioned_generator_forward.1} parent=1 // pred_region
      _
    $region13: #{conditioned_generator_forward.1} parent=1 // pred_fallthru
      _
    // Predicated region
    $region14: #{conditioned_generator_forward.1} parent=1 // pred_check
      _
    $region15: #{conditioned_generator_forward.1} parent=1 // pred_check_branch
      %34 = sbr.rel (0) target = $region17
    $region16: #{conditioned_generator_forward.1} parent=1 // pred_region
      _
    $region17: #{conditioned_generator_forward.1} parent=1 // pred_fallthru
      _
    // Predicated region
    $region18: #{conditioned_generator_forward.1} parent=1 // pred_check
      _
    $region19: #{conditioned_generator_forward.1} parent=1 // pred_check_branch
      %36 = sbr.rel (0) target = $region21
    $region20: #{conditioned_generator_forward.1} parent=1 // pred_region
      %s38 = ssub.s32 32, 32
      %39 = vsyncadd [#allocation5], %s38
      %s41 = sshll.u32 [#allocation4], 4
      %s42 = int_to_ptr.vmem [resolvable:$true] %s41
      %44 = dma.hbm_to_vmem [thread:$0]  %s4, 32, %s42, [#allocation5]
    $region21: #{conditioned_generator_forward.1} parent=1 // pred_fallthru
      _
    // Predicated region
    $region22: #{conditioned_generator_forward.1} parent=1 // pred_check
      _
    $region23: #{conditioned_generator_forward.1} parent=1 // pred_check_branch
      %46 = sbr.rel (0) target = $region25
    $region24: #{conditioned_generator_forward.1} parent=1 // pred_region
      %s48 = ssub.s32 8192, 8192
      %49 = vsyncadd [#allocation5], %s48
      %s50 = sshll.u32 [#allocation6], 4
      %s51 = int_to_ptr.vmem [resolvable:$true] %s50
      %56 = dma.hbm_to_vmem [thread:$0]  %s5, 8192, %s51, [#allocation5], 256, 256, 16
    $region25: #{conditioned_generator_forward.1} parent=1 // pred_fallthru
      _
    // Predicated region
    $region26: #{conditioned_generator_forward.1} parent=1 // pred_check
      _
    $region27: #{conditioned_generator_forward.1} parent=1 // pred_check_branch
      %58 = sbr.rel (0) target = $region29
    $region28: #{conditioned_generator_forward.1} parent=1 // pred_region
      %s60 = ssub.s32 32768, 32768
      %61 = vsyncadd [#allocation8], %s60
      %s62 = sshll.u32 [#allocation7], 4
      %s63 = int_to_ptr.vmem [resolvable:$true] %s62
      %68 = dma.hbm_to_vmem [thread:$0]  %s6, 32768, %s63, [#allocation8], 512, 512, 32
    $region29: #{conditioned_generator_forward.1} parent=1 // pred_fallthru
      _
    // Predicated region
    $region30: #{conditioned_generator_forward.1} parent=1 // pred_check
      _
    $region31: #{conditioned_generator_forward.1} parent=1 // pred_check_branch
      %70 = sbr.rel (0) target = $region33
    $region32: #{conditioned_generator_forward.1} parent=1 // pred_region
      %s72 = ssub.s32 64, 64
      %73 = vsyncadd [#allocation8], %s72
      %s75 = sshll.u32 [#allocation9], 4
      %s76 = int_to_ptr.vmem [resolvable:$true] %s75
      %78 = dma.hbm_to_vmem [thread:$0]  %s7, 64, %s76, [#allocation8]
    $region33: #{conditioned_generator_forward.1} parent=1 // pred_fallthru
      _
    // Predicated region
    $region34: #{conditioned_generator_forward.1} parent=1 // pred_check
      _
    $region35: #{conditioned_generator_forward.1} parent=1 // pred_check_branch
      %80 = sbr.rel (0) target = $region37
    $region36: #{conditioned_generator_forward.1} parent=1 // pred_region
      %s82 = ssub.s32 64, 64
      %83 = vsyncadd [#allocation11], %s82
      %s85 = sshll.u32 [#allocation10], 4
      %s86 = int_to_ptr.vmem [resolvable:$true] %s85
      %88 = dma.hbm_to_vmem [thread:$0]  %s8, 64, %s86, [#allocation11]
    $region37: #{conditioned_generator_forward.1} parent=1 // pred_fallthru
      _
    // Predicated region
    $region38: #{conditioned_generator_forward.1} parent=1 // pred_check
      _
    $region39: #{conditioned_generator_forward.1} parent=1 // pred_check_branch
      %90 = sbr.rel (0) target = $region41
    $region40: #{conditioned_generator_forward.1} parent=1 // pred_region
      %s92 = ssub.s32 24576, 24576
      %93 = vsyncadd [#allocation11], %s92
      %s94 = sshll.u32 [#allocation12], 4
      %s95 = int_to_ptr.vmem [resolvable:$true] %s94
      %100 = dma.hbm_to_vmem [thread:$0]  %s9, 24576, %s95, [#allocation11], 384, 384, 24
    $region41: #{conditioned_generator_forward.1} parent=1 // pred_fallthru
      _
    // Predicated region
    $region42: #{conditioned_generator_forward.1} parent=1 // pred_check
      _
    $region43: #{conditioned_generator_forward.1} parent=1 // pred_check_branch
      %102 = sbr.rel (0) target = $region45
    $region44: #{conditioned_generator_forward.1} parent=1 // pred_region
      %103 = dma.done [#allocation3], 32
    $region45: #{conditioned_generator_forward.1} parent=1 // pred_fallthru
      _
    // Predicated region
    $region46: #{conditioned_generator_forward.1} parent=1 // pred_check
      _
    $region47: #{conditioned_generator_forward.1} parent=1 // pred_check_branch
      %105 = sbr.rel (0) target = $region49
    $region48: #{conditioned_generator_forward.1} parent=1 // pred_region
      %106 = dma.done [#allocation5], 32
    $region49: #{conditioned_generator_forward.1} parent=1 // pred_fallthru
      _
    // Predicated region
    $region50: #{conditioned_generator_forward.1} parent=1 // pred_check
      _
    $region51: #{conditioned_generator_forward.1} parent=1 // pred_check_branch
      %108 = sbr.rel (0) target = $region53
    $region52: #{conditioned_generator_forward.1} parent=1 // pred_region
      %109 = dma.done [#allocation5], 8192
    $region53: #{conditioned_generator_forward.1} parent=1 // pred_fallthru
      _
    // Predicated region
    $region54: #{conditioned_generator_forward.1} parent=1 // pred_check
      _
    $region55: #{conditioned_generator_forward.1} parent=1 // pred_check_branch
      %111 = sbr.rel (0) target = $region57
    $region56: #{conditioned_generator_forward.1} parent=1 // pred_region
      %112 = dma.done [#allocation8], 32768
    $region57: #{conditioned_generator_forward.1} parent=1 // pred_fallthru
      _
    // Predicated region
    $region58: #{conditioned_generator_forward.1} parent=1 // pred_check
      _
    $region59: #{conditioned_generator_forward.1} parent=1 // pred_check_branch
      %114 = sbr.rel (0) target = $region61
    $region60: #{conditioned_generator_forward.1} parent=1 // pred_region
      %115 = dma.done [#allocation8], 64
    $region61: #{conditioned_generator_forward.1} parent=1 // pred_fallthru
      _
    // Predicated region
    $region62: #{conditioned_generator_forward.1} parent=1 // pred_check
      _
    $region63: #{conditioned_generator_forward.1} parent=1 // pred_check_branch
      %117 = sbr.rel (0) target = $region65
    $region64: #{conditioned_generator_forward.1} parent=1 // pred_region
      %118 = dma.done [#allocation11], 64
    $region65: #{conditioned_generator_forward.1} parent=1 // pred_fallthru
      _
    // Predicated region
    $region66: #{conditioned_generator_forward.1} parent=1 // pred_check
      _
    $region67: #{conditioned_generator_forward.1} parent=1 // pred_check_branch
      %120 = sbr.rel (0) target = $region69
    $region68: #{conditioned_generator_forward.1} parent=1 // pred_region
      %121 = dma.done [#allocation11], 24576
    $region69: #{conditioned_generator_forward.1} parent=1 // pred_fallthru
      _
    %v122 = vld [vmem:[#allocation2] sm:$0x3]
    %v123 = vld [vmem:[%s2] sm:$0xff]
    %v124 = vld [vmem:[%s2 + $0x8] sm:$0xff]
    %v125 = vld [vmem:[%s1] sm:$0x3]
    %v126 = vld [vmem:[%s3] sm:$0xff]
    %v128 = vcombine.high %v126, %v126
    %vm129 = vcmask 31744
    %v131 = vsel %vm129, %v125, 0
    %vm133 = vcmask 1043456
    %v134 = vsel %vm133, %v126, 0
    %v136 = vsel %vm133, %v128, 0
    %138 = vmatprep.subr.mxu0 %v136
    %139 = vmatpush1.msra.mxu0 %v134
    %140 = vmatprep.subr.mxu0 0.0
    %141 = vmatpush1.msra.mxu0 0.0
    %142 = vmatprep.subr.mxu0 0.0
    %143 = vmatpush1.msra.mxu0 0.0
    %144 = vmatprep.subr.mxu0 0.0
    %145 = vmatpush1.msra.mxu0 0.0
    %146 = vmatprep.subr.mxu0 0.0
    %147 = vmatpush1.msra.mxu0 0.0
    %148 = vmatprep.subr.mxu0 0.0
    %149 = vmatpush1.msra.mxu0 0.0
    %150 = vmatprep.subr.mxu0 0.0
    %151 = vmatpush1.msra.mxu0 0.0
    %152 = vmatprep.subr.mxu0 0.0
    %153 = vmatpush1.msra.mxu0 0.0
    %154 = vmatprep.subr.mxu0 0.0
    %155 = vmatpush1.msra.mxu0 0.0
    %156 = vmatprep.subr.mxu0 0.0
    %157 = vmatpush1.msra.mxu0 0.0
    %158 = vmatprep.subr.mxu0 0.0
    %159 = vmatpush1.msra.mxu0 0.0
    %160 = vmatprep.subr.mxu0 0.0
    %161 = vmatpush1.msra.mxu0 0.0
    %162 = vmatprep.subr.mxu0 0.0
    %163 = vmatpush1.msra.mxu0 0.0
    %164 = vmatprep.subr.mxu0 0.0
    %165 = vmatpush1.msra.mxu0 0.0
    %166 = vmatprep.subr.mxu0 0.0
    %167 = vmatpush1.msra.mxu0 0.0
    %168 = vmatprep.subr.mxu0 0.0
    %169 = vmatpush1.msra.mxu0 0.0
    %170 = vmatprep.subr.mxu0 0.0
    %171 = vmatpush1.msra.mxu0 0.0
    %172 = vmatprep.subr.mxu0 0.0
    %173 = vmatpush1.msra.mxu0 0.0
    %174 = vmatprep.subr.mxu0 0.0
    %175 = vmatpush1.msra.mxu0 0.0
    %176 = vmatprep.subr.mxu0 0.0
    %177 = vmatpush1.msra.mxu0 0.0
    %178 = vmatprep.subr.mxu0 0.0
    %179 = vmatpush1.msra.mxu0 0.0
    %180 = vmatprep.subr.mxu0 0.0
    %181 = vmatpush1.msra.mxu0 0.0
    %182 = vmatprep.subr.mxu0 0.0
    %183 = vmatpush1.msra.mxu0 0.0
    %184 = vmatprep.subr.mxu0 0.0
    %185 = vmatpush1.msra.mxu0 0.0
    %186 = vmatprep.subr.mxu0 0.0
    %187 = vmatpush1.msra.mxu0 0.0
    %188 = vmatprep.subr.mxu0 0.0
    %189 = vmatpush1.msra.mxu0 0.0
    %190 = vmatprep.subr.mxu0 0.0
    %191 = vmatpush1.msra.mxu0 0.0
    %192 = vmatprep.subr.mxu0 0.0
    %193 = vmatpush1.msra.mxu0 0.0
    %194 = vmatprep.subr.mxu0 0.0
    %195 = vmatpush1.msra.mxu0 0.0
    %196 = vmatprep.subr.mxu0 0.0
    %197 = vmatpush1.msra.mxu0 0.0
    %198 = vmatprep.subr.mxu0 0.0
    %199 = vmatpush1.msra.mxu0 0.0
    %200 = vmatprep.subr.mxu0 0.0
    %201 = vmatpush1.msra.mxu0 0.0
    %202 = vmatprep.mubr.f32.mxu0 0.0
    %203 = vmatmul.mubr.f32.gmra.mrb[0].mxu0 %v131
    %v204 = vpop.f32.mrb[0].mxu0
    %v205 = vadd.f32 0.0, %v204
    %v206 = vpop.f32.mrb[0].mxu0
    %v207 = vadd.f32 0.0, %v206
    %208 = vdwg.mxu0
    %vm209 = vcmask 64512
    %v211 = vsel %vm209, %v122, 0
    %213 = vmatprep.subr.mxu0 %v124
    %214 = vmatpush1.msra.mxu0 %v123
    %215 = vmatprep.subr.mxu0 0.0
    %216 = vmatpush1.msra.mxu0 0.0
    %217 = vmatprep.subr.mxu0 0.0
    %218 = vmatpush1.msra.mxu0 0.0
    %219 = vmatprep.subr.mxu0 0.0
    %220 = vmatpush1.msra.mxu0 0.0
    %221 = vmatprep.subr.mxu0 0.0
    %222 = vmatpush1.msra.mxu0 0.0
    %223 = vmatprep.subr.mxu0 0.0
    %224 = vmatpush1.msra.mxu0 0.0
    %225 = vmatprep.subr.mxu0 0.0
    %226 = vmatpush1.msra.mxu0 0.0
    %227 = vmatprep.subr.mxu0 0.0
    %228 = vmatpush1.msra.mxu0 0.0
    %229 = vmatprep.subr.mxu0 0.0
    %230 = vmatpush1.msra.mxu0 0.0
    %231 = vmatprep.subr.mxu0 0.0
    %232 = vmatpush1.msra.mxu0 0.0
    %233 = vmatprep.subr.mxu0 0.0
    %234 = vmatpush1.msra.mxu0 0.0
    %235 = vmatprep.subr.mxu0 0.0
    %236 = vmatpush1.msra.mxu0 0.0
    %237 = vmatprep.subr.mxu0 0.0
    %238 = vmatpush1.msra.mxu0 0.0
    %239 = vmatprep.subr.mxu0 0.0
    %240 = vmatpush1.msra.mxu0 0.0
    %241 = vmatprep.subr.mxu0 0.0
    %242 = vmatpush1.msra.mxu0 0.0
    %243 = vmatprep.subr.mxu0 0.0
    %244 = vmatpush1.msra.mxu0 0.0
    %245 = vmatprep.subr.mxu0 0.0
    %246 = vmatpush1.msra.mxu0 0.0
    %247 = vmatprep.subr.mxu0 0.0
    %248 = vmatpush1.msra.mxu0 0.0
    %249 = vmatprep.subr.mxu0 0.0
    %250 = vmatpush1.msra.mxu0 0.0
    %251 = vmatprep.subr.mxu0 0.0
    %252 = vmatpush1.msra.mxu0 0.0
    %253 = vmatprep.subr.mxu0 0.0
    %254 = vmatpush1.msra.mxu0 0.0
    %255 = vmatprep.subr.mxu0 0.0
    %256 = vmatpush1.msra.mxu0 0.0
    %257 = vmatprep.subr.mxu0 0.0
    %258 = vmatpush1.msra.mxu0 0.0
    %259 = vmatprep.subr.mxu0 0.0
    %260 = vmatpush1.msra.mxu0 0.0
    %261 = vmatprep.subr.mxu0 0.0
    %262 = vmatpush1.msra.mxu0 0.0
    %263 = vmatprep.subr.mxu0 0.0
    %264 = vmatpush1.msra.mxu0 0.0
    %265 = vmatprep.subr.mxu0 0.0
    %266 = vmatpush1.msra.mxu0 0.0
    %267 = vmatprep.subr.mxu0 0.0
    %268 = vmatpush1.msra.mxu0 0.0
    %269 = vmatprep.subr.mxu0 0.0
    %270 = vmatpush1.msra.mxu0 0.0
    %271 = vmatprep.subr.mxu0 0.0
    %272 = vmatpush1.msra.mxu0 0.0
    %273 = vmatprep.subr.mxu0 0.0
    %274 = vmatpush1.msra.mxu0 0.0
    %275 = vmatprep.subr.mxu0 0.0
    %276 = vmatpush1.msra.mxu0 0.0
    %277 = vmatprep.mubr.f32.mxu0 0.0
    %278 = vmatmul.mubr.f32.gmra.mrb[0].mxu0 %v211
    %v279 = vpop.f32.mrb[0].mxu0
    %v280 = vadd.f32 %v205, %v279
    %v281 = vpop.f32.mrb[0].mxu0
    %v282 = vadd.f32 %v207, %v281
    %283 = vdwg.mxu0
    %v284 = vld [vmem:[#allocation4] sm:$0x3]
    %v286 = vlaneseq
    %v287 = vshrl.u32 %v286, 7
    %v288 = vsub.s32 0, %v287
    %v289 = vrot.slane %v284, %v288
    %v290 = vlaneseq
    %v291 = vshrl.u32 %v290, 7
    %v292 = vsub.s32 1, %v291
    %v293 = vrot.slane %v284, %v292
    %v296 = vadd.f32 %v280, %v289
    %v297 = vadd.f32 %v282, %v293
    %v298 = vpack.c.bf16 %v296, %v296
    %v299 = vpack.c.bf16 %v297, %v297
    %v300 = vld [vmem:[#allocation6] sm:$0xff]
    %v301 = vld [vmem:[#allocation6 + $0x8] sm:$0xff]
    %v302 = vld [vmem:[#allocation6 + $0x10] sm:$0xff]
    %v303 = vld [vmem:[#allocation6 + $0x18] sm:$0xff]
    %v304 = vld [vmem:[#allocation6 + $0x20] sm:$0xff]
    %v305 = vld [vmem:[#allocation6 + $0x28] sm:$0xff]
    %v306 = vld [vmem:[#allocation6 + $0x30] sm:$0xff]
    %v307 = vld [vmem:[#allocation6 + $0x38] sm:$0xff]
    %v308 = vld [vmem:[#allocation6 + $0x40] sm:$0xff]
    %v309 = vld [vmem:[#allocation6 + $0x48] sm:$0xff]
    %v310 = vld [vmem:[#allocation6 + $0x50] sm:$0xff]
    %v311 = vld [vmem:[#allocation6 + $0x58] sm:$0xff]
    %v312 = vld [vmem:[#allocation6 + $0x60] sm:$0xff]
    %v313 = vld [vmem:[#allocation6 + $0x68] sm:$0xff]
    %v314 = vld [vmem:[#allocation6 + $0x70] sm:$0xff]
    %v315 = vld [vmem:[#allocation6 + $0x78] sm:$0xff]
    %v316 = vld [vmem:[#allocation6 + $0x80] sm:$0xff]
    %v317 = vld [vmem:[#allocation6 + $0x88] sm:$0xff]
    %v318 = vld [vmem:[#allocation6 + $0x90] sm:$0xff]
    %v319 = vld [vmem:[#allocation6 + $0x98] sm:$0xff]
    %v320 = vld [vmem:[#allocation6 + $0xa0] sm:$0xff]
    %v321 = vld [vmem:[#allocation6 + $0xa8] sm:$0xff]
    %v322 = vld [vmem:[#allocation6 + $0xb0] sm:$0xff]
    %v323 = vld [vmem:[#allocation6 + $0xb8] sm:$0xff]
    %v324 = vld [vmem:[#allocation6 + $0xc0] sm:$0xff]
    %v325 = vld [vmem:[#allocation6 + $0xc8] sm:$0xff]
    %v326 = vld [vmem:[#allocation6 + $0xd0] sm:$0xff]
    %v327 = vld [vmem:[#allocation6 + $0xd8] sm:$0xff]
    %v328 = vld [vmem:[#allocation6 + $0xe0] sm:$0xff]
    %v329 = vld [vmem:[#allocation6 + $0xe8] sm:$0xff]
    %v330 = vld [vmem:[#allocation6 + $0xf0] sm:$0xff]
    %v331 = vld [vmem:[#allocation6 + $0xf8] sm:$0xff]
    %v332 = vld [vmem:[#allocation6 + $0x100] sm:$0xff]
    %v333 = vld [vmem:[#allocation6 + $0x108] sm:$0xff]
    %v334 = vld [vmem:[#allocation6 + $0x110] sm:$0xff]
    %v335 = vld [vmem:[#allocation6 + $0x118] sm:$0xff]
    %v336 = vld [vmem:[#allocation6 + $0x120] sm:$0xff]
    %v337 = vld [vmem:[#allocation6 + $0x128] sm:$0xff]
    %v338 = vld [vmem:[#allocation6 + $0x130] sm:$0xff]
    %v339 = vld [vmem:[#allocation6 + $0x138] sm:$0xff]
    %v340 = vld [vmem:[#allocation6 + $0x140] sm:$0xff]
    %v341 = vld [vmem:[#allocation6 + $0x148] sm:$0xff]
    %v342 = vld [vmem:[#allocation6 + $0x150] sm:$0xff]
    %v343 = vld [vmem:[#allocation6 + $0x158] sm:$0xff]
    %v344 = vld [vmem:[#allocation6 + $0x160] sm:$0xff]
    %v345 = vld [vmem:[#allocation6 + $0x168] sm:$0xff]
    %v346 = vld [vmem:[#allocation6 + $0x170] sm:$0xff]
    %v347 = vld [vmem:[#allocation6 + $0x178] sm:$0xff]
    %v348 = vld [vmem:[#allocation6 + $0x180] sm:$0xff]
    %v349 = vld [vmem:[#allocation6 + $0x188] sm:$0xff]
    %v350 = vld [vmem:[#allocation6 + $0x190] sm:$0xff]
    %v351 = vld [vmem:[#allocation6 + $0x198] sm:$0xff]
    %v352 = vld [vmem:[#allocation6 + $0x1a0] sm:$0xff]
    %v353 = vld [vmem:[#allocation6 + $0x1a8] sm:$0xff]
    %v354 = vld [vmem:[#allocation6 + $0x1b0] sm:$0xff]
    %v355 = vld [vmem:[#allocation6 + $0x1b8] sm:$0xff]
    %v356 = vld [vmem:[#allocation6 + $0x1c0] sm:$0xff]
    %v357 = vld [vmem:[#allocation6 + $0x1c8] sm:$0xff]
    %v358 = vld [vmem:[#allocation6 + $0x1d0] sm:$0xff]
    %v359 = vld [vmem:[#allocation6 + $0x1d8] sm:$0xff]
    %v360 = vld [vmem:[#allocation6 + $0x1e0] sm:$0xff]
    %v361 = vld [vmem:[#allocation6 + $0x1e8] sm:$0xff]
    %v362 = vld [vmem:[#allocation6 + $0x1f0] sm:$0xff]
    %v363 = vld [vmem:[#allocation6 + $0x1f8] sm:$0xff]
    %v428 = vunpack.c.l.b16 %v300
    %v429 = vunpack.c.h.b16 %v300
    %v430 = vunpack.c.l.b16 %v301
    %v431 = vunpack.c.h.b16 %v301
    %v432 = vunpack.c.l.b16 %v302
    %v433 = vunpack.c.h.b16 %v302
    %v434 = vunpack.c.l.b16 %v303
    %v435 = vunpack.c.h.b16 %v303
    %v436 = vunpack.c.l.b16 %v304
    %v437 = vunpack.c.h.b16 %v304
    %v438 = vunpack.c.l.b16 %v305
    %v439 = vunpack.c.h.b16 %v305
    %v440 = vunpack.c.l.b16 %v306
    %v441 = vunpack.c.h.b16 %v306
    %v442 = vunpack.c.l.b16 %v307
    %v443 = vunpack.c.h.b16 %v307
    %v444 = vunpack.c.l.b16 %v308
    %v445 = vunpack.c.h.b16 %v308
    %v446 = vunpack.c.l.b16 %v309
    %v447 = vunpack.c.h.b16 %v309
    %v448 = vunpack.c.l.b16 %v310
    %v449 = vunpack.c.h.b16 %v310
    %v450 = vunpack.c.l.b16 %v311
    %v451 = vunpack.c.h.b16 %v311
    %v452 = vunpack.c.l.b16 %v312
    %v453 = vunpack.c.h.b16 %v312
    %v454 = vunpack.c.l.b16 %v313
    %v455 = vunpack.c.h.b16 %v313
    %v456 = vunpack.c.l.b16 %v314
    %v457 = vunpack.c.h.b16 %v314
    %v458 = vunpack.c.l.b16 %v315
    %v459 = vunpack.c.h.b16 %v315
    %v460 = vunpack.c.l.b16 %v316
    %v461 = vunpack.c.h.b16 %v316
    %v462 = vunpack.c.l.b16 %v317
    %v463 = vunpack.c.h.b16 %v317
    %v464 = vunpack.c.l.b16 %v318
    %v465 = vunpack.c.h.b16 %v318
    %v466 = vunpack.c.l.b16 %v319
    %v467 = vunpack.c.h.b16 %v319
    %v468 = vunpack.c.l.b16 %v320
    %v469 = vunpack.c.h.b16 %v320
    %v470 = vunpack.c.l.b16 %v321
    %v471 = vunpack.c.h.b16 %v321
    %v472 = vunpack.c.l.b16 %v322
    %v473 = vunpack.c.h.b16 %v322
    %v474 = vunpack.c.l.b16 %v323
    %v475 = vunpack.c.h.b16 %v323
    %v476 = vunpack.c.l.b16 %v324
    %v477 = vunpack.c.h.b16 %v324
    %v478 = vunpack.c.l.b16 %v325
    %v479 = vunpack.c.h.b16 %v325
    %v480 = vunpack.c.l.b16 %v326
    %v481 = vunpack.c.h.b16 %v326
    %v482 = vunpack.c.l.b16 %v327
    %v483 = vunpack.c.h.b16 %v327
    %v484 = vunpack.c.l.b16 %v328
    %v485 = vunpack.c.h.b16 %v328
    %v486 = vunpack.c.l.b16 %v329
    %v487 = vunpack.c.h.b16 %v329
    %v488 = vunpack.c.l.b16 %v330
    %v489 = vunpack.c.h.b16 %v330
    %v490 = vunpack.c.l.b16 %v331
    %v491 = vunpack.c.h.b16 %v331
    %v492 = vunpack.c.l.b16 %v332
    %v493 = vunpack.c.h.b16 %v332
    %v494 = vunpack.c.l.b16 %v333
    %v495 = vunpack.c.h.b16 %v333
    %v496 = vunpack.c.l.b16 %v334
    %v497 = vunpack.c.h.b16 %v334
    %v498 = vunpack.c.l.b16 %v335
    %v499 = vunpack.c.h.b16 %v335
    %v500 = vunpack.c.l.b16 %v336
    %v501 = vunpack.c.h.b16 %v336
    %v502 = vunpack.c.l.b16 %v337
    %v503 = vunpack.c.h.b16 %v337
    %v504 = vunpack.c.l.b16 %v338
    %v505 = vunpack.c.h.b16 %v338
    %v506 = vunpack.c.l.b16 %v339
    %v507 = vunpack.c.h.b16 %v339
    %v508 = vunpack.c.l.b16 %v340
    %v509 = vunpack.c.h.b16 %v340
    %v510 = vunpack.c.l.b16 %v341
    %v511 = vunpack.c.h.b16 %v341
    %v512 = vunpack.c.l.b16 %v342
    %v513 = vunpack.c.h.b16 %v342
    %v514 = vunpack.c.l.b16 %v343
    %v515 = vunpack.c.h.b16 %v343
    %v516 = vunpack.c.l.b16 %v344
    %v517 = vunpack.c.h.b16 %v344
    %v518 = vunpack.c.l.b16 %v345
    %v519 = vunpack.c.h.b16 %v345
    %v520 = vunpack.c.l.b16 %v346
    %v521 = vunpack.c.h.b16 %v346
    %v522 = vunpack.c.l.b16 %v347
    %v523 = vunpack.c.h.b16 %v347
    %v524 = vunpack.c.l.b16 %v348
    %v525 = vunpack.c.h.b16 %v348
    %v526 = vunpack.c.l.b16 %v349
    %v527 = vunpack.c.h.b16 %v349
    %v528 = vunpack.c.l.b16 %v350
    %v529 = vunpack.c.h.b16 %v350
    %v530 = vunpack.c.l.b16 %v351
    %v531 = vunpack.c.h.b16 %v351
    %v532 = vunpack.c.l.b16 %v352
    %v533 = vunpack.c.h.b16 %v352
    %v534 = vunpack.c.l.b16 %v353
    %v535 = vunpack.c.h.b16 %v353
    %v536 = vunpack.c.l.b16 %v354
    %v537 = vunpack.c.h.b16 %v354
    %v538 = vunpack.c.l.b16 %v355
    %v539 = vunpack.c.h.b16 %v355
    %v540 = vunpack.c.l.b16 %v356
    %v541 = vunpack.c.h.b16 %v356
    %v542 = vunpack.c.l.b16 %v357
    %v543 = vunpack.c.h.b16 %v357
    %v544 = vunpack.c.l.b16 %v358
    %v545 = vunpack.c.h.b16 %v358
    %v546 = vunpack.c.l.b16 %v359
    %v547 = vunpack.c.h.b16 %v359
    %v548 = vunpack.c.l.b16 %v360
    %v549 = vunpack.c.h.b16 %v360
    %v550 = vunpack.c.l.b16 %v361
    %v551 = vunpack.c.h.b16 %v361
    %v552 = vunpack.c.l.b16 %v362
    %v553 = vunpack.c.h.b16 %v362
    %v554 = vunpack.c.l.b16 %v363
    %v555 = vunpack.c.h.b16 %v363
    %v556 = vpack.c.b16 %v432, %v428
    %v557 = vpack.c.b16 %v433, %v429
    %v558 = vpack.c.b16 %v434, %v430
    %v559 = vpack.c.b16 %v435, %v431
    %v560 = vpack.c.b16 %v440, %v436
    %v561 = vpack.c.b16 %v441, %v437
    %v562 = vpack.c.b16 %v442, %v438
    %v563 = vpack.c.b16 %v443, %v439
    %v564 = vpack.c.b16 %v448, %v444
    %v565 = vpack.c.b16 %v449, %v445
    %v566 = vpack.c.b16 %v450, %v446
    %v567 = vpack.c.b16 %v451, %v447
    %v568 = vpack.c.b16 %v456, %v452
    %v569 = vpack.c.b16 %v457, %v453
    %v570 = vpack.c.b16 %v458, %v454
    %v571 = vpack.c.b16 %v459, %v455
    %v572 = vpack.c.b16 %v464, %v460
    %v573 = vpack.c.b16 %v465, %v461
    %v574 = vpack.c.b16 %v466, %v462
    %v575 = vpack.c.b16 %v467, %v463
    %v576 = vpack.c.b16 %v472, %v468
    %v577 = vpack.c.b16 %v473, %v469
    %v578 = vpack.c.b16 %v474, %v470
    %v579 = vpack.c.b16 %v475, %v471
    %v580 = vpack.c.b16 %v480, %v476
    %v581 = vpack.c.b16 %v481, %v477
    %v582 = vpack.c.b16 %v482, %v478
    %v583 = vpack.c.b16 %v483, %v479
    %v584 = vpack.c.b16 %v488, %v484
    %v585 = vpack.c.b16 %v489, %v485
    %v586 = vpack.c.b16 %v490, %v486
    %v587 = vpack.c.b16 %v491, %v487
    %v588 = vpack.c.b16 %v496, %v492
    %v589 = vpack.c.b16 %v497, %v493
    %v590 = vpack.c.b16 %v498, %v494
    %v591 = vpack.c.b16 %v499, %v495
    %v592 = vpack.c.b16 %v504, %v500
    %v593 = vpack.c.b16 %v505, %v501
    %v594 = vpack.c.b16 %v506, %v502
    %v595 = vpack.c.b16 %v507, %v503
    %v596 = vpack.c.b16 %v512, %v508
    %v597 = vpack.c.b16 %v513, %v509
    %v598 = vpack.c.b16 %v514, %v510
    %v599 = vpack.c.b16 %v515, %v511
    %v600 = vpack.c.b16 %v520, %v516
    %v601 = vpack.c.b16 %v521, %v517
    %v602 = vpack.c.b16 %v522, %v518
    %v603 = vpack.c.b16 %v523, %v519
    %v604 = vpack.c.b16 %v528, %v524
    %v605 = vpack.c.b16 %v529, %v525
    %v606 = vpack.c.b16 %v530, %v526
    %v607 = vpack.c.b16 %v531, %v527
    %v608 = vpack.c.b16 %v536, %v532
    %v609 = vpack.c.b16 %v537, %v533
    %v610 = vpack.c.b16 %v538, %v534
    %v611 = vpack.c.b16 %v539, %v535
    %v612 = vpack.c.b16 %v544, %v540
    %v613 = vpack.c.b16 %v545, %v541
    %v614 = vpack.c.b16 %v546, %v542
    %v615 = vpack.c.b16 %v547, %v543
    %v616 = vpack.c.b16 %v552, %v548
    %v617 = vpack.c.b16 %v553, %v549
    %v618 = vpack.c.b16 %v554, %v550
    %v619 = vpack.c.b16 %v555, %v551
    %684 = vmatprep.subr.bf16.mxu0 %v557
    %685 = vmatpush1.bf16.msra.mxu0 %v556
    %686 = vmatprep.subr.bf16.mxu0 %v561
    %687 = vmatpush1.bf16.msra.mxu0 %v560
    %688 = vmatprep.subr.bf16.mxu0 %v565
    %689 = vmatpush1.bf16.msra.mxu0 %v564
    %690 = vmatprep.subr.bf16.mxu0 %v569
    %691 = vmatpush1.bf16.msra.mxu0 %v568
    %692 = vmatprep.subr.bf16.mxu0 %v573
    %693 = vmatpush1.bf16.msra.mxu0 %v572
    %694 = vmatprep.subr.bf16.mxu0 %v577
    %695 = vmatpush1.bf16.msra.mxu0 %v576
    %696 = vmatprep.subr.bf16.mxu0 %v581
    %697 = vmatpush1.bf16.msra.mxu0 %v580
    %698 = vmatprep.subr.bf16.mxu0 %v585
    %699 = vmatpush1.bf16.msra.mxu0 %v584
    %700 = vmatprep.subr.bf16.mxu0 %v589
    %701 = vmatpush1.bf16.msra.mxu0 %v588
    %702 = vmatprep.subr.bf16.mxu0 %v593
    %703 = vmatpush1.bf16.msra.mxu0 %v592
    %704 = vmatprep.subr.bf16.mxu0 %v597
    %705 = vmatpush1.bf16.msra.mxu0 %v596
    %706 = vmatprep.subr.bf16.mxu0 %v601
    %707 = vmatpush1.bf16.msra.mxu0 %v600
    %708 = vmatprep.subr.bf16.mxu0 %v605
    %709 = vmatpush1.bf16.msra.mxu0 %v604
    %710 = vmatprep.subr.bf16.mxu0 %v609
    %711 = vmatpush1.bf16.msra.mxu0 %v608
    %712 = vmatprep.subr.bf16.mxu0 %v613
    %713 = vmatpush1.bf16.msra.mxu0 %v612
    %714 = vmatprep.subr.bf16.mxu0 %v617
    %715 = vmatpush1.bf16.msra.mxu0 %v616
    %716 = vmatprep.mubr.bf16.mxu0 %v299
    %717 = vmatmul.mubr.bf16.gmra.mrb[0].mxu0 %v298
    %v718 = vpop.f32.mrb[0].mxu0
    %v719 = vadd.f32 0.0, %v718
    %v720 = vpop.f32.mrb[0].mxu0
    %v721 = vadd.f32 0.0, %v720
    %v722 = vpop.f32.mrb[0].mxu0
    %v723 = vpop.f32.mrb[0].mxu0
    %724 = vdwg.mxu0
    %725 = vmatprep.subr.bf16.mxu0 %v559
    %726 = vmatpush1.bf16.msra.mxu0 %v558
    %727 = vmatprep.subr.bf16.mxu0 %v563
    %728 = vmatpush1.bf16.msra.mxu0 %v562
    %729 = vmatprep.subr.bf16.mxu0 %v567
    %730 = vmatpush1.bf16.msra.mxu0 %v566
    %731 = vmatprep.subr.bf16.mxu0 %v571
    %732 = vmatpush1.bf16.msra.mxu0 %v570
    %733 = vmatprep.subr.bf16.mxu0 %v575
    %734 = vmatpush1.bf16.msra.mxu0 %v574
    %735 = vmatprep.subr.bf16.mxu0 %v579
    %736 = vmatpush1.bf16.msra.mxu0 %v578
    %737 = vmatprep.subr.bf16.mxu0 %v583
    %738 = vmatpush1.bf16.msra.mxu0 %v582
    %739 = vmatprep.subr.bf16.mxu0 %v587
    %740 = vmatpush1.bf16.msra.mxu0 %v586
    %741 = vmatprep.subr.bf16.mxu0 %v591
    %742 = vmatpush1.bf16.msra.mxu0 %v590
    %743 = vmatprep.subr.bf16.mxu0 %v595
    %744 = vmatpush1.bf16.msra.mxu0 %v594
    %745 = vmatprep.subr.bf16.mxu0 %v599
    %746 = vmatpush1.bf16.msra.mxu0 %v598
    %747 = vmatprep.subr.bf16.mxu0 %v603
    %748 = vmatpush1.bf16.msra.mxu0 %v602
    %749 = vmatprep.subr.bf16.mxu0 %v607
    %750 = vmatpush1.bf16.msra.mxu0 %v606
    %751 = vmatprep.subr.bf16.mxu0 %v611
    %752 = vmatpush1.bf16.msra.mxu0 %v610
    %753 = vmatprep.subr.bf16.mxu0 %v615
    %754 = vmatpush1.bf16.msra.mxu0 %v614
    %755 = vmatprep.subr.bf16.mxu0 %v619
    %756 = vmatpush1.bf16.msra.mxu0 %v618
    %757 = vmatprep.mubr.bf16.mxu0 %v299
    %758 = vmatmul.mubr.bf16.gmra.mrb[0].mxu0 %v298
    %v759 = vpop.f32.mrb[0].mxu0
    %v760 = vadd.f32 0.0, %v759
    %v761 = vpop.f32.mrb[0].mxu0
    %v762 = vadd.f32 0.0, %v761
    %v763 = vpop.f32.mrb[0].mxu0
    %v764 = vpop.f32.mrb[0].mxu0
    %765 = vdwg.mxu0
    %v766 = vld [vmem:[#allocation7] sm:$0xff]
    %v767 = vld [vmem:[#allocation7 + $0x8] sm:$0xff]
    %v768 = vld [vmem:[#allocation7 + $0x10] sm:$0xff]
    %v769 = vld [vmem:[#allocation7 + $0x18] sm:$0xff]
    %v770 = vld [vmem:[#allocation7 + $0x20] sm:$0xff]
    %v771 = vld [vmem:[#allocation7 + $0x28] sm:$0xff]
    %v772 = vld [vmem:[#allocation7 + $0x30] sm:$0xff]
    %v773 = vld [vmem:[#allocation7 + $0x38] sm:$0xff]
    %v774 = vld [vmem:[#allocation7 + $0x40] sm:$0xff]
    %v775 = vld [vmem:[#allocation7 + $0x48] sm:$0xff]
    %v776 = vld [vmem:[#allocation7 + $0x50] sm:$0xff]
    %v777 = vld [vmem:[#allocation7 + $0x58] sm:$0xff]
    %v778 = vld [vmem:[#allocation7 + $0x60] sm:$0xff]
    %v779 = vld [vmem:[#allocation7 + $0x68] sm:$0xff]
    %v780 = vld [vmem:[#allocation7 + $0x70] sm:$0xff]
    %v781 = vld [vmem:[#allocation7 + $0x78] sm:$0xff]
    %v782 = vld [vmem:[#allocation7 + $0x80] sm:$0xff]
    %v783 = vld [vmem:[#allocation7 + $0x88] sm:$0xff]
    %v784 = vld [vmem:[#allocation7 + $0x90] sm:$0xff]
    %v785 = vld [vmem:[#allocation7 + $0x98] sm:$0xff]
    %v786 = vld [vmem:[#allocation7 + $0xa0] sm:$0xff]
    %v787 = vld [vmem:[#allocation7 + $0xa8] sm:$0xff]
    %v788 = vld [vmem:[#allocation7 + $0xb0] sm:$0xff]
    %v789 = vld [vmem:[#allocation7 + $0xb8] sm:$0xff]
    %v790 = vld [vmem:[#allocation7 + $0xc0] sm:$0xff]
    %v791 = vld [vmem:[#allocation7 + $0xc8] sm:$0xff]
    %v792 = vld [vmem:[#allocation7 + $0xd0] sm:$0xff]
    %v793 = vld [vmem:[#allocation7 + $0xd8] sm:$0xff]
    %v794 = vld [vmem:[#allocation7 + $0xe0] sm:$0xff]
    %v795 = vld [vmem:[#allocation7 + $0xe8] sm:$0xff]
    %v796 = vld [vmem:[#allocation7 + $0xf0] sm:$0xff]
    %v797 = vld [vmem:[#allocation7 + $0xf8] sm:$0xff]
    %v798 = vld [vmem:[#allocation7 + $0x100] sm:$0xff]
    %v799 = vld [vmem:[#allocation7 + $0x108] sm:$0xff]
    %v800 = vld [vmem:[#allocation7 + $0x110] sm:$0xff]
    %v801 = vld [vmem:[#allocation7 + $0x118] sm:$0xff]
    %v802 = vld [vmem:[#allocation7 + $0x120] sm:$0xff]
    %v803 = vld [vmem:[#allocation7 + $0x128] sm:$0xff]
    %v804 = vld [vmem:[#allocation7 + $0x130] sm:$0xff]
    %v805 = vld [vmem:[#allocation7 + $0x138] sm:$0xff]
    %v806 = vld [vmem:[#allocation7 + $0x140] sm:$0xff]
    %v807 = vld [vmem:[#allocation7 + $0x148] sm:$0xff]
    %v808 = vld [vmem:[#allocation7 + $0x150] sm:$0xff]
    %v809 = vld [vmem:[#allocation7 + $0x158] sm:$0xff]
    %v810 = vld [vmem:[#allocation7 + $0x160] sm:$0xff]
    %v811 = vld [vmem:[#allocation7 + $0x168] sm:$0xff]
    %v812 = vld [vmem:[#allocation7 + $0x170] sm:$0xff]
    %v813 = vld [vmem:[#allocation7 + $0x178] sm:$0xff]
    %v814 = vld [vmem:[#allocation7 + $0x180] sm:$0xff]
    %v815 = vld [vmem:[#allocation7 + $0x188] sm:$0xff]
    %v816 = vld [vmem:[#allocation7 + $0x190] sm:$0xff]
    %v817 = vld [vmem:[#allocation7 + $0x198] sm:$0xff]
    %v818 = vld [vmem:[#allocation7 + $0x1a0] sm:$0xff]
    %v819 = vld [vmem:[#allocation7 + $0x1a8] sm:$0xff]
    %v820 = vld [vmem:[#allocation7 + $0x1b0] sm:$0xff]
    %v821 = vld [vmem:[#allocation7 + $0x1b8] sm:$0xff]
    %v822 = vld [vmem:[#allocation7 + $0x1c0] sm:$0xff]
    %v823 = vld [vmem:[#allocation7 + $0x1c8] sm:$0xff]
    %v824 = vld [vmem:[#allocation7 + $0x1d0] sm:$0xff]
    %v825 = vld [vmem:[#allocation7 + $0x1d8] sm:$0xff]
    %v826 = vld [vmem:[#allocation7 + $0x1e0] sm:$0xff]
    %v827 = vld [vmem:[#allocation7 + $0x1e8] sm:$0xff]
    %v828 = vld [vmem:[#allocation7 + $0x1f0] sm:$0xff]
    %v829 = vld [vmem:[#allocation7 + $0x1f8] sm:$0xff]
    %v830 = vld [vmem:[#allocation7 + $0x200] sm:$0xff]
    %v831 = vld [vmem:[#allocation7 + $0x208] sm:$0xff]
    %v832 = vld [vmem:[#allocation7 + $0x210] sm:$0xff]
    %v833 = vld [vmem:[#allocation7 + $0x218] sm:$0xff]
    %v834 = vld [vmem:[#allocation7 + $0x220] sm:$0xff]
    %v835 = vld [vmem:[#allocation7 + $0x228] sm:$0xff]
    %v836 = vld [vmem:[#allocation7 + $0x230] sm:$0xff]
    %v837 = vld [vmem:[#allocation7 + $0x238] sm:$0xff]
    %v838 = vld [vmem:[#allocation7 + $0x240] sm:$0xff]
    %v839 = vld [vmem:[#allocation7 + $0x248] sm:$0xff]
    %v840 = vld [vmem:[#allocation7 + $0x250] sm:$0xff]
    %v841 = vld [vmem:[#allocation7 + $0x258] sm:$0xff]
    %v842 = vld [vmem:[#allocation7 + $0x260] sm:$0xff]
    %v843 = vld [vmem:[#allocation7 + $0x268] sm:$0xff]
    %v844 = vld [vmem:[#allocation7 + $0x270] sm:$0xff]
    %v845 = vld [vmem:[#allocation7 + $0x278] sm:$0xff]
    %v846 = vld [vmem:[#allocation7 + $0x280] sm:$0xff]
    %v847 = vld [vmem:[#allocation7 + $0x288] sm:$0xff]
    %v848 = vld [vmem:[#allocation7 + $0x290] sm:$0xff]
    %v849 = vld [vmem:[#allocation7 + $0x298] sm:$0xff]
    %v850 = vld [vmem:[#allocation7 + $0x2a0] sm:$0xff]
    %v851 = vld [vmem:[#allocation7 + $0x2a8] sm:$0xff]
    %v852 = vld [vmem:[#allocation7 + $0x2b0] sm:$0xff]
    %v853 = vld [vmem:[#allocation7 + $0x2b8] sm:$0xff]
    %v854 = vld [vmem:[#allocation7 + $0x2c0] sm:$0xff]
    %v855 = vld [vmem:[#allocation7 + $0x2c8] sm:$0xff]
    %v856 = vld [vmem:[#allocation7 + $0x2d0] sm:$0xff]
    %v857 = vld [vmem:[#allocation7 + $0x2d8] sm:$0xff]
    %v858 = vld [vmem:[#allocation7 + $0x2e0] sm:$0xff]
    %v859 = vld [vmem:[#allocation7 + $0x2e8] sm:$0xff]
    %v860 = vld [vmem:[#allocation7 + $0x2f0] sm:$0xff]
    %v861 = vld [vmem:[#allocation7 + $0x2f8] sm:$0xff]
    %v862 = vld [vmem:[#allocation7 + $0x300] sm:$0xff]
    %v863 = vld [vmem:[#allocation7 + $0x308] sm:$0xff]
    %v864 = vld [vmem:[#allocation7 + $0x310] sm:$0xff]
    %v865 = vld [vmem:[#allocation7 + $0x318] sm:$0xff]
    %v866 = vld [vmem:[#allocation7 + $0x320] sm:$0xff]
    %v867 = vld [vmem:[#allocation7 + $0x328] sm:$0xff]
    %v868 = vld [vmem:[#allocation7 + $0x330] sm:$0xff]
    %v869 = vld [vmem:[#allocation7 + $0x338] sm:$0xff]
    %v870 = vld [vmem:[#allocation7 + $0x340] sm:$0xff]
    %v871 = vld [vmem:[#allocation7 + $0x348] sm:$0xff]
    %v872 = vld [vmem:[#allocation7 + $0x350] sm:$0xff]
    %v873 = vld [vmem:[#allocation7 + $0x358] sm:$0xff]
    %v874 = vld [vmem:[#allocation7 + $0x360] sm:$0xff]
    %v875 = vld [vmem:[#allocation7 + $0x368] sm:$0xff]
    %v876 = vld [vmem:[#allocation7 + $0x370] sm:$0xff]
    %v877 = vld [vmem:[#allocation7 + $0x378] sm:$0xff]
    %v878 = vld [vmem:[#allocation7 + $0x380] sm:$0xff]
    %v879 = vld [vmem:[#allocation7 + $0x388] sm:$0xff]
    %v880 = vld [vmem:[#allocation7 + $0x390] sm:$0xff]
    %v881 = vld [vmem:[#allocation7 + $0x398] sm:$0xff]
    %v882 = vld [vmem:[#allocation7 + $0x3a0] sm:$0xff]
    %v883 = vld [vmem:[#allocation7 + $0x3a8] sm:$0xff]
    %v884 = vld [vmem:[#allocation7 + $0x3b0] sm:$0xff]
    %v885 = vld [vmem:[#allocation7 + $0x3b8] sm:$0xff]
    %v886 = vld [vmem:[#allocation7 + $0x3c0] sm:$0xff]
    %v887 = vld [vmem:[#allocation7 + $0x3c8] sm:$0xff]
    %v888 = vld [vmem:[#allocation7 + $0x3d0] sm:$0xff]
    %v889 = vld [vmem:[#allocation7 + $0x3d8] sm:$0xff]
    %v890 = vld [vmem:[#allocation7 + $0x3e0] sm:$0xff]
    %v891 = vld [vmem:[#allocation7 + $0x3e8] sm:$0xff]
    %v892 = vld [vmem:[#allocation7 + $0x3f0] sm:$0xff]
    %v893 = vld [vmem:[#allocation7 + $0x3f8] sm:$0xff]
    %v894 = vld [vmem:[#allocation7 + $0x400] sm:$0xff]
    %v895 = vld [vmem:[#allocation7 + $0x408] sm:$0xff]
    %v896 = vld [vmem:[#allocation7 + $0x410] sm:$0xff]
    %v897 = vld [vmem:[#allocation7 + $0x418] sm:$0xff]
    %v898 = vld [vmem:[#allocation7 + $0x420] sm:$0xff]
    %v899 = vld [vmem:[#allocation7 + $0x428] sm:$0xff]
    %v900 = vld [vmem:[#allocation7 + $0x430] sm:$0xff]
    %v901 = vld [vmem:[#allocation7 + $0x438] sm:$0xff]
    %v902 = vld [vmem:[#allocation7 + $0x440] sm:$0xff]
    %v903 = vld [vmem:[#allocation7 + $0x448] sm:$0xff]
    %v904 = vld [vmem:[#allocation7 + $0x450] sm:$0xff]
    %v905 = vld [vmem:[#allocation7 + $0x458] sm:$0xff]
    %v906 = vld [vmem:[#allocation7 + $0x460] sm:$0xff]
    %v907 = vld [vmem:[#allocation7 + $0x468] sm:$0xff]
    %v908 = vld [vmem:[#allocation7 + $0x470] sm:$0xff]
    %v909 = vld [vmem:[#allocation7 + $0x478] sm:$0xff]
    %v910 = vld [vmem:[#allocation7 + $0x480] sm:$0xff]
    %v911 = vld [vmem:[#allocation7 + $0x488] sm:$0xff]
    %v912 = vld [vmem:[#allocation7 + $0x490] sm:$0xff]
    %v913 = vld [vmem:[#allocation7 + $0x498] sm:$0xff]
    %v914 = vld [vmem:[#allocation7 + $0x4a0] sm:$0xff]
    %v915 = vld [vmem:[#allocation7 + $0x4a8] sm:$0xff]
    %v916 = vld [vmem:[#allocation7 + $0x4b0] sm:$0xff]
    %v917 = vld [vmem:[#allocation7 + $0x4b8] sm:$0xff]
    %v918 = vld [vmem:[#allocation7 + $0x4c0] sm:$0xff]
    %v919 = vld [vmem:[#allocation7 + $0x4c8] sm:$0xff]
    %v920 = vld [vmem:[#allocation7 + $0x4d0] sm:$0xff]
    %v921 = vld [vmem:[#allocation7 + $0x4d8] sm:$0xff]
    %v922 = vld [vmem:[#allocation7 + $0x4e0] sm:$0xff]
    %v923 = vld [vmem:[#allocation7 + $0x4e8] sm:$0xff]
    %v924 = vld [vmem:[#allocation7 + $0x4f0] sm:$0xff]
    %v925 = vld [vmem:[#allocation7 + $0x4f8] sm:$0xff]
    %v926 = vld [vmem:[#allocation7 + $0x500] sm:$0xff]
    %v927 = vld [vmem:[#allocation7 + $0x508] sm:$0xff]
    %v928 = vld [vmem:[#allocation7 + $0x510] sm:$0xff]
    %v929 = vld [vmem:[#allocation7 + $0x518] sm:$0xff]
    %v930 = vld [vmem:[#allocation7 + $0x520] sm:$0xff]
    %v931 = vld [vmem:[#allocation7 + $0x528] sm:$0xff]
    %v932 = vld [vmem:[#allocation7 + $0x530] sm:$0xff]
    %v933 = vld [vmem:[#allocation7 + $0x538] sm:$0xff]
    %v934 = vld [vmem:[#allocation7 + $0x540] sm:$0xff]
    %v935 = vld [vmem:[#allocation7 + $0x548] sm:$0xff]
    %v936 = vld [vmem:[#allocation7 + $0x550] sm:$0xff]
    %v937 = vld [vmem:[#allocation7 + $0x558] sm:$0xff]
    %v938 = vld [vmem:[#allocation7 + $0x560] sm:$0xff]
    %v939 = vld [vmem:[#allocation7 + $0x568] sm:$0xff]
    %v940 = vld [vmem:[#allocation7 + $0x570] sm:$0xff]
    %v941 = vld [vmem:[#allocation7 + $0x578] sm:$0xff]
    %v942 = vld [vmem:[#allocation7 + $0x580] sm:$0xff]
    %v943 = vld [vmem:[#allocation7 + $0x588] sm:$0xff]
    %v944 = vld [vmem:[#allocation7 + $0x590] sm:$0xff]
    %v945 = vld [vmem:[#allocation7 + $0x598] sm:$0xff]
    %v946 = vld [vmem:[#allocation7 + $0x5a0] sm:$0xff]
    %v947 = vld [vmem:[#allocation7 + $0x5a8] sm:$0xff]
    %v948 = vld [vmem:[#allocation7 + $0x5b0] sm:$0xff]
    %v949 = vld [vmem:[#allocation7 + $0x5b8] sm:$0xff]
    %v950 = vld [vmem:[#allocation7 + $0x5c0] sm:$0xff]
    %v951 = vld [vmem:[#allocation7 + $0x5c8] sm:$0xff]
    %v952 = vld [vmem:[#allocation7 + $0x5d0] sm:$0xff]
    %v953 = vld [vmem:[#allocation7 + $0x5d8] sm:$0xff]
    %v954 = vld [vmem:[#allocation7 + $0x5e0] sm:$0xff]
    %v955 = vld [vmem:[#allocation7 + $0x5e8] sm:$0xff]
    %v956 = vld [vmem:[#allocation7 + $0x5f0] sm:$0xff]
    %v957 = vld [vmem:[#allocation7 + $0x5f8] sm:$0xff]
    %v958 = vld [vmem:[#allocation7 + $0x600] sm:$0xff]
    %v959 = vld [vmem:[#allocation7 + $0x608] sm:$0xff]
    %v960 = vld [vmem:[#allocation7 + $0x610] sm:$0xff]
    %v961 = vld [vmem:[#allocation7 + $0x618] sm:$0xff]
    %v962 = vld [vmem:[#allocation7 + $0x620] sm:$0xff]
    %v963 = vld [vmem:[#allocation7 + $0x628] sm:$0xff]
    %v964 = vld [vmem:[#allocation7 + $0x630] sm:$0xff]
    %v965 = vld [vmem:[#allocation7 + $0x638] sm:$0xff]
    %v966 = vld [vmem:[#allocation7 + $0x640] sm:$0xff]
    %v967 = vld [vmem:[#allocation7 + $0x648] sm:$0xff]
    %v968 = vld [vmem:[#allocation7 + $0x650] sm:$0xff]
    %v969 = vld [vmem:[#allocation7 + $0x658] sm:$0xff]
    %v970 = vld [vmem:[#allocation7 + $0x660] sm:$0xff]
    %v971 = vld [vmem:[#allocation7 + $0x668] sm:$0xff]
    %v972 = vld [vmem:[#allocation7 + $0x670] sm:$0xff]
    %v973 = vld [vmem:[#allocation7 + $0x678] sm:$0xff]
    %v974 = vld [vmem:[#allocation7 + $0x680] sm:$0xff]
    %v975 = vld [vmem:[#allocation7 + $0x688] sm:$0xff]
    %v976 = vld [vmem:[#allocation7 + $0x690] sm:$0xff]
    %v977 = vld [vmem:[#allocation7 + $0x698] sm:$0xff]
    %v978 = vld [vmem:[#allocation7 + $0x6a0] sm:$0xff]
    %v979 = vld [vmem:[#allocation7 + $0x6a8] sm:$0xff]
    %v980 = vld [vmem:[#allocation7 + $0x6b0] sm:$0xff]
    %v981 = vld [vmem:[#allocation7 + $0x6b8] sm:$0xff]
    %v982 = vld [vmem:[#allocation7 + $0x6c0] sm:$0xff]
    %v983 = vld [vmem:[#allocation7 + $0x6c8] sm:$0xff]
    %v984 = vld [vmem:[#allocation7 + $0x6d0] sm:$0xff]
    %v985 = vld [vmem:[#allocation7 + $0x6d8] sm:$0xff]
    %v986 = vld [vmem:[#allocation7 + $0x6e0] sm:$0xff]
    %v987 = vld [vmem:[#allocation7 + $0x6e8] sm:$0xff]
    %v988 = vld [vmem:[#allocation7 + $0x6f0] sm:$0xff]
    %v989 = vld [vmem:[#allocation7 + $0x6f8] sm:$0xff]
    %v990 = vld [vmem:[#allocation7 + $0x700] sm:$0xff]
    %v991 = vld [vmem:[#allocation7 + $0x708] sm:$0xff]
    %v992 = vld [vmem:[#allocation7 + $0x710] sm:$0xff]
    %v993 = vld [vmem:[#allocation7 + $0x718] sm:$0xff]
    %v994 = vld [vmem:[#allocation7 + $0x720] sm:$0xff]
    %v995 = vld [vmem:[#allocation7 + $0x728] sm:$0xff]
    %v996 = vld [vmem:[#allocation7 + $0x730] sm:$0xff]
    %v997 = vld [vmem:[#allocation7 + $0x738] sm:$0xff]
    %v998 = vld [vmem:[#allocation7 + $0x740] sm:$0xff]
    %v999 = vld [vmem:[#allocation7 + $0x748] sm:$0xff]
    %v1000 = vld [vmem:[#allocation7 + $0x750] sm:$0xff]
    %v1001 = vld [vmem:[#allocation7 + $0x758] sm:$0xff]
    %v1002 = vld [vmem:[#allocation7 + $0x760] sm:$0xff]
    %v1003 = vld [vmem:[#allocation7 + $0x768] sm:$0xff]
    %v1004 = vld [vmem:[#allocation7 + $0x770] sm:$0xff]
    %v1005 = vld [vmem:[#allocation7 + $0x778] sm:$0xff]
    %v1006 = vld [vmem:[#allocation7 + $0x780] sm:$0xff]
    %v1007 = vld [vmem:[#allocation7 + $0x788] sm:$0xff]
    %v1008 = vld [vmem:[#allocation7 + $0x790] sm:$0xff]
    %v1009 = vld [vmem:[#allocation7 + $0x798] sm:$0xff]
    %v1010 = vld [vmem:[#allocation7 + $0x7a0] sm:$0xff]
    %v1011 = vld [vmem:[#allocation7 + $0x7a8] sm:$0xff]
    %v1012 = vld [vmem:[#allocation7 + $0x7b0] sm:$0xff]
    %v1013 = vld [vmem:[#allocation7 + $0x7b8] sm:$0xff]
    %v1014 = vld [vmem:[#allocation7 + $0x7c0] sm:$0xff]
    %v1015 = vld [vmem:[#allocation7 + $0x7c8] sm:$0xff]
    %v1016 = vld [vmem:[#allocation7 + $0x7d0] sm:$0xff]
    %v1017 = vld [vmem:[#allocation7 + $0x7d8] sm:$0xff]
    %v1018 = vld [vmem:[#allocation7 + $0x7e0] sm:$0xff]
    %v1019 = vld [vmem:[#allocation7 + $0x7e8] sm:$0xff]
    %v1020 = vld [vmem:[#allocation7 + $0x7f0] sm:$0xff]
    %v1021 = vld [vmem:[#allocation7 + $0x7f8] sm:$0xff]
    %1022 = vmatprep.subr.mxu0 %v767
    %1023 = vmatpush1.msra.mxu0 %v766
    %1024 = vmatprep.subr.mxu0 %v771
    %1025 = vmatpush1.msra.mxu0 %v770
    %1026 = vmatprep.subr.mxu0 %v775
    %1027 = vmatpush1.msra.mxu0 %v774
    %1028 = vmatprep.subr.mxu0 %v779
    %1029 = vmatpush1.msra.mxu0 %v778
    %1030 = vmatprep.subr.mxu0 %v783
    %1031 = vmatpush1.msra.mxu0 %v782
    %1032 = vmatprep.subr.mxu0 %v787
    %1033 = vmatpush1.msra.mxu0 %v786
    %1034 = vmatprep.subr.mxu0 %v791
    %1035 = vmatpush1.msra.mxu0 %v790
    %1036 = vmatprep.subr.mxu0 %v795
    %1037 = vmatpush1.msra.mxu0 %v794
    %1038 = vmatprep.subr.mxu0 %v799
    %1039 = vmatpush1.msra.mxu0 %v798
    %1040 = vmatprep.subr.mxu0 %v803
    %1041 = vmatpush1.msra.mxu0 %v802
    %1042 = vmatprep.subr.mxu0 %v807
    %1043 = vmatpush1.msra.mxu0 %v806
    %1044 = vmatprep.subr.mxu0 %v811
    %1045 = vmatpush1.msra.mxu0 %v810
    %1046 = vmatprep.subr.mxu0 %v815
    %1047 = vmatpush1.msra.mxu0 %v814
    %1048 = vmatprep.subr.mxu0 %v819
    %1049 = vmatpush1.msra.mxu0 %v818
    %1050 = vmatprep.subr.mxu0 %v823
    %1051 = vmatpush1.msra.mxu0 %v822
    %1052 = vmatprep.subr.mxu0 %v827
    %1053 = vmatpush1.msra.mxu0 %v826
    %1054 = vmatprep.subr.mxu0 %v831
    %1055 = vmatpush1.msra.mxu0 %v830
    %1056 = vmatprep.subr.mxu0 %v835
    %1057 = vmatpush1.msra.mxu0 %v834
    %1058 = vmatprep.subr.mxu0 %v839
    %1059 = vmatpush1.msra.mxu0 %v838
    %1060 = vmatprep.subr.mxu0 %v843
    %1061 = vmatpush1.msra.mxu0 %v842
    %1062 = vmatprep.subr.mxu0 %v847
    %1063 = vmatpush1.msra.mxu0 %v846
    %1064 = vmatprep.subr.mxu0 %v851
    %1065 = vmatpush1.msra.mxu0 %v850
    %1066 = vmatprep.subr.mxu0 %v855
    %1067 = vmatpush1.msra.mxu0 %v854
    %1068 = vmatprep.subr.mxu0 %v859
    %1069 = vmatpush1.msra.mxu0 %v858
    %1070 = vmatprep.subr.mxu0 %v863
    %1071 = vmatpush1.msra.mxu0 %v862
    %1072 = vmatprep.subr.mxu0 %v867
    %1073 = vmatpush1.msra.mxu0 %v866
    %1074 = vmatprep.subr.mxu0 %v871
    %1075 = vmatpush1.msra.mxu0 %v870
    %1076 = vmatprep.subr.mxu0 %v875
    %1077 = vmatpush1.msra.mxu0 %v874
    %1078 = vmatprep.subr.mxu0 %v879
    %1079 = vmatpush1.msra.mxu0 %v878
    %1080 = vmatprep.subr.mxu0 %v883
    %1081 = vmatpush1.msra.mxu0 %v882
    %1082 = vmatprep.subr.mxu0 %v887
    %1083 = vmatpush1.msra.mxu0 %v886
    %1084 = vmatprep.subr.mxu0 %v891
    %1085 = vmatpush1.msra.mxu0 %v890
    %1086 = vmatprep.mubr.f32.mxu0 %v721
    %1087 = vmatmul.mubr.f32.gmra.mrb[0].mxu0 %v719
    %v1088 = vpop.f32.mrb[0].mxu0
    %v1089 = vadd.f32 0.0, %v1088
    %v1090 = vpop.f32.mrb[0].mxu0
    %v1091 = vadd.f32 0.0, %v1090
    %1092 = vdwg.mxu0
    %1093 = vmatprep.subr.mxu0 %v895
    %1094 = vmatpush1.msra.mxu0 %v894
    %1095 = vmatprep.subr.mxu0 %v899
    %1096 = vmatpush1.msra.mxu0 %v898
    %1097 = vmatprep.subr.mxu0 %v903
    %1098 = vmatpush1.msra.mxu0 %v902
    %1099 = vmatprep.subr.mxu0 %v907
    %1100 = vmatpush1.msra.mxu0 %v906
    %1101 = vmatprep.subr.mxu0 %v911
    %1102 = vmatpush1.msra.mxu0 %v910
    %1103 = vmatprep.subr.mxu0 %v915
    %1104 = vmatpush1.msra.mxu0 %v914
    %1105 = vmatprep.subr.mxu0 %v919
    %1106 = vmatpush1.msra.mxu0 %v918
    %1107 = vmatprep.subr.mxu0 %v923
    %1108 = vmatpush1.msra.mxu0 %v922
    %1109 = vmatprep.subr.mxu0 %v927
    %1110 = vmatpush1.msra.mxu0 %v926
    %1111 = vmatprep.subr.mxu0 %v931
    %1112 = vmatpush1.msra.mxu0 %v930
    %1113 = vmatprep.subr.mxu0 %v935
    %1114 = vmatpush1.msra.mxu0 %v934
    %1115 = vmatprep.subr.mxu0 %v939
    %1116 = vmatpush1.msra.mxu0 %v938
    %1117 = vmatprep.subr.mxu0 %v943
    %1118 = vmatpush1.msra.mxu0 %v942
    %1119 = vmatprep.subr.mxu0 %v947
    %1120 = vmatpush1.msra.mxu0 %v946
    %1121 = vmatprep.subr.mxu0 %v951
    %1122 = vmatpush1.msra.mxu0 %v950
    %1123 = vmatprep.subr.mxu0 %v955
    %1124 = vmatpush1.msra.mxu0 %v954
    %1125 = vmatprep.subr.mxu0 %v959
    %1126 = vmatpush1.msra.mxu0 %v958
    %1127 = vmatprep.subr.mxu0 %v963
    %1128 = vmatpush1.msra.mxu0 %v962
    %1129 = vmatprep.subr.mxu0 %v967
    %1130 = vmatpush1.msra.mxu0 %v966
    %1131 = vmatprep.subr.mxu0 %v971
    %1132 = vmatpush1.msra.mxu0 %v970
    %1133 = vmatprep.subr.mxu0 %v975
    %1134 = vmatpush1.msra.mxu0 %v974
    %1135 = vmatprep.subr.mxu0 %v979
    %1136 = vmatpush1.msra.mxu0 %v978
    %1137 = vmatprep.subr.mxu0 %v983
    %1138 = vmatpush1.msra.mxu0 %v982
    %1139 = vmatprep.subr.mxu0 %v987
    %1140 = vmatpush1.msra.mxu0 %v986
    %1141 = vmatprep.subr.mxu0 %v991
    %1142 = vmatpush1.msra.mxu0 %v990
    %1143 = vmatprep.subr.mxu0 %v995
    %1144 = vmatpush1.msra.mxu0 %v994
    %1145 = vmatprep.subr.mxu0 %v999
    %1146 = vmatpush1.msra.mxu0 %v998
    %1147 = vmatprep.subr.mxu0 %v1003
    %1148 = vmatpush1.msra.mxu0 %v1002
    %1149 = vmatprep.subr.mxu0 %v1007
    %1150 = vmatpush1.msra.mxu0 %v1006
    %1151 = vmatprep.subr.mxu0 %v1011
    %1152 = vmatpush1.msra.mxu0 %v1010
    %1153 = vmatprep.subr.mxu0 %v1015
    %1154 = vmatpush1.msra.mxu0 %v1014
    %1155 = vmatprep.subr.mxu0 %v1019
    %1156 = vmatpush1.msra.mxu0 %v1018
    %1157 = vmatprep.mubr.f32.mxu0 %v762
    %1158 = vmatmul.mubr.f32.gmra.mrb[0].mxu0 %v760
    %v1159 = vpop.f32.mrb[0].mxu0
    %v1160 = vadd.f32 %v1089, %v1159
    %v1161 = vpop.f32.mrb[0].mxu0
    %v1162 = vadd.f32 %v1091, %v1161
    %1163 = vdwg.mxu0
    %1164 = vmatprep.subr.mxu0 %v769
    %1165 = vmatpush1.msra.mxu0 %v768
    %1166 = vmatprep.subr.mxu0 %v773
    %1167 = vmatpush1.msra.mxu0 %v772
    %1168 = vmatprep.subr.mxu0 %v777
    %1169 = vmatpush1.msra.mxu0 %v776
    %1170 = vmatprep.subr.mxu0 %v781
    %1171 = vmatpush1.msra.mxu0 %v780
    %1172 = vmatprep.subr.mxu0 %v785
    %1173 = vmatpush1.msra.mxu0 %v784
    %1174 = vmatprep.subr.mxu0 %v789
    %1175 = vmatpush1.msra.mxu0 %v788
    %1176 = vmatprep.subr.mxu0 %v793
    %1177 = vmatpush1.msra.mxu0 %v792
    %1178 = vmatprep.subr.mxu0 %v797
    %1179 = vmatpush1.msra.mxu0 %v796
    %1180 = vmatprep.subr.mxu0 %v801
    %1181 = vmatpush1.msra.mxu0 %v800
    %1182 = vmatprep.subr.mxu0 %v805
    %1183 = vmatpush1.msra.mxu0 %v804
    %1184 = vmatprep.subr.mxu0 %v809
    %1185 = vmatpush1.msra.mxu0 %v808
    %1186 = vmatprep.subr.mxu0 %v813
    %1187 = vmatpush1.msra.mxu0 %v812
    %1188 = vmatprep.subr.mxu0 %v817
    %1189 = vmatpush1.msra.mxu0 %v816
    %1190 = vmatprep.subr.mxu0 %v821
    %1191 = vmatpush1.msra.mxu0 %v820
    %1192 = vmatprep.subr.mxu0 %v825
    %1193 = vmatpush1.msra.mxu0 %v824
    %1194 = vmatprep.subr.mxu0 %v829
    %1195 = vmatpush1.msra.mxu0 %v828
    %1196 = vmatprep.subr.mxu0 %v833
    %1197 = vmatpush1.msra.mxu0 %v832
    %1198 = vmatprep.subr.mxu0 %v837
    %1199 = vmatpush1.msra.mxu0 %v836
    %1200 = vmatprep.subr.mxu0 %v841
    %1201 = vmatpush1.msra.mxu0 %v840
    %1202 = vmatprep.subr.mxu0 %v845
    %1203 = vmatpush1.msra.mxu0 %v844
    %1204 = vmatprep.subr.mxu0 %v849
    %1205 = vmatpush1.msra.mxu0 %v848
    %1206 = vmatprep.subr.mxu0 %v853
    %1207 = vmatpush1.msra.mxu0 %v852
    %1208 = vmatprep.subr.mxu0 %v857
    %1209 = vmatpush1.msra.mxu0 %v856
    %1210 = vmatprep.subr.mxu0 %v861
    %1211 = vmatpush1.msra.mxu0 %v860
    %1212 = vmatprep.subr.mxu0 %v865
    %1213 = vmatpush1.msra.mxu0 %v864
    %1214 = vmatprep.subr.mxu0 %v869
    %1215 = vmatpush1.msra.mxu0 %v868
    %1216 = vmatprep.subr.mxu0 %v873
    %1217 = vmatpush1.msra.mxu0 %v872
    %1218 = vmatprep.subr.mxu0 %v877
    %1219 = vmatpush1.msra.mxu0 %v876
    %1220 = vmatprep.subr.mxu0 %v881
    %1221 = vmatpush1.msra.mxu0 %v880
    %1222 = vmatprep.subr.mxu0 %v885
    %1223 = vmatpush1.msra.mxu0 %v884
    %1224 = vmatprep.subr.mxu0 %v889
    %1225 = vmatpush1.msra.mxu0 %v888
    %1226 = vmatprep.subr.mxu0 %v893
    %1227 = vmatpush1.msra.mxu0 %v892
    %1228 = vmatprep.mubr.f32.mxu0 %v721
    %1229 = vmatmul.mubr.f32.gmra.mrb[0].mxu0 %v719
    %v1230 = vpop.f32.mrb[0].mxu0
    %v1231 = vadd.f32 0.0, %v1230
    %v1232 = vpop.f32.mrb[0].mxu0
    %v1233 = vadd.f32 0.0, %v1232
    %1234 = vdwg.mxu0
    %1235 = vmatprep.subr.mxu0 %v897
    %1236 = vmatpush1.msra.mxu0 %v896
    %1237 = vmatprep.subr.mxu0 %v901
    %1238 = vmatpush1.msra.mxu0 %v900
    %1239 = vmatprep.subr.mxu0 %v905
    %1240 = vmatpush1.msra.mxu0 %v904
    %1241 = vmatprep.subr.mxu0 %v909
    %1242 = vmatpush1.msra.mxu0 %v908
    %1243 = vmatprep.subr.mxu0 %v913
    %1244 = vmatpush1.msra.mxu0 %v912
    %1245 = vmatprep.subr.mxu0 %v917
    %1246 = vmatpush1.msra.mxu0 %v916
    %1247 = vmatprep.subr.mxu0 %v921
    %1248 = vmatpush1.msra.mxu0 %v920
    %1249 = vmatprep.subr.mxu0 %v925
    %1250 = vmatpush1.msra.mxu0 %v924
    %1251 = vmatprep.subr.mxu0 %v929
    %1252 = vmatpush1.msra.mxu0 %v928
    %1253 = vmatprep.subr.mxu0 %v933
    %1254 = vmatpush1.msra.mxu0 %v932
    %1255 = vmatprep.subr.mxu0 %v937
    %1256 = vmatpush1.msra.mxu0 %v936
    %1257 = vmatprep.subr.mxu0 %v941
    %1258 = vmatpush1.msra.mxu0 %v940
    %1259 = vmatprep.subr.mxu0 %v945
    %1260 = vmatpush1.msra.mxu0 %v944
    %1261 = vmatprep.subr.mxu0 %v949
    %1262 = vmatpush1.msra.mxu0 %v948
    %1263 = vmatprep.subr.mxu0 %v953
    %1264 = vmatpush1.msra.mxu0 %v952
    %1265 = vmatprep.subr.mxu0 %v957
    %1266 = vmatpush1.msra.mxu0 %v956
    %1267 = vmatprep.subr.mxu0 %v961
    %1268 = vmatpush1.msra.mxu0 %v960
    %1269 = vmatprep.subr.mxu0 %v965
    %1270 = vmatpush1.msra.mxu0 %v964
    %1271 = vmatprep.subr.mxu0 %v969
    %1272 = vmatpush1.msra.mxu0 %v968
    %1273 = vmatprep.subr.mxu0 %v973
    %1274 = vmatpush1.msra.mxu0 %v972
    %1275 = vmatprep.subr.mxu0 %v977
    %1276 = vmatpush1.msra.mxu0 %v976
    %1277 = vmatprep.subr.mxu0 %v981
    %1278 = vmatpush1.msra.mxu0 %v980
    %1279 = vmatprep.subr.mxu0 %v985
    %1280 = vmatpush1.msra.mxu0 %v984
    %1281 = vmatprep.subr.mxu0 %v989
    %1282 = vmatpush1.msra.mxu0 %v988
    %1283 = vmatprep.subr.mxu0 %v993
    %1284 = vmatpush1.msra.mxu0 %v992
    %1285 = vmatprep.subr.mxu0 %v997
    %1286 = vmatpush1.msra.mxu0 %v996
    %1287 = vmatprep.subr.mxu0 %v1001
    %1288 = vmatpush1.msra.mxu0 %v1000
    %1289 = vmatprep.subr.mxu0 %v1005
    %1290 = vmatpush1.msra.mxu0 %v1004
    %1291 = vmatprep.subr.mxu0 %v1009
    %1292 = vmatpush1.msra.mxu0 %v1008
    %1293 = vmatprep.subr.mxu0 %v1013
    %1294 = vmatpush1.msra.mxu0 %v1012
    %1295 = vmatprep.subr.mxu0 %v1017
    %1296 = vmatpush1.msra.mxu0 %v1016
    %1297 = vmatprep.subr.mxu0 %v1021
    %1298 = vmatpush1.msra.mxu0 %v1020
    %1299 = vmatprep.mubr.f32.mxu0 %v762
    %1300 = vmatmul.mubr.f32.gmra.mrb[0].mxu0 %v760
    %v1301 = vpop.f32.mrb[0].mxu0
    %v1302 = vadd.f32 %v1231, %v1301
    %v1303 = vpop.f32.mrb[0].mxu0
    %v1304 = vadd.f32 %v1233, %v1303
    %1305 = vdwg.mxu0
    %vm1306 = vcmask 1041408
    %v1307 = vsel %vm1306, %v1160, 0.0
    %v1308 = vrot.slane %v1307, 4
    %v1309 = vadd.f32 %v1307, %v1308
    %v1310 = vrot.slane %v1309, 2
    %v1311 = vadd.f32 %v1309, %v1310
    %v1312 = vrot.slane %v1311, 1
    %v1313 = vadd.f32 %v1311, %v1312
    %v1314 = vsel %vm1306, %v1162, 0.0
    %v1315 = vrot.slane %v1314, 4
    %v1316 = vadd.f32 %v1314, %v1315
    %v1317 = vrot.slane %v1316, 2
    %v1318 = vadd.f32 %v1316, %v1317
    %v1319 = vrot.slane %v1318, 1
    %v1320 = vadd.f32 %v1318, %v1319
    %v1321 = vsel %vm1306, %v1302, 0.0
    %v1322 = vrot.slane %v1321, 4
    %v1323 = vadd.f32 %v1321, %v1322
    %v1324 = vrot.slane %v1323, 2
    %v1325 = vadd.f32 %v1323, %v1324
    %v1326 = vrot.slane %v1325, 1
    %v1327 = vadd.f32 %v1325, %v1326
    %v1328 = vsel %vm1306, %v1304, 0.0
    %v1329 = vrot.slane %v1328, 4
    %v1330 = vadd.f32 %v1328, %v1329
    %v1331 = vrot.slane %v1330, 2
    %v1332 = vadd.f32 %v1330, %v1331
    %v1333 = vrot.slane %v1332, 1
    %v1334 = vadd.f32 %v1332, %v1333
    %v1335 = vmul.f32 %v1313, 0.0078125
    %v1336 = vmul.f32 %v1320, 0.0078125
    %v1337 = vmul.f32 %v1327, 0.0078125
    %v1338 = vmul.f32 %v1334, 0.0078125
    %v1339 = vsub.f32 %v719, %v1335
    %v1340 = vsub.f32 %v721, %v1336
    %v1341 = vsub.f32 %v760, %v1337
    %v1342 = vsub.f32 %v762, %v1338
    %v1343 = vmul.f32 %v1339, %v1339
    %v1344 = vmul.f32 %v1340, %v1340
    %v1345 = vmul.f32 %v1341, %v1341
    %v1346 = vmul.f32 %v1342, %v1342
    %1347 = vmatprep.subr.mxu0 %v767
    %1348 = vmatpush1.msra.mxu0 %v766
    %1349 = vmatprep.subr.mxu0 %v771
    %1350 = vmatpush1.msra.mxu0 %v770
    %1351 = vmatprep.subr.mxu0 %v775
    %1352 = vmatpush1.msra.mxu0 %v774
    %1353 = vmatprep.subr.mxu0 %v779
    %1354 = vmatpush1.msra.mxu0 %v778
    %1355 = vmatprep.subr.mxu0 %v783
    %1356 = vmatpush1.msra.mxu0 %v782
    %1357 = vmatprep.subr.mxu0 %v787
    %1358 = vmatpush1.msra.mxu0 %v786
    %1359 = vmatprep.subr.mxu0 %v791
    %1360 = vmatpush1.msra.mxu0 %v790
    %1361 = vmatprep.subr.mxu0 %v795
    %1362 = vmatpush1.msra.mxu0 %v794
    %1363 = vmatprep.subr.mxu0 %v799
    %1364 = vmatpush1.msra.mxu0 %v798
    %1365 = vmatprep.subr.mxu0 %v803
    %1366 = vmatpush1.msra.mxu0 %v802
    %1367 = vmatprep.subr.mxu0 %v807
    %1368 = vmatpush1.msra.mxu0 %v806
    %1369 = vmatprep.subr.mxu0 %v811
    %1370 = vmatpush1.msra.mxu0 %v810
    %1371 = vmatprep.subr.mxu0 %v815
    %1372 = vmatpush1.msra.mxu0 %v814
    %1373 = vmatprep.subr.mxu0 %v819
    %1374 = vmatpush1.msra.mxu0 %v818
    %1375 = vmatprep.subr.mxu0 %v823
    %1376 = vmatpush1.msra.mxu0 %v822
    %1377 = vmatprep.subr.mxu0 %v827
    %1378 = vmatpush1.msra.mxu0 %v826
    %1379 = vmatprep.subr.mxu0 %v831
    %1380 = vmatpush1.msra.mxu0 %v830
    %1381 = vmatprep.subr.mxu0 %v835
    %1382 = vmatpush1.msra.mxu0 %v834
    %1383 = vmatprep.subr.mxu0 %v839
    %1384 = vmatpush1.msra.mxu0 %v838
    %1385 = vmatprep.subr.mxu0 %v843
    %1386 = vmatpush1.msra.mxu0 %v842
    %1387 = vmatprep.subr.mxu0 %v847
    %1388 = vmatpush1.msra.mxu0 %v846
    %1389 = vmatprep.subr.mxu0 %v851
    %1390 = vmatpush1.msra.mxu0 %v850
    %1391 = vmatprep.subr.mxu0 %v855
    %1392 = vmatpush1.msra.mxu0 %v854
    %1393 = vmatprep.subr.mxu0 %v859
    %1394 = vmatpush1.msra.mxu0 %v858
    %1395 = vmatprep.subr.mxu0 %v863
    %1396 = vmatpush1.msra.mxu0 %v862
    %1397 = vmatprep.subr.mxu0 %v867
    %1398 = vmatpush1.msra.mxu0 %v866
    %1399 = vmatprep.subr.mxu0 %v871
    %1400 = vmatpush1.msra.mxu0 %v870
    %1401 = vmatprep.subr.mxu0 %v875
    %1402 = vmatpush1.msra.mxu0 %v874
    %1403 = vmatprep.subr.mxu0 %v879
    %1404 = vmatpush1.msra.mxu0 %v878
    %1405 = vmatprep.subr.mxu0 %v883
    %1406 = vmatpush1.msra.mxu0 %v882
    %1407 = vmatprep.subr.mxu0 %v887
    %1408 = vmatpush1.msra.mxu0 %v886
    %1409 = vmatprep.subr.mxu0 %v891
    %1410 = vmatpush1.msra.mxu0 %v890
    %1411 = vmatprep.mubr.f32.mxu0 %v1344
    %1412 = vmatmul.mubr.f32.gmra.mrb[0].mxu0 %v1343
    %v1413 = vpop.f32.mrb[0].mxu0
    %v1414 = vadd.f32 0.0, %v1413
    %v1415 = vpop.f32.mrb[0].mxu0
    %v1416 = vadd.f32 0.0, %v1415
    %1417 = vdwg.mxu0
    %1418 = vmatprep.subr.mxu0 %v895
    %1419 = vmatpush1.msra.mxu0 %v894
    %1420 = vmatprep.subr.mxu0 %v899
    %1421 = vmatpush1.msra.mxu0 %v898
    %1422 = vmatprep.subr.mxu0 %v903
    %1423 = vmatpush1.msra.mxu0 %v902
    %1424 = vmatprep.subr.mxu0 %v907
    %1425 = vmatpush1.msra.mxu0 %v906
    %1426 = vmatprep.subr.mxu0 %v911
    %1427 = vmatpush1.msra.mxu0 %v910
    %1428 = vmatprep.subr.mxu0 %v915
    %1429 = vmatpush1.msra.mxu0 %v914
    %1430 = vmatprep.subr.mxu0 %v919
    %1431 = vmatpush1.msra.mxu0 %v918
    %1432 = vmatprep.subr.mxu0 %v923
    %1433 = vmatpush1.msra.mxu0 %v922
    %1434 = vmatprep.subr.mxu0 %v927
    %1435 = vmatpush1.msra.mxu0 %v926
    %1436 = vmatprep.subr.mxu0 %v931
    %1437 = vmatpush1.msra.mxu0 %v930
    %1438 = vmatprep.subr.mxu0 %v935
    %1439 = vmatpush1.msra.mxu0 %v934
    %1440 = vmatprep.subr.mxu0 %v939
    %1441 = vmatpush1.msra.mxu0 %v938
    %1442 = vmatprep.subr.mxu0 %v943
    %1443 = vmatpush1.msra.mxu0 %v942
    %1444 = vmatprep.subr.mxu0 %v947
    %1445 = vmatpush1.msra.mxu0 %v946
    %1446 = vmatprep.subr.mxu0 %v951
    %1447 = vmatpush1.msra.mxu0 %v950
    %1448 = vmatprep.subr.mxu0 %v955
    %1449 = vmatpush1.msra.mxu0 %v954
    %1450 = vmatprep.subr.mxu0 %v959
    %1451 = vmatpush1.msra.mxu0 %v958
    %1452 = vmatprep.subr.mxu0 %v963
    %1453 = vmatpush1.msra.mxu0 %v962
    %1454 = vmatprep.subr.mxu0 %v967
    %1455 = vmatpush1.msra.mxu0 %v966
    %1456 = vmatprep.subr.mxu0 %v971
    %1457 = vmatpush1.msra.mxu0 %v970
    %1458 = vmatprep.subr.mxu0 %v975
    %1459 = vmatpush1.msra.mxu0 %v974
    %1460 = vmatprep.subr.mxu0 %v979
    %1461 = vmatpush1.msra.mxu0 %v978
    %1462 = vmatprep.subr.mxu0 %v983
    %1463 = vmatpush1.msra.mxu0 %v982
    %1464 = vmatprep.subr.mxu0 %v987
    %1465 = vmatpush1.msra.mxu0 %v986
    %1466 = vmatprep.subr.mxu0 %v991
    %1467 = vmatpush1.msra.mxu0 %v990
    %1468 = vmatprep.subr.mxu0 %v995
    %1469 = vmatpush1.msra.mxu0 %v994
    %1470 = vmatprep.subr.mxu0 %v999
    %1471 = vmatpush1.msra.mxu0 %v998
    %1472 = vmatprep.subr.mxu0 %v1003
    %1473 = vmatpush1.msra.mxu0 %v1002
    %1474 = vmatprep.subr.mxu0 %v1007
    %1475 = vmatpush1.msra.mxu0 %v1006
    %1476 = vmatprep.subr.mxu0 %v1011
    %1477 = vmatpush1.msra.mxu0 %v1010
    %1478 = vmatprep.subr.mxu0 %v1015
    %1479 = vmatpush1.msra.mxu0 %v1014
    %1480 = vmatprep.subr.mxu0 %v1019
    %1481 = vmatpush1.msra.mxu0 %v1018
    %1482 = vmatprep.mubr.f32.mxu0 %v1346
    %1483 = vmatmul.mubr.f32.gmra.mrb[0].mxu0 %v1345
    %v1484 = vpop.f32.mrb[0].mxu0
    %v1485 = vadd.f32 %v1414, %v1484
    %v1486 = vpop.f32.mrb[0].mxu0
    %v1487 = vadd.f32 %v1416, %v1486
    %1488 = vdwg.mxu0
    %1489 = vmatprep.subr.mxu0 %v769
    %1490 = vmatpush1.msra.mxu0 %v768
    %1491 = vmatprep.subr.mxu0 %v773
    %1492 = vmatpush1.msra.mxu0 %v772
    %1493 = vmatprep.subr.mxu0 %v777
    %1494 = vmatpush1.msra.mxu0 %v776
    %1495 = vmatprep.subr.mxu0 %v781
    %1496 = vmatpush1.msra.mxu0 %v780
    %1497 = vmatprep.subr.mxu0 %v785
    %1498 = vmatpush1.msra.mxu0 %v784
    %1499 = vmatprep.subr.mxu0 %v789
    %1500 = vmatpush1.msra.mxu0 %v788
    %1501 = vmatprep.subr.mxu0 %v793
    %1502 = vmatpush1.msra.mxu0 %v792
    %1503 = vmatprep.subr.mxu0 %v797
    %1504 = vmatpush1.msra.mxu0 %v796
    %1505 = vmatprep.subr.mxu0 %v801
    %1506 = vmatpush1.msra.mxu0 %v800
    %1507 = vmatprep.subr.mxu0 %v805
    %1508 = vmatpush1.msra.mxu0 %v804
    %1509 = vmatprep.subr.mxu0 %v809
    %1510 = vmatpush1.msra.mxu0 %v808
    %1511 = vmatprep.subr.mxu0 %v813
    %1512 = vmatpush1.msra.mxu0 %v812
    %1513 = vmatprep.subr.mxu0 %v817
    %1514 = vmatpush1.msra.mxu0 %v816
    %1515 = vmatprep.subr.mxu0 %v821
    %1516 = vmatpush1.msra.mxu0 %v820
    %1517 = vmatprep.subr.mxu0 %v825
    %1518 = vmatpush1.msra.mxu0 %v824
    %1519 = vmatprep.subr.mxu0 %v829
    %1520 = vmatpush1.msra.mxu0 %v828
    %1521 = vmatprep.subr.mxu0 %v833
    %1522 = vmatpush1.msra.mxu0 %v832
    %1523 = vmatprep.subr.mxu0 %v837
    %1524 = vmatpush1.msra.mxu0 %v836
    %1525 = vmatprep.subr.mxu0 %v841
    %1526 = vmatpush1.msra.mxu0 %v840
    %1527 = vmatprep.subr.mxu0 %v845
    %1528 = vmatpush1.msra.mxu0 %v844
    %1529 = vmatprep.subr.mxu0 %v849
    %1530 = vmatpush1.msra.mxu0 %v848
    %1531 = vmatprep.subr.mxu0 %v853
    %1532 = vmatpush1.msra.mxu0 %v852
    %1533 = vmatprep.subr.mxu0 %v857
    %1534 = vmatpush1.msra.mxu0 %v856
    %1535 = vmatprep.subr.mxu0 %v861
    %1536 = vmatpush1.msra.mxu0 %v860
    %1537 = vmatprep.subr.mxu0 %v865
    %1538 = vmatpush1.msra.mxu0 %v864
    %1539 = vmatprep.subr.mxu0 %v869
    %1540 = vmatpush1.msra.mxu0 %v868
    %1541 = vmatprep.subr.mxu0 %v873
    %1542 = vmatpush1.msra.mxu0 %v872
    %1543 = vmatprep.subr.mxu0 %v877
    %1544 = vmatpush1.msra.mxu0 %v876
    %1545 = vmatprep.subr.mxu0 %v881
    %1546 = vmatpush1.msra.mxu0 %v880
    %1547 = vmatprep.subr.mxu0 %v885
    %1548 = vmatpush1.msra.mxu0 %v884
    %1549 = vmatprep.subr.mxu0 %v889
    %1550 = vmatpush1.msra.mxu0 %v888
    %1551 = vmatprep.subr.mxu0 %v893
    %1552 = vmatpush1.msra.mxu0 %v892
    %1553 = vmatprep.mubr.f32.mxu0 %v1344
    %1554 = vmatmul.mubr.f32.gmra.mrb[0].mxu0 %v1343
    %v1555 = vpop.f32.mrb[0].mxu0
    %v1556 = vadd.f32 0.0, %v1555
    %v1557 = vpop.f32.mrb[0].mxu0
    %v1558 = vadd.f32 0.0, %v1557
    %1559 = vdwg.mxu0
    %1560 = vmatprep.subr.mxu0 %v897
    %1561 = vmatpush1.msra.mxu0 %v896
    %1562 = vmatprep.subr.mxu0 %v901
    %1563 = vmatpush1.msra.mxu0 %v900
    %1564 = vmatprep.subr.mxu0 %v905
    %1565 = vmatpush1.msra.mxu0 %v904
    %1566 = vmatprep.subr.mxu0 %v909
    %1567 = vmatpush1.msra.mxu0 %v908
    %1568 = vmatprep.subr.mxu0 %v913
    %1569 = vmatpush1.msra.mxu0 %v912
    %1570 = vmatprep.subr.mxu0 %v917
    %1571 = vmatpush1.msra.mxu0 %v916
    %1572 = vmatprep.subr.mxu0 %v921
    %1573 = vmatpush1.msra.mxu0 %v920
    %1574 = vmatprep.subr.mxu0 %v925
    %1575 = vmatpush1.msra.mxu0 %v924
    %1576 = vmatprep.subr.mxu0 %v929
    %1577 = vmatpush1.msra.mxu0 %v928
    %1578 = vmatprep.subr.mxu0 %v933
    %1579 = vmatpush1.msra.mxu0 %v932
    %1580 = vmatprep.subr.mxu0 %v937
    %1581 = vmatpush1.msra.mxu0 %v936
    %1582 = vmatprep.subr.mxu0 %v941
    %1583 = vmatpush1.msra.mxu0 %v940
    %1584 = vmatprep.subr.mxu0 %v945
    %1585 = vmatpush1.msra.mxu0 %v944
    %1586 = vmatprep.subr.mxu0 %v949
    %1587 = vmatpush1.msra.mxu0 %v948
    %1588 = vmatprep.subr.mxu0 %v953
    %1589 = vmatpush1.msra.mxu0 %v952
    %1590 = vmatprep.subr.mxu0 %v957
    %1591 = vmatpush1.msra.mxu0 %v956
    %1592 = vmatprep.subr.mxu0 %v961
    %1593 = vmatpush1.msra.mxu0 %v960
    %1594 = vmatprep.subr.mxu0 %v965
    %1595 = vmatpush1.msra.mxu0 %v964
    %1596 = vmatprep.subr.mxu0 %v969
    %1597 = vmatpush1.msra.mxu0 %v968
    %1598 = vmatprep.subr.mxu0 %v973
    %1599 = vmatpush1.msra.mxu0 %v972
    %1600 = vmatprep.subr.mxu0 %v977
    %1601 = vmatpush1.msra.mxu0 %v976
    %1602 = vmatprep.subr.mxu0 %v981
    %1603 = vmatpush1.msra.mxu0 %v980
    %1604 = vmatprep.subr.mxu0 %v985
    %1605 = vmatpush1.msra.mxu0 %v984
    %1606 = vmatprep.subr.mxu0 %v989
    %1607 = vmatpush1.msra.mxu0 %v988
    %1608 = vmatprep.subr.mxu0 %v993
    %1609 = vmatpush1.msra.mxu0 %v992
    %1610 = vmatprep.subr.mxu0 %v997
    %1611 = vmatpush1.msra.mxu0 %v996
    %1612 = vmatprep.subr.mxu0 %v1001
    %1613 = vmatpush1.msra.mxu0 %v1000
    %1614 = vmatprep.subr.mxu0 %v1005
    %1615 = vmatpush1.msra.mxu0 %v1004
    %1616 = vmatprep.subr.mxu0 %v1009
    %1617 = vmatpush1.msra.mxu0 %v1008
    %1618 = vmatprep.subr.mxu0 %v1013
    %1619 = vmatpush1.msra.mxu0 %v1012
    %1620 = vmatprep.subr.mxu0 %v1017
    %1621 = vmatpush1.msra.mxu0 %v1016
    %1622 = vmatprep.subr.mxu0 %v1021
    %1623 = vmatpush1.msra.mxu0 %v1020
    %1624 = vmatprep.mubr.f32.mxu0 %v1346
    %1625 = vmatmul.mubr.f32.gmra.mrb[0].mxu0 %v1345
    %v1626 = vpop.f32.mrb[0].mxu0
    %v1627 = vadd.f32 %v1556, %v1626
    %v1628 = vpop.f32.mrb[0].mxu0
    %v1629 = vadd.f32 %v1558, %v1628
    %1630 = vdwg.mxu0
    %v1631 = vsel %vm1306, %v1485, 0.0
    %v1632 = vrot.slane %v1631, 4
    %v1633 = vadd.f32 %v1631, %v1632
    %v1634 = vrot.slane %v1633, 2
    %v1635 = vadd.f32 %v1633, %v1634
    %v1636 = vrot.slane %v1635, 1
    %v1637 = vadd.f32 %v1635, %v1636
    %v1638 = vsel %vm1306, %v1487, 0.0
    %v1639 = vrot.slane %v1638, 4
    %v1640 = vadd.f32 %v1638, %v1639
    %v1641 = vrot.slane %v1640, 2
    %v1642 = vadd.f32 %v1640, %v1641
    %v1643 = vrot.slane %v1642, 1
    %v1644 = vadd.f32 %v1642, %v1643
    %v1645 = vsel %vm1306, %v1627, 0.0
    %v1646 = vrot.slane %v1645, 4
    %v1647 = vadd.f32 %v1645, %v1646
    %v1648 = vrot.slane %v1647, 2
    %v1649 = vadd.f32 %v1647, %v1648
    %v1650 = vrot.slane %v1649, 1
    %v1651 = vadd.f32 %v1649, %v1650
    %v1652 = vsel %vm1306, %v1629, 0.0
    %v1653 = vrot.slane %v1652, 4
    %v1654 = vadd.f32 %v1652, %v1653
    %v1655 = vrot.slane %v1654, 2
    %v1656 = vadd.f32 %v1654, %v1655
    %v1657 = vrot.slane %v1656, 1
    %v1658 = vadd.f32 %v1656, %v1657
    %v1659 = vmul.f32 %v1637, 0.0078125
    %v1660 = vmul.f32 %v1644, 0.0078125
    %v1661 = vmul.f32 %v1651, 0.0078125
    %v1662 = vmul.f32 %v1658, 0.0078125
    %v1663 = vld [vmem:[#allocation9] sm:$0xf]
    %v1664 = vadd.f32 %v1659, 1e-05
    %v1665 = vadd.f32 %v1660, 1e-05
    %v1666 = vadd.f32 %v1661, 1e-05
    %v1667 = vadd.f32 %v1662, 1e-05
    %v1668 = vrsqrt.pop %v1664
    %v1669 = vrsqrt.pop %v1665
    %v1670 = vrsqrt.pop %v1666
    %v1671 = vrsqrt.pop %v1667
    %v1676 = vcombine.low %v1668, %v1669
    %v1677 = vcombine.low %v1670, %v1671
    %v1679 = vunpack.c.l.s4 1966171168
    %v1680 = vunpack.c.0.s8 %v1679
    %v1681 = vlaneseq
    %v1682 = vshrl.u32 %v1681, 7
    %v1683 = vsub.s32 %v1680, %v1682
    %v1684 = vrot.slane %v1676, %v1683
    %v1686 = vunpack.c.l.s4 1966171168
    %v1687 = vunpack.c.0.s8 %v1686
    %v1688 = vlaneseq
    %v1689 = vshrl.u32 %v1688, 7
    %v1690 = vsub.s32 %v1687, %v1689
    %v1691 = vrot.slane %v1677, %v1690
    %v1692 = vcombine.low %v1684, %v1691
    %v1694 = vunpack.c.l.s4 1966171168
    %v1695 = vunpack.c.0.s8 %v1694
    %v1696 = vlaneseq
    %v1697 = vshrl.u32 %v1696, 7
    %v1698 = vsub.s32 %v1695, %v1697
    %v1699 = vrot.slane %v1692, %v1698
    %v1701 = vmul.f32 %v1663, %v1699
    %v1703 = vlaneseq
    %v1704 = vshrl.u32 %v1703, 7
    %v1705 = vsub.s32 0, %v1704
    %v1706 = vrot.slane %v1701, %v1705
    %v1707 = vlaneseq
    %v1708 = vshrl.u32 %v1707, 7
    %v1709 = vsub.s32 1, %v1708
    %v1710 = vrot.slane %v1701, %v1709
    %v1711 = vlaneseq
    %v1712 = vshrl.u32 %v1711, 7
    %v1713 = vsub.s32 2, %v1712
    %v1714 = vrot.slane %v1701, %v1713
    %v1715 = vlaneseq
    %v1716 = vshrl.u32 %v1715, 7
    %v1717 = vsub.s32 3, %v1716
    %v1718 = vrot.slane %v1701, %v1717
    %v1723 = vmul.f32 %v1339, %v1706
    %v1724 = vmul.f32 %v1340, %v1710
    %v1725 = vmul.f32 %v1341, %v1714
    %v1726 = vmul.f32 %v1342, %v1718
    %v1727 = vld [vmem:[#allocation10] sm:$0xf]
    %v1729 = vlaneseq
    %v1730 = vshrl.u32 %v1729, 7
    %v1731 = vsub.s32 0, %v1730
    %v1732 = vrot.slane %v1727, %v1731
    %v1733 = vlaneseq
    %v1734 = vshrl.u32 %v1733, 7
    %v1735 = vsub.s32 1, %v1734
    %v1736 = vrot.slane %v1727, %v1735
    %v1737 = vlaneseq
    %v1738 = vshrl.u32 %v1737, 7
    %v1739 = vsub.s32 2, %v1738
    %v1740 = vrot.slane %v1727, %v1739
    %v1741 = vlaneseq
    %v1742 = vshrl.u32 %v1741, 7
    %v1743 = vsub.s32 3, %v1742
    %v1744 = vrot.slane %v1727, %v1743
    %v1749 = vadd.f32 %v1723, %v1732
    %v1750 = vadd.f32 %v1724, %v1736
    %v1751 = vadd.f32 %v1725, %v1740
    %v1752 = vadd.f32 %v1726, %v1744
    %vm1753 = vcmp.ge.f32.partialorder %v1749, 0.0
    %vm1754 = vcmp.ge.f32.partialorder %v1750, 0.0
    %vm1755 = vcmp.ge.f32.partialorder %v1751, 0.0
    %vm1756 = vcmp.ge.f32.partialorder %v1752, 0.0
    %v1757 = vmul.f32 %v1749, 0.2
    %v1758 = vmul.f32 %v1750, 0.2
    %v1759 = vmul.f32 %v1751, 0.2
    %v1760 = vmul.f32 %v1752, 0.2
    %v1761 = vsel %vm1753, %v1749, %v1757
    %v1762 = vsel %vm1754, %v1750, %v1758
    %v1763 = vsel %vm1755, %v1751, %v1759
    %v1764 = vsel %vm1756, %v1752, %v1760
    %v1765 = vpack.c.bf16 %v1761, %v1761
    %v1766 = vpack.c.bf16 %v1762, %v1762
    %v1767 = vpack.c.bf16 %v1763, %v1763
    %v1768 = vpack.c.bf16 %v1764, %v1764
    %v1769 = vld [vmem:[#allocation12] sm:$0xff]
    %v1770 = vld [vmem:[#allocation12 + $0x8] sm:$0xff]
    %v1771 = vld [vmem:[#allocation12 + $0x10] sm:$0xff]
    %v1772 = vld [vmem:[#allocation12 + $0x18] sm:$0xff]
    %v1773 = vld [vmem:[#allocation12 + $0x20] sm:$0xff]
    %v1774 = vld [vmem:[#allocation12 + $0x28] sm:$0xff]
    %v1775 = vld [vmem:[#allocation12 + $0x30] sm:$0xff]
    %v1776 = vld [vmem:[#allocation12 + $0x38] sm:$0xff]
    %v1777 = vld [vmem:[#allocation12 + $0x40] sm:$0xff]
    %v1778 = vld [vmem:[#allocation12 + $0x48] sm:$0xff]
    %v1779 = vld [vmem:[#allocation12 + $0x50] sm:$0xff]
    %v1780 = vld [vmem:[#allocation12 + $0x58] sm:$0xff]
    %v1781 = vld [vmem:[#allocation12 + $0x60] sm:$0xff]
    %v1782 = vld [vmem:[#allocation12 + $0x68] sm:$0xff]
    %v1783 = vld [vmem:[#allocation12 + $0x70] sm:$0xff]
    %v1784 = vld [vmem:[#allocation12 + $0x78] sm:$0xff]
    %v1785 = vld [vmem:[#allocation12 + $0x80] sm:$0xff]
    %v1786 = vld [vmem:[#allocation12 + $0x88] sm:$0xff]
    %v1787 = vld [vmem:[#allocation12 + $0x90] sm:$0xff]
    %v1788 = vld [vmem:[#allocation12 + $0x98] sm:$0xff]
    %v1789 = vld [vmem:[#allocation12 + $0xa0] sm:$0xff]
    %v1790 = vld [vmem:[#allocation12 + $0xa8] sm:$0xff]
    %v1791 = vld [vmem:[#allocation12 + $0xb0] sm:$0xff]
    %v1792 = vld [vmem:[#allocation12 + $0xb8] sm:$0xff]
    %v1793 = vld [vmem:[#allocation12 + $0xc0] sm:$0xff]
    %v1794 = vld [vmem:[#allocation12 + $0xc8] sm:$0xff]
    %v1795 = vld [vmem:[#allocation12 + $0xd0] sm:$0xff]
    %v1796 = vld [vmem:[#allocation12 + $0xd8] sm:$0xff]
    %v1797 = vld [vmem:[#allocation12 + $0xe0] sm:$0xff]
    %v1798 = vld [vmem:[#allocation12 + $0xe8] sm:$0xff]
    %v1799 = vld [vmem:[#allocation12 + $0xf0] sm:$0xff]
    %v1800 = vld [vmem:[#allocation12 + $0xf8] sm:$0xff]
    %v1801 = vld [vmem:[#allocation12 + $0x100] sm:$0xff]
    %v1802 = vld [vmem:[#allocation12 + $0x108] sm:$0xff]
    %v1803 = vld [vmem:[#allocation12 + $0x110] sm:$0xff]
    %v1804 = vld [vmem:[#allocation12 + $0x118] sm:$0xff]
    %v1805 = vld [vmem:[#allocation12 + $0x120] sm:$0xff]
    %v1806 = vld [vmem:[#allocation12 + $0x128] sm:$0xff]
    %v1807 = vld [vmem:[#allocation12 + $0x130] sm:$0xff]
    %v1808 = vld [vmem:[#allocation12 + $0x138] sm:$0xff]
    %v1809 = vld [vmem:[#allocation12 + $0x140] sm:$0xff]
    %v1810 = vld [vmem:[#allocation12 + $0x148] sm:$0xff]
    %v1811 = vld [vmem:[#allocation12 + $0x150] sm:$0xff]
    %v1812 = vld [vmem:[#allocation12 + $0x158] sm:$0xff]
    %v1813 = vld [vmem:[#allocation12 + $0x160] sm:$0xff]
    %v1814 = vld [vmem:[#allocation12 + $0x168] sm:$0xff]
    %v1815 = vld [vmem:[#allocation12 + $0x170] sm:$0xff]
    %v1816 = vld [vmem:[#allocation12 + $0x178] sm:$0xff]
    %v1817 = vld [vmem:[#allocation12 + $0x180] sm:$0xff]
    %v1818 = vld [vmem:[#allocation12 + $0x188] sm:$0xff]
    %v1819 = vld [vmem:[#allocation12 + $0x190] sm:$0xff]
    %v1820 = vld [vmem:[#allocation12 + $0x198] sm:$0xff]
    %v1821 = vld [vmem:[#allocation12 + $0x1a0] sm:$0xff]
    %v1822 = vld [vmem:[#allocation12 + $0x1a8] sm:$0xff]
    %v1823 = vld [vmem:[#allocation12 + $0x1b0] sm:$0xff]
    %v1824 = vld [vmem:[#allocation12 + $0x1b8] sm:$0xff]
    %v1825 = vld [vmem:[#allocation12 + $0x1c0] sm:$0xff]
    %v1826 = vld [vmem:[#allocation12 + $0x1c8] sm:$0xff]
    %v1827 = vld [vmem:[#allocation12 + $0x1d0] sm:$0xff]
    %v1828 = vld [vmem:[#allocation12 + $0x1d8] sm:$0xff]
    %v1829 = vld [vmem:[#allocation12 + $0x1e0] sm:$0xff]
    %v1830 = vld [vmem:[#allocation12 + $0x1e8] sm:$0xff]
    %v1831 = vld [vmem:[#allocation12 + $0x1f0] sm:$0xff]
    %v1832 = vld [vmem:[#allocation12 + $0x1f8] sm:$0xff]
    %v1833 = vld [vmem:[#allocation12 + $0x200] sm:$0xff]
    %v1834 = vld [vmem:[#allocation12 + $0x208] sm:$0xff]
    %v1835 = vld [vmem:[#allocation12 + $0x210] sm:$0xff]
    %v1836 = vld [vmem:[#allocation12 + $0x218] sm:$0xff]
    %v1837 = vld [vmem:[#allocation12 + $0x220] sm:$0xff]
    %v1838 = vld [vmem:[#allocation12 + $0x228] sm:$0xff]
    %v1839 = vld [vmem:[#allocation12 + $0x230] sm:$0xff]
    %v1840 = vld [vmem:[#allocation12 + $0x238] sm:$0xff]
    %v1841 = vld [vmem:[#allocation12 + $0x240] sm:$0xff]
    %v1842 = vld [vmem:[#allocation12 + $0x248] sm:$0xff]
    %v1843 = vld [vmem:[#allocation12 + $0x250] sm:$0xff]
    %v1844 = vld [vmem:[#allocation12 + $0x258] sm:$0xff]
    %v1845 = vld [vmem:[#allocation12 + $0x260] sm:$0xff]
    %v1846 = vld [vmem:[#allocation12 + $0x268] sm:$0xff]
    %v1847 = vld [vmem:[#allocation12 + $0x270] sm:$0xff]
    %v1848 = vld [vmem:[#allocation12 + $0x278] sm:$0xff]
    %v1849 = vld [vmem:[#allocation12 + $0x280] sm:$0xff]
    %v1850 = vld [vmem:[#allocation12 + $0x288] sm:$0xff]
    %v1851 = vld [vmem:[#allocation12 + $0x290] sm:$0xff]
    %v1852 = vld [vmem:[#allocation12 + $0x298] sm:$0xff]
    %v1853 = vld [vmem:[#allocation12 + $0x2a0] sm:$0xff]
    %v1854 = vld [vmem:[#allocation12 + $0x2a8] sm:$0xff]
    %v1855 = vld [vmem:[#allocation12 + $0x2b0] sm:$0xff]
    %v1856 = vld [vmem:[#allocation12 + $0x2b8] sm:$0xff]
    %v1857 = vld [vmem:[#allocation12 + $0x2c0] sm:$0xff]
    %v1858 = vld [vmem:[#allocation12 + $0x2c8] sm:$0xff]
    %v1859 = vld [vmem:[#allocation12 + $0x2d0] sm:$0xff]
    %v1860 = vld [vmem:[#allocation12 + $0x2d8] sm:$0xff]
    %v1861 = vld [vmem:[#allocation12 + $0x2e0] sm:$0xff]
    %v1862 = vld [vmem:[#allocation12 + $0x2e8] sm:$0xff]
    %v1863 = vld [vmem:[#allocation12 + $0x2f0] sm:$0xff]
    %v1864 = vld [vmem:[#allocation12 + $0x2f8] sm:$0xff]
    %v1865 = vld [vmem:[#allocation12 + $0x300] sm:$0xff]
    %v1866 = vld [vmem:[#allocation12 + $0x308] sm:$0xff]
    %v1867 = vld [vmem:[#allocation12 + $0x310] sm:$0xff]
    %v1868 = vld [vmem:[#allocation12 + $0x318] sm:$0xff]
    %v1869 = vld [vmem:[#allocation12 + $0x320] sm:$0xff]
    %v1870 = vld [vmem:[#allocation12 + $0x328] sm:$0xff]
    %v1871 = vld [vmem:[#allocation12 + $0x330] sm:$0xff]
    %v1872 = vld [vmem:[#allocation12 + $0x338] sm:$0xff]
    %v1873 = vld [vmem:[#allocation12 + $0x340] sm:$0xff]
    %v1874 = vld [vmem:[#allocation12 + $0x348] sm:$0xff]
    %v1875 = vld [vmem:[#allocation12 + $0x350] sm:$0xff]
    %v1876 = vld [vmem:[#allocation12 + $0x358] sm:$0xff]
    %v1877 = vld [vmem:[#allocation12 + $0x360] sm:$0xff]
    %v1878 = vld [vmem:[#allocation12 + $0x368] sm:$0xff]
    %v1879 = vld [vmem:[#allocation12 + $0x370] sm:$0xff]
    %v1880 = vld [vmem:[#allocation12 + $0x378] sm:$0xff]
    %v1881 = vld [vmem:[#allocation12 + $0x380] sm:$0xff]
    %v1882 = vld [vmem:[#allocation12 + $0x388] sm:$0xff]
    %v1883 = vld [vmem:[#allocation12 + $0x390] sm:$0xff]
    %v1884 = vld [vmem:[#allocation12 + $0x398] sm:$0xff]
    %v1885 = vld [vmem:[#allocation12 + $0x3a0] sm:$0xff]
    %v1886 = vld [vmem:[#allocation12 + $0x3a8] sm:$0xff]
    %v1887 = vld [vmem:[#allocation12 + $0x3b0] sm:$0xff]
    %v1888 = vld [vmem:[#allocation12 + $0x3b8] sm:$0xff]
    %v1889 = vld [vmem:[#allocation12 + $0x3c0] sm:$0xff]
    %v1890 = vld [vmem:[#allocation12 + $0x3c8] sm:$0xff]
    %v1891 = vld [vmem:[#allocation12 + $0x3d0] sm:$0xff]
    %v1892 = vld [vmem:[#allocation12 + $0x3d8] sm:$0xff]
    %v1893 = vld [vmem:[#allocation12 + $0x3e0] sm:$0xff]
    %v1894 = vld [vmem:[#allocation12 + $0x3e8] sm:$0xff]
    %v1895 = vld [vmem:[#allocation12 + $0x3f0] sm:$0xff]
    %v1896 = vld [vmem:[#allocation12 + $0x3f8] sm:$0xff]
    %v1897 = vld [vmem:[#allocation12 + $0x400] sm:$0xff]
    %v1898 = vld [vmem:[#allocation12 + $0x408] sm:$0xff]
    %v1899 = vld [vmem:[#allocation12 + $0x410] sm:$0xff]
    %v1900 = vld [vmem:[#allocation12 + $0x418] sm:$0xff]
    %v1901 = vld [vmem:[#allocation12 + $0x420] sm:$0xff]
    %v1902 = vld [vmem:[#allocation12 + $0x428] sm:$0xff]
    %v1903 = vld [vmem:[#allocation12 + $0x430] sm:$0xff]
    %v1904 = vld [vmem:[#allocation12 + $0x438] sm:$0xff]
    %v1905 = vld [vmem:[#allocation12 + $0x440] sm:$0xff]
    %v1906 = vld [vmem:[#allocation12 + $0x448] sm:$0xff]
    %v1907 = vld [vmem:[#allocation12 + $0x450] sm:$0xff]
    %v1908 = vld [vmem:[#allocation12 + $0x458] sm:$0xff]
    %v1909 = vld [vmem:[#allocation12 + $0x460] sm:$0xff]
    %v1910 = vld [vmem:[#allocation12 + $0x468] sm:$0xff]
    %v1911 = vld [vmem:[#allocation12 + $0x470] sm:$0xff]
    %v1912 = vld [vmem:[#allocation12 + $0x478] sm:$0xff]
    %v1913 = vld [vmem:[#allocation12 + $0x480] sm:$0xff]
    %v1914 = vld [vmem:[#allocation12 + $0x488] sm:$0xff]
    %v1915 = vld [vmem:[#allocation12 + $0x490] sm:$0xff]
    %v1916 = vld [vmem:[#allocation12 + $0x498] sm:$0xff]
    %v1917 = vld [vmem:[#allocation12 + $0x4a0] sm:$0xff]
    %v1918 = vld [vmem:[#allocation12 + $0x4a8] sm:$0xff]
    %v1919 = vld [vmem:[#allocation12 + $0x4b0] sm:$0xff]
    %v1920 = vld [vmem:[#allocation12 + $0x4b8] sm:$0xff]
    %v1921 = vld [vmem:[#allocation12 + $0x4c0] sm:$0xff]
    %v1922 = vld [vmem:[#allocation12 + $0x4c8] sm:$0xff]
    %v1923 = vld [vmem:[#allocation12 + $0x4d0] sm:$0xff]
    %v1924 = vld [vmem:[#allocation12 + $0x4d8] sm:$0xff]
    %v1925 = vld [vmem:[#allocation12 + $0x4e0] sm:$0xff]
    %v1926 = vld [vmem:[#allocation12 + $0x4e8] sm:$0xff]
    %v1927 = vld [vmem:[#allocation12 + $0x4f0] sm:$0xff]
    %v1928 = vld [vmem:[#allocation12 + $0x4f8] sm:$0xff]
    %v1929 = vld [vmem:[#allocation12 + $0x500] sm:$0xff]
    %v1930 = vld [vmem:[#allocation12 + $0x508] sm:$0xff]
    %v1931 = vld [vmem:[#allocation12 + $0x510] sm:$0xff]
    %v1932 = vld [vmem:[#allocation12 + $0x518] sm:$0xff]
    %v1933 = vld [vmem:[#allocation12 + $0x520] sm:$0xff]
    %v1934 = vld [vmem:[#allocation12 + $0x528] sm:$0xff]
    %v1935 = vld [vmem:[#allocation12 + $0x530] sm:$0xff]
    %v1936 = vld [vmem:[#allocation12 + $0x538] sm:$0xff]
    %v1937 = vld [vmem:[#allocation12 + $0x540] sm:$0xff]
    %v1938 = vld [vmem:[#allocation12 + $0x548] sm:$0xff]
    %v1939 = vld [vmem:[#allocation12 + $0x550] sm:$0xff]
    %v1940 = vld [vmem:[#allocation12 + $0x558] sm:$0xff]
    %v1941 = vld [vmem:[#allocation12 + $0x560] sm:$0xff]
    %v1942 = vld [vmem:[#allocation12 + $0x568] sm:$0xff]
    %v1943 = vld [vmem:[#allocation12 + $0x570] sm:$0xff]
    %v1944 = vld [vmem:[#allocation12 + $0x578] sm:$0xff]
    %v1945 = vld [vmem:[#allocation12 + $0x580] sm:$0xff]
    %v1946 = vld [vmem:[#allocation12 + $0x588] sm:$0xff]
    %v1947 = vld [vmem:[#allocation12 + $0x590] sm:$0xff]
    %v1948 = vld [vmem:[#allocation12 + $0x598] sm:$0xff]
    %v1949 = vld [vmem:[#allocation12 + $0x5a0] sm:$0xff]
    %v1950 = vld [vmem:[#allocation12 + $0x5a8] sm:$0xff]
    %v1951 = vld [vmem:[#allocation12 + $0x5b0] sm:$0xff]
    %v1952 = vld [vmem:[#allocation12 + $0x5b8] sm:$0xff]
    %v1953 = vld [vmem:[#allocation12 + $0x5c0] sm:$0xff]
    %v1954 = vld [vmem:[#allocation12 + $0x5c8] sm:$0xff]
    %v1955 = vld [vmem:[#allocation12 + $0x5d0] sm:$0xff]
    %v1956 = vld [vmem:[#allocation12 + $0x5d8] sm:$0xff]
    %v1957 = vld [vmem:[#allocation12 + $0x5e0] sm:$0xff]
    %v1958 = vld [vmem:[#allocation12 + $0x5e8] sm:$0xff]
    %v1959 = vld [vmem:[#allocation12 + $0x5f0] sm:$0xff]
    %v1960 = vld [vmem:[#allocation12 + $0x5f8] sm:$0xff]
    %v2153 = vunpack.c.l.b16 %v1769
    %v2154 = vunpack.c.h.b16 %v1769
    %v2155 = vunpack.c.l.b16 %v1770
    %v2156 = vunpack.c.h.b16 %v1770
    %v2157 = vunpack.c.l.b16 %v1771
    %v2158 = vunpack.c.h.b16 %v1771
    %v2159 = vunpack.c.l.b16 %v1772
    %v2160 = vunpack.c.h.b16 %v1772
    %v2161 = vunpack.c.l.b16 %v1773
    %v2162 = vunpack.c.h.b16 %v1773
    %v2163 = vunpack.c.l.b16 %v1774
    %v2164 = vunpack.c.h.b16 %v1774
    %v2165 = vunpack.c.l.b16 %v1775
    %v2166 = vunpack.c.h.b16 %v1775
    %v2167 = vunpack.c.l.b16 %v1776
    %v2168 = vunpack.c.h.b16 %v1776
    %v2169 = vunpack.c.l.b16 %v1777
    %v2170 = vunpack.c.h.b16 %v1777
    %v2171 = vunpack.c.l.b16 %v1778
    %v2172 = vunpack.c.h.b16 %v1778
    %v2173 = vunpack.c.l.b16 %v1779
    %v2174 = vunpack.c.h.b16 %v1779
    %v2175 = vunpack.c.l.b16 %v1780
    %v2176 = vunpack.c.h.b16 %v1780
    %v2177 = vunpack.c.l.b16 %v1781
    %v2178 = vunpack.c.h.b16 %v1781
    %v2179 = vunpack.c.l.b16 %v1782
    %v2180 = vunpack.c.h.b16 %v1782
    %v2181 = vunpack.c.l.b16 %v1783
    %v2182 = vunpack.c.h.b16 %v1783
    %v2183 = vunpack.c.l.b16 %v1784
    %v2184 = vunpack.c.h.b16 %v1784
    %v2185 = vunpack.c.l.b16 %v1785
    %v2186 = vunpack.c.h.b16 %v1785
    %v2187 = vunpack.c.l.b16 %v1786
    %v2188 = vunpack.c.h.b16 %v1786
    %v2189 = vunpack.c.l.b16 %v1787
    %v2190 = vunpack.c.h.b16 %v1787
    %v2191 = vunpack.c.l.b16 %v1788
    %v2192 = vunpack.c.h.b16 %v1788
    %v2193 = vunpack.c.l.b16 %v1789
    %v2194 = vunpack.c.h.b16 %v1789
    %v2195 = vunpack.c.l.b16 %v1790
    %v2196 = vunpack.c.h.b16 %v1790
    %v2197 = vunpack.c.l.b16 %v1791
    %v2198 = vunpack.c.h.b16 %v1791
    %v2199 = vunpack.c.l.b16 %v1792
    %v2200 = vunpack.c.h.b16 %v1792
    %v2201 = vunpack.c.l.b16 %v1793
    %v2202 = vunpack.c.h.b16 %v1793
    %v2203 = vunpack.c.l.b16 %v1794
    %v2204 = vunpack.c.h.b16 %v1794
    %v2205 = vunpack.c.l.b16 %v1795
    %v2206 = vunpack.c.h.b16 %v1795
    %v2207 = vunpack.c.l.b16 %v1796
    %v2208 = vunpack.c.h.b16 %v1796
    %v2209 = vunpack.c.l.b16 %v1797
    %v2210 = vunpack.c.h.b16 %v1797
    %v2211 = vunpack.c.l.b16 %v1798
    %v2212 = vunpack.c.h.b16 %v1798
    %v2213 = vunpack.c.l.b16 %v1799
    %v2214 = vunpack.c.h.b16 %v1799
    %v2215 = vunpack.c.l.b16 %v1800
    %v2216 = vunpack.c.h.b16 %v1800
    %v2217 = vunpack.c.l.b16 %v1801
    %v2218 = vunpack.c.h.b16 %v1801
    %v2219 = vunpack.c.l.b16 %v1802
    %v2220 = vunpack.c.h.b16 %v1802
    %v2221 = vunpack.c.l.b16 %v1803
    %v2222 = vunpack.c.h.b16 %v1803
    %v2223 = vunpack.c.l.b16 %v1804
    %v2224 = vunpack.c.h.b16 %v1804
    %v2225 = vunpack.c.l.b16 %v1805
    %v2226 = vunpack.c.h.b16 %v1805
    %v2227 = vunpack.c.l.b16 %v1806
    %v2228 = vunpack.c.h.b16 %v1806
    %v2229 = vunpack.c.l.b16 %v1807
    %v2230 = vunpack.c.h.b16 %v1807
    %v2231 = vunpack.c.l.b16 %v1808
    %v2232 = vunpack.c.h.b16 %v1808
    %v2233 = vunpack.c.l.b16 %v1809
    %v2234 = vunpack.c.h.b16 %v1809
    %v2235 = vunpack.c.l.b16 %v1810
    %v2236 = vunpack.c.h.b16 %v1810
    %v2237 = vunpack.c.l.b16 %v1811
    %v2238 = vunpack.c.h.b16 %v1811
    %v2239 = vunpack.c.l.b16 %v1812
    %v2240 = vunpack.c.h.b16 %v1812
    %v2241 = vunpack.c.l.b16 %v1813
    %v2242 = vunpack.c.h.b16 %v1813
    %v2243 = vunpack.c.l.b16 %v1814
    %v2244 = vunpack.c.h.b16 %v1814
    %v2245 = vunpack.c.l.b16 %v1815
    %v2246 = vunpack.c.h.b16 %v1815
    %v2247 = vunpack.c.l.b16 %v1816
    %v2248 = vunpack.c.h.b16 %v1816
    %v2249 = vunpack.c.l.b16 %v1817
    %v2250 = vunpack.c.h.b16 %v1817
    %v2251 = vunpack.c.l.b16 %v1818
    %v2252 = vunpack.c.h.b16 %v1818
    %v2253 = vunpack.c.l.b16 %v1819
    %v2254 = vunpack.c.h.b16 %v1819
    %v2255 = vunpack.c.l.b16 %v1820
    %v2256 = vunpack.c.h.b16 %v1820
    %v2257 = vunpack.c.l.b16 %v1821
    %v2258 = vunpack.c.h.b16 %v1821
    %v2259 = vunpack.c.l.b16 %v1822
    %v2260 = vunpack.c.h.b16 %v1822
    %v2261 = vunpack.c.l.b16 %v1823
    %v2262 = vunpack.c.h.b16 %v1823
    %v2263 = vunpack.c.l.b16 %v1824
    %v2264 = vunpack.c.h.b16 %v1824
    %v2265 = vunpack.c.l.b16 %v1825
    %v2266 = vunpack.c.h.b16 %v1825
    %v2267 = vunpack.c.l.b16 %v1826
    %v2268 = vunpack.c.h.b16 %v1826
    %v2269 = vunpack.c.l.b16 %v1827
    %v2270 = vunpack.c.h.b16 %v1827
    %v2271 = vunpack.c.l.b16 %v1828
    %v2272 = vunpack.c.h.b16 %v1828
    %v2273 = vunpack.c.l.b16 %v1829
    %v2274 = vunpack.c.h.b16 %v1829
    %v2275 = vunpack.c.l.b16 %v1830
    %v2276 = vunpack.c.h.b16 %v1830
    %v2277 = vunpack.c.l.b16 %v1831
    %v2278 = vunpack.c.h.b16 %v1831
    %v2279 = vunpack.c.l.b16 %v1832
    %v2280 = vunpack.c.h.b16 %v1832
    %v2281 = vunpack.c.l.b16 %v1833
    %v2282 = vunpack.c.h.b16 %v1833
    %v2283 = vunpack.c.l.b16 %v1834
    %v2284 = vunpack.c.h.b16 %v1834
    %v2285 = vunpack.c.l.b16 %v1835
    %v2286 = vunpack.c.h.b16 %v1835
    %v2287 = vunpack.c.l.b16 %v1836
    %v2288 = vunpack.c.h.b16 %v1836
    %v2289 = vunpack.c.l.b16 %v1837
    %v2290 = vunpack.c.h.b16 %v1837
    %v2291 = vunpack.c.l.b16 %v1838
    %v2292 = vunpack.c.h.b16 %v1838
    %v2293 = vunpack.c.l.b16 %v1839
    %v2294 = vunpack.c.h.b16 %v1839
    %v2295 = vunpack.c.l.b16 %v1840
    %v2296 = vunpack.c.h.b16 %v1840
    %v2297 = vunpack.c.l.b16 %v1841
    %v2298 = vunpack.c.h.b16 %v1841
    %v2299 = vunpack.c.l.b16 %v1842
    %v2300 = vunpack.c.h.b16 %v1842
    %v2301 = vunpack.c.l.b16 %v1843
    %v2302 = vunpack.c.h.b16 %v1843
    %v2303 = vunpack.c.l.b16 %v1844
    %v2304 = vunpack.c.h.b16 %v1844
    %v2305 = vunpack.c.l.b16 %v1845
    %v2306 = vunpack.c.h.b16 %v1845
    %v2307 = vunpack.c.l.b16 %v1846
    %v2308 = vunpack.c.h.b16 %v1846
    %v2309 = vunpack.c.l.b16 %v1847
    %v2310 = vunpack.c.h.b16 %v1847
    %v2311 = vunpack.c.l.b16 %v1848
    %v2312 = vunpack.c.h.b16 %v1848
    %v2313 = vunpack.c.l.b16 %v1849
    %v2314 = vunpack.c.h.b16 %v1849
    %v2315 = vunpack.c.l.b16 %v1850
    %v2316 = vunpack.c.h.b16 %v1850
    %v2317 = vunpack.c.l.b16 %v1851
    %v2318 = vunpack.c.h.b16 %v1851
    %v2319 = vunpack.c.l.b16 %v1852
    %v2320 = vunpack.c.h.b16 %v1852
    %v2321 = vunpack.c.l.b16 %v1853
    %v2322 = vunpack.c.h.b16 %v1853
    %v2323 = vunpack.c.l.b16 %v1854
    %v2324 = vunpack.c.h.b16 %v1854
    %v2325 = vunpack.c.l.b16 %v1855
    %v2326 = vunpack.c.h.b16 %v1855
    %v2327 = vunpack.c.l.b16 %v1856
    %v2328 = vunpack.c.h.b16 %v1856
    %v2329 = vunpack.c.l.b16 %v1857
    %v2330 = vunpack.c.h.b16 %v1857
    %v2331 = vunpack.c.l.b16 %v1858
    %v2332 = vunpack.c.h.b16 %v1858
    %v2333 = vunpack.c.l.b16 %v1859
    %v2334 = vunpack.c.h.b16 %v1859
    %v2335 = vunpack.c.l.b16 %v1860
    %v2336 = vunpack.c.h.b16 %v1860
    %v2337 = vunpack.c.l.b16 %v1861
    %v2338 = vunpack.c.h.b16 %v1861
    %v2339 = vunpack.c.l.b16 %v1862
    %v2340 = vunpack.c.h.b16 %v1862
    %v2341 = vunpack.c.l.b16 %v1863
    %v2342 = vunpack.c.h.b16 %v1863
    %v2343 = vunpack.c.l.b16 %v1864
    %v2344 = vunpack.c.h.b16 %v1864
    %v2345 = vunpack.c.l.b16 %v1865
    %v2346 = vunpack.c.h.b16 %v1865
    %v2347 = vunpack.c.l.b16 %v1866
    %v2348 = vunpack.c.h.b16 %v1866
    %v2349 = vunpack.c.l.b16 %v1867
    %v2350 = vunpack.c.h.b16 %v1867
    %v2351 = vunpack.c.l.b16 %v1868
    %v2352 = vunpack.c.h.b16 %v1868
    %v2353 = vunpack.c.l.b16 %v1869
    %v2354 = vunpack.c.h.b16 %v1869
    %v2355 = vunpack.c.l.b16 %v1870
    %v2356 = vunpack.c.h.b16 %v1870
    %v2357 = vunpack.c.l.b16 %v1871
    %v2358 = vunpack.c.h.b16 %v1871
    %v2359 = vunpack.c.l.b16 %v1872
    %v2360 = vunpack.c.h.b16 %v1872
    %v2361 = vunpack.c.l.b16 %v1873
    %v2362 = vunpack.c.h.b16 %v1873
    %v2363 = vunpack.c.l.b16 %v1874
    %v2364 = vunpack.c.h.b16 %v1874
    %v2365 = vunpack.c.l.b16 %v1875
    %v2366 = vunpack.c.h.b16 %v1875
    %v2367 = vunpack.c.l.b16 %v1876
    %v2368 = vunpack.c.h.b16 %v1876
    %v2369 = vunpack.c.l.b16 %v1877
    %v2370 = vunpack.c.h.b16 %v1877
    %v2371 = vunpack.c.l.b16 %v1878
    %v2372 = vunpack.c.h.b16 %v1878
    %v2373 = vunpack.c.l.b16 %v1879
    %v2374 = vunpack.c.h.b16 %v1879
    %v2375 = vunpack.c.l.b16 %v1880
    %v2376 = vunpack.c.h.b16 %v1880
    %v2377 = vunpack.c.l.b16 %v1881
    %v2378 = vunpack.c.h.b16 %v1881
    %v2379 = vunpack.c.l.b16 %v1882
    %v2380 = vunpack.c.h.b16 %v1882
    %v2381 = vunpack.c.l.b16 %v1883
    %v2382 = vunpack.c.h.b16 %v1883
    %v2383 = vunpack.c.l.b16 %v1884
    %v2384 = vunpack.c.h.b16 %v1884
    %v2385 = vunpack.c.l.b16 %v1885
    %v2386 = vunpack.c.h.b16 %v1885
    %v2387 = vunpack.c.l.b16 %v1886
    %v2388 = vunpack.c.h.b16 %v1886
    %v2389 = vunpack.c.l.b16 %v1887
    %v2390 = vunpack.c.h.b16 %v1887
    %v2391 = vunpack.c.l.b16 %v1888
    %v2392 = vunpack.c.h.b16 %v1888
    %v2393 = vunpack.c.l.b16 %v1889
    %v2394 = vunpack.c.h.b16 %v1889
    %v2395 = vunpack.c.l.b16 %v1890
    %v2396 = vunpack.c.h.b16 %v1890
    %v2397 = vunpack.c.l.b16 %v1891
    %v2398 = vunpack.c.h.b16 %v1891
    %v2399 = vunpack.c.l.b16 %v1892
    %v2400 = vunpack.c.h.b16 %v1892
    %v2401 = vunpack.c.l.b16 %v1893
    %v2402 = vunpack.c.h.b16 %v1893
    %v2403 = vunpack.c.l.b16 %v1894
    %v2404 = vunpack.c.h.b16 %v1894
    %v2405 = vunpack.c.l.b16 %v1895
    %v2406 = vunpack.c.h.b16 %v1895
    %v2407 = vunpack.c.l.b16 %v1896
    %v2408 = vunpack.c.h.b16 %v1896
    %v2409 = vunpack.c.l.b16 %v1897
    %v2410 = vunpack.c.h.b16 %v1897
    %v2411 = vunpack.c.l.b16 %v1898
    %v2412 = vunpack.c.h.b16 %v1898
    %v2413 = vunpack.c.l.b16 %v1899
    %v2414 = vunpack.c.h.b16 %v1899
    %v2415 = vunpack.c.l.b16 %v1900
    %v2416 = vunpack.c.h.b16 %v1900
    %v2417 = vunpack.c.l.b16 %v1901
    %v2418 = vunpack.c.h.b16 %v1901
    %v2419 = vunpack.c.l.b16 %v1902
    %v2420 = vunpack.c.h.b16 %v1902
    %v2421 = vunpack.c.l.b16 %v1903
    %v2422 = vunpack.c.h.b16 %v1903
    %v2423 = vunpack.c.l.b16 %v1904
    %v2424 = vunpack.c.h.b16 %v1904
    %v2425 = vunpack.c.l.b16 %v1905
    %v2426 = vunpack.c.h.b16 %v1905
    %v2427 = vunpack.c.l.b16 %v1906
    %v2428 = vunpack.c.h.b16 %v1906
    %v2429 = vunpack.c.l.b16 %v1907
    %v2430 = vunpack.c.h.b16 %v1907
    %v2431 = vunpack.c.l.b16 %v1908
    %v2432 = vunpack.c.h.b16 %v1908
    %v2433 = vunpack.c.l.b16 %v1909
    %v2434 = vunpack.c.h.b16 %v1909
    %v2435 = vunpack.c.l.b16 %v1910
    %v2436 = vunpack.c.h.b16 %v1910
    %v2437 = vunpack.c.l.b16 %v1911
    %v2438 = vunpack.c.h.b16 %v1911
    %v2439 = vunpack.c.l.b16 %v1912
    %v2440 = vunpack.c.h.b16 %v1912
    %v2441 = vunpack.c.l.b16 %v1913
    %v2442 = vunpack.c.h.b16 %v1913
    %v2443 = vunpack.c.l.b16 %v1914
    %v2444 = vunpack.c.h.b16 %v1914
    %v2445 = vunpack.c.l.b16 %v1915
    %v2446 = vunpack.c.h.b16 %v1915
    %v2447 = vunpack.c.l.b16 %v1916
    %v2448 = vunpack.c.h.b16 %v1916
    %v2449 = vunpack.c.l.b16 %v1917
    %v2450 = vunpack.c.h.b16 %v1917
    %v2451 = vunpack.c.l.b16 %v1918
    %v2452 = vunpack.c.h.b16 %v1918
    %v2453 = vunpack.c.l.b16 %v1919
    %v2454 = vunpack.c.h.b16 %v1919
    %v2455 = vunpack.c.l.b16 %v1920
    %v2456 = vunpack.c.h.b16 %v1920
    %v2457 = vunpack.c.l.b16 %v1921
    %v2458 = vunpack.c.h.b16 %v1921
    %v2459 = vunpack.c.l.b16 %v1922
    %v2460 = vunpack.c.h.b16 %v1922
    %v2461 = vunpack.c.l.b16 %v1923
    %v2462 = vunpack.c.h.b16 %v1923
    %v2463 = vunpack.c.l.b16 %v1924
    %v2464 = vunpack.c.h.b16 %v1924
    %v2465 = vunpack.c.l.b16 %v1925
    %v2466 = vunpack.c.h.b16 %v1925
    %v2467 = vunpack.c.l.b16 %v1926
    %v2468 = vunpack.c.h.b16 %v1926
    %v2469 = vunpack.c.l.b16 %v1927
    %v2470 = vunpack.c.h.b16 %v1927
    %v2471 = vunpack.c.l.b16 %v1928
    %v2472 = vunpack.c.h.b16 %v1928
    %v2473 = vunpack.c.l.b16 %v1929
    %v2474 = vunpack.c.h.b16 %v1929
    %v2475 = vunpack.c.l.b16 %v1930
    %v2476 = vunpack.c.h.b16 %v1930
    %v2477 = vunpack.c.l.b16 %v1931
    %v2478 = vunpack.c.h.b16 %v1931
    %v2479 = vunpack.c.l.b16 %v1932
    %v2480 = vunpack.c.h.b16 %v1932
    %v2481 = vunpack.c.l.b16 %v1933
    %v2482 = vunpack.c.h.b16 %v1933
    %v2483 = vunpack.c.l.b16 %v1934
    %v2484 = vunpack.c.h.b16 %v1934
    %v2485 = vunpack.c.l.b16 %v1935
    %v2486 = vunpack.c.h.b16 %v1935
    %v2487 = vunpack.c.l.b16 %v1936
    %v2488 = vunpack.c.h.b16 %v1936
    %v2489 = vunpack.c.l.b16 %v1937
    %v2490 = vunpack.c.h.b16 %v1937
    %v2491 = vunpack.c.l.b16 %v1938
    %v2492 = vunpack.c.h.b16 %v1938
    %v2493 = vunpack.c.l.b16 %v1939
    %v2494 = vunpack.c.h.b16 %v1939
    %v2495 = vunpack.c.l.b16 %v1940
    %v2496 = vunpack.c.h.b16 %v1940
    %v2497 = vunpack.c.l.b16 %v1941
    %v2498 = vunpack.c.h.b16 %v1941
    %v2499 = vunpack.c.l.b16 %v1942
    %v2500 = vunpack.c.h.b16 %v1942
    %v2501 = vunpack.c.l.b16 %v1943
    %v2502 = vunpack.c.h.b16 %v1943
    %v2503 = vunpack.c.l.b16 %v1944
    %v2504 = vunpack.c.h.b16 %v1944
    %v2505 = vunpack.c.l.b16 %v1945
    %v2506 = vunpack.c.h.b16 %v1945
    %v2507 = vunpack.c.l.b16 %v1946
    %v2508 = vunpack.c.h.b16 %v1946
    %v2509 = vunpack.c.l.b16 %v1947
    %v2510 = vunpack.c.h.b16 %v1947
    %v2511 = vunpack.c.l.b16 %v1948
    %v2512 = vunpack.c.h.b16 %v1948
    %v2513 = vunpack.c.l.b16 %v1949
    %v2514 = vunpack.c.h.b16 %v1949
    %v2515 = vunpack.c.l.b16 %v1950
    %v2516 = vunpack.c.h.b16 %v1950
    %v2517 = vunpack.c.l.b16 %v1951
    %v2518 = vunpack.c.h.b16 %v1951
    %v2519 = vunpack.c.l.b16 %v1952
    %v2520 = vunpack.c.h.b16 %v1952
    %v2521 = vunpack.c.l.b16 %v1953
    %v2522 = vunpack.c.h.b16 %v1953
    %v2523 = vunpack.c.l.b16 %v1954
    %v2524 = vunpack.c.h.b16 %v1954
    %v2525 = vunpack.c.l.b16 %v1955
    %v2526 = vunpack.c.h.b16 %v1955
    %v2527 = vunpack.c.l.b16 %v1956
    %v2528 = vunpack.c.h.b16 %v1956
    %v2529 = vunpack.c.l.b16 %v1957
    %v2530 = vunpack.c.h.b16 %v1957
    %v2531 = vunpack.c.l.b16 %v1958
    %v2532 = vunpack.c.h.b16 %v1958
    %v2533 = vunpack.c.l.b16 %v1959
    %v2534 = vunpack.c.h.b16 %v1959
    %v2535 = vunpack.c.l.b16 %v1960
    %v2536 = vunpack.c.h.b16 %v1960
    %v2537 = vpack.c.b16 %v2159, %v2153
    %v2538 = vpack.c.b16 %v2160, %v2154
    %v2539 = vpack.c.b16 %v2161, %v2155
    %v2540 = vpack.c.b16 %v2162, %v2156
    %v2541 = vpack.c.b16 %v2163, %v2157
    %v2542 = vpack.c.b16 %v2164, %v2158
    %v2543 = vpack.c.b16 %v2171, %v2165
    %v2544 = vpack.c.b16 %v2172, %v2166
    %v2545 = vpack.c.b16 %v2173, %v2167
    %v2546 = vpack.c.b16 %v2174, %v2168
    %v2547 = vpack.c.b16 %v2175, %v2169
    %v2548 = vpack.c.b16 %v2176, %v2170
    %v2549 = vpack.c.b16 %v2183, %v2177
    %v2550 = vpack.c.b16 %v2184, %v2178
    %v2551 = vpack.c.b16 %v2185, %v2179
    %v2552 = vpack.c.b16 %v2186, %v2180
    %v2553 = vpack.c.b16 %v2187, %v2181
    %v2554 = vpack.c.b16 %v2188, %v2182
    %v2555 = vpack.c.b16 %v2195, %v2189
    %v2556 = vpack.c.b16 %v2196, %v2190
    %v2557 = vpack.c.b16 %v2197, %v2191
    %v2558 = vpack.c.b16 %v2198, %v2192
    %v2559 = vpack.c.b16 %v2199, %v2193
    %v2560 = vpack.c.b16 %v2200, %v2194
    %v2561 = vpack.c.b16 %v2207, %v2201
    %v2562 = vpack.c.b16 %v2208, %v2202
    %v2563 = vpack.c.b16 %v2209, %v2203
    %v2564 = vpack.c.b16 %v2210, %v2204
    %v2565 = vpack.c.b16 %v2211, %v2205
    %v2566 = vpack.c.b16 %v2212, %v2206
    %v2567 = vpack.c.b16 %v2219, %v2213
    %v2568 = vpack.c.b16 %v2220, %v2214
    %v2569 = vpack.c.b16 %v2221, %v2215
    %v2570 = vpack.c.b16 %v2222, %v2216
    %v2571 = vpack.c.b16 %v2223, %v2217
    %v2572 = vpack.c.b16 %v2224, %v2218
    %v2573 = vpack.c.b16 %v2231, %v2225
    %v2574 = vpack.c.b16 %v2232, %v2226
    %v2575 = vpack.c.b16 %v2233, %v2227
    %v2576 = vpack.c.b16 %v2234, %v2228
    %v2577 = vpack.c.b16 %v2235, %v2229
    %v2578 = vpack.c.b16 %v2236, %v2230
    %v2579 = vpack.c.b16 %v2243, %v2237
    %v2580 = vpack.c.b16 %v2244, %v2238
    %v2581 = vpack.c.b16 %v2245, %v2239
    %v2582 = vpack.c.b16 %v2246, %v2240
    %v2583 = vpack.c.b16 %v2247, %v2241
    %v2584 = vpack.c.b16 %v2248, %v2242
    %v2585 = vpack.c.b16 %v2255, %v2249
    %v2586 = vpack.c.b16 %v2256, %v2250
    %v2587 = vpack.c.b16 %v2257, %v2251
    %v2588 = vpack.c.b16 %v2258, %v2252
    %v2589 = vpack.c.b16 %v2259, %v2253
    %v2590 = vpack.c.b16 %v2260, %v2254
    %v2591 = vpack.c.b16 %v2267, %v2261
    %v2592 = vpack.c.b16 %v2268, %v2262
    %v2593 = vpack.c.b16 %v2269, %v2263
    %v2594 = vpack.c.b16 %v2270, %v2264
    %v2595 = vpack.c.b16 %v2271, %v2265
    %v2596 = vpack.c.b16 %v2272, %v2266
    %v2597 = vpack.c.b16 %v2279, %v2273
    %v2598 = vpack.c.b16 %v2280, %v2274
    %v2599 = vpack.c.b16 %v2281, %v2275
    %v2600 = vpack.c.b16 %v2282, %v2276
    %v2601 = vpack.c.b16 %v2283, %v2277
    %v2602 = vpack.c.b16 %v2284, %v2278
    %v2603 = vpack.c.b16 %v2291, %v2285
    %v2604 = vpack.c.b16 %v2292, %v2286
    %v2605 = vpack.c.b16 %v2293, %v2287
    %v2606 = vpack.c.b16 %v2294, %v2288
    %v2607 = vpack.c.b16 %v2295, %v2289
    %v2608 = vpack.c.b16 %v2296, %v2290
    %v2609 = vpack.c.b16 %v2303, %v2297
    %v2610 = vpack.c.b16 %v2304, %v2298
    %v2611 = vpack.c.b16 %v2305, %v2299
    %v2612 = vpack.c.b16 %v2306, %v2300
    %v2613 = vpack.c.b16 %v2307, %v2301
    %v2614 = vpack.c.b16 %v2308, %v2302
    %v2615 = vpack.c.b16 %v2315, %v2309
    %v2616 = vpack.c.b16 %v2316, %v2310
    %v2617 = vpack.c.b16 %v2317, %v2311
    %v2618 = vpack.c.b16 %v2318, %v2312
    %v2619 = vpack.c.b16 %v2319, %v2313
    %v2620 = vpack.c.b16 %v2320, %v2314
    %v2621 = vpack.c.b16 %v2327, %v2321
    %v2622 = vpack.c.b16 %v2328, %v2322
    %v2623 = vpack.c.b16 %v2329, %v2323
    %v2624 = vpack.c.b16 %v2330, %v2324
    %v2625 = vpack.c.b16 %v2331, %v2325
    %v2626 = vpack.c.b16 %v2332, %v2326
    %v2627 = vpack.c.b16 %v2339, %v2333
    %v2628 = vpack.c.b16 %v2340, %v2334
    %v2629 = vpack.c.b16 %v2341, %v2335
    %v2630 = vpack.c.b16 %v2342, %v2336
    %v2631 = vpack.c.b16 %v2343, %v2337
    %v2632 = vpack.c.b16 %v2344, %v2338
    %v2633 = vpack.c.b16 %v2351, %v2345
    %v2634 = vpack.c.b16 %v2352, %v2346
    %v2635 = vpack.c.b16 %v2353, %v2347
    %v2636 = vpack.c.b16 %v2354, %v2348
    %v2637 = vpack.c.b16 %v2355, %v2349
    %v2638 = vpack.c.b16 %v2356, %v2350
    %v2639 = vpack.c.b16 %v2363, %v2357
    %v2640 = vpack.c.b16 %v2364, %v2358
    %v2641 = vpack.c.b16 %v2365, %v2359
    %v2642 = vpack.c.b16 %v2366, %v2360
    %v2643 = vpack.c.b16 %v2367, %v2361
    %v2644 = vpack.c.b16 %v2368, %v2362
    %v2645 = vpack.c.b16 %v2375, %v2369
    %v2646 = vpack.c.b16 %v2376, %v2370
    %v2647 = vpack.c.b16 %v2377, %v2371
    %v2648 = vpack.c.b16 %v2378, %v2372
    %v2649 = vpack.c.b16 %v2379, %v2373
    %v2650 = vpack.c.b16 %v2380, %v2374
    %v2651 = vpack.c.b16 %v2387, %v2381
    %v2652 = vpack.c.b16 %v2388, %v2382
    %v2653 = vpack.c.b16 %v2389, %v2383
    %v2654 = vpack.c.b16 %v2390, %v2384
    %v2655 = vpack.c.b16 %v2391, %v2385
    %v2656 = vpack.c.b16 %v2392, %v2386
    %v2657 = vpack.c.b16 %v2399, %v2393
    %v2658 = vpack.c.b16 %v2400, %v2394
    %v2659 = vpack.c.b16 %v2401, %v2395
    %v2660 = vpack.c.b16 %v2402, %v2396
    %v2661 = vpack.c.b16 %v2403, %v2397
    %v2662 = vpack.c.b16 %v2404, %v2398
    %v2663 = vpack.c.b16 %v2411, %v2405
    %v2664 = vpack.c.b16 %v2412, %v2406
    %v2665 = vpack.c.b16 %v2413, %v2407
    %v2666 = vpack.c.b16 %v2414, %v2408
    %v2667 = vpack.c.b16 %v2415, %v2409
    %v2668 = vpack.c.b16 %v2416, %v2410
    %v2669 = vpack.c.b16 %v2423, %v2417
    %v2670 = vpack.c.b16 %v2424, %v2418
    %v2671 = vpack.c.b16 %v2425, %v2419
    %v2672 = vpack.c.b16 %v2426, %v2420
    %v2673 = vpack.c.b16 %v2427, %v2421
    %v2674 = vpack.c.b16 %v2428, %v2422
    %v2675 = vpack.c.b16 %v2435, %v2429
    %v2676 = vpack.c.b16 %v2436, %v2430
    %v2677 = vpack.c.b16 %v2437, %v2431
    %v2678 = vpack.c.b16 %v2438, %v2432
    %v2679 = vpack.c.b16 %v2439, %v2433
    %v2680 = vpack.c.b16 %v2440, %v2434
    %v2681 = vpack.c.b16 %v2447, %v2441
    %v2682 = vpack.c.b16 %v2448, %v2442
    %v2683 = vpack.c.b16 %v2449, %v2443
    %v2684 = vpack.c.b16 %v2450, %v2444
    %v2685 = vpack.c.b16 %v2451, %v2445
    %v2686 = vpack.c.b16 %v2452, %v2446
    %v2687 = vpack.c.b16 %v2459, %v2453
    %v2688 = vpack.c.b16 %v2460, %v2454
    %v2689 = vpack.c.b16 %v2461, %v2455
    %v2690 = vpack.c.b16 %v2462, %v2456
    %v2691 = vpack.c.b16 %v2463, %v2457
    %v2692 = vpack.c.b16 %v2464, %v2458
    %v2693 = vpack.c.b16 %v2471, %v2465
    %v2694 = vpack.c.b16 %v2472, %v2466
    %v2695 = vpack.c.b16 %v2473, %v2467
    %v2696 = vpack.c.b16 %v2474, %v2468
    %v2697 = vpack.c.b16 %v2475, %v2469
    %v2698 = vpack.c.b16 %v2476, %v2470
    %v2699 = vpack.c.b16 %v2483, %v2477
    %v2700 = vpack.c.b16 %v2484, %v2478
    %v2701 = vpack.c.b16 %v2485, %v2479
    %v2702 = vpack.c.b16 %v2486, %v2480
    %v2703 = vpack.c.b16 %v2487, %v2481
    %v2704 = vpack.c.b16 %v2488, %v2482
    %v2705 = vpack.c.b16 %v2495, %v2489
    %v2706 = vpack.c.b16 %v2496, %v2490
    %v2707 = vpack.c.b16 %v2497, %v2491
    %v2708 = vpack.c.b16 %v2498, %v2492
    %v2709 = vpack.c.b16 %v2499, %v2493
    %v2710 = vpack.c.b16 %v2500, %v2494
    %v2711 = vpack.c.b16 %v2507, %v2501
    %v2712 = vpack.c.b16 %v2508, %v2502
    %v2713 = vpack.c.b16 %v2509, %v2503
    %v2714 = vpack.c.b16 %v2510, %v2504
    %v2715 = vpack.c.b16 %v2511, %v2505
    %v2716 = vpack.c.b16 %v2512, %v2506
    %v2717 = vpack.c.b16 %v2519, %v2513
    %v2718 = vpack.c.b16 %v2520, %v2514
    %v2719 = vpack.c.b16 %v2521, %v2515
    %v2720 = vpack.c.b16 %v2522, %v2516
    %v2721 = vpack.c.b16 %v2523, %v2517
    %v2722 = vpack.c.b16 %v2524, %v2518
    %v2723 = vpack.c.b16 %v2531, %v2525
    %v2724 = vpack.c.b16 %v2532, %v2526
    %v2725 = vpack.c.b16 %v2533, %v2527
    %v2726 = vpack.c.b16 %v2534, %v2528
    %v2727 = vpack.c.b16 %v2535, %v2529
    %v2728 = vpack.c.b16 %v2536, %v2530
    %2921 = vmatprep.subr.bf16.mxu0 %v2538
    %2922 = vmatpush1.bf16.msra.mxu0 %v2537
    %2923 = vmatprep.subr.bf16.mxu0 %v2544
    %2924 = vmatpush1.bf16.msra.mxu0 %v2543
    %2925 = vmatprep.subr.bf16.mxu0 %v2550
    %2926 = vmatpush1.bf16.msra.mxu0 %v2549
    %2927 = vmatprep.subr.bf16.mxu0 %v2556
    %2928 = vmatpush1.bf16.msra.mxu0 %v2555
    %2929 = vmatprep.subr.bf16.mxu0 %v2562
    %2930 = vmatpush1.bf16.msra.mxu0 %v2561
    %2931 = vmatprep.subr.bf16.mxu0 %v2568
    %2932 = vmatpush1.bf16.msra.mxu0 %v2567
    %2933 = vmatprep.subr.bf16.mxu0 %v2574
    %2934 = vmatpush1.bf16.msra.mxu0 %v2573
    %2935 = vmatprep.subr.bf16.mxu0 %v2580
    %2936 = vmatpush1.bf16.msra.mxu0 %v2579
    %2937 = vmatprep.subr.bf16.mxu0 %v2586
    %2938 = vmatpush1.bf16.msra.mxu0 %v2585
    %2939 = vmatprep.subr.bf16.mxu0 %v2592
    %2940 = vmatpush1.bf16.msra.mxu0 %v2591
    %2941 = vmatprep.subr.bf16.mxu0 %v2598
    %2942 = vmatpush1.bf16.msra.mxu0 %v2597
    %2943 = vmatprep.subr.bf16.mxu0 %v2604
    %2944 = vmatpush1.bf16.msra.mxu0 %v2603
    %2945 = vmatprep.subr.bf16.mxu0 %v2610
    %2946 = vmatpush1.bf16.msra.mxu0 %v2609
    %2947 = vmatprep.subr.bf16.mxu0 %v2616
    %2948 = vmatpush1.bf16.msra.mxu0 %v2615
    %2949 = vmatprep.subr.bf16.mxu0 %v2622
    %2950 = vmatpush1.bf16.msra.mxu0 %v2621
    %2951 = vmatprep.subr.bf16.mxu0 %v2628
    %2952 = vmatpush1.bf16.msra.mxu0 %v2627
    %2953 = vmatprep.mubr.bf16.mxu0 %v1766
    %2954 = vmatmul.mubr.bf16.gmra.mrb[0].mxu0 %v1765
    %v2955 = vpop.f32.mrb[0].mxu0
    %v2956 = vadd.f32 0.0, %v2955
    %v2957 = vpop.f32.mrb[0].mxu0
    %v2958 = vadd.f32 0.0, %v2957
    %v2959 = vpop.f32.mrb[0].mxu0
    %v2960 = vpop.f32.mrb[0].mxu0
    %2961 = vdwg.mxu0
    %2962 = vmatprep.subr.bf16.mxu0 %v2634
    %2963 = vmatpush1.bf16.msra.mxu0 %v2633
    %2964 = vmatprep.subr.bf16.mxu0 %v2640
    %2965 = vmatpush1.bf16.msra.mxu0 %v2639
    %2966 = vmatprep.subr.bf16.mxu0 %v2646
    %2967 = vmatpush1.bf16.msra.mxu0 %v2645
    %2968 = vmatprep.subr.bf16.mxu0 %v2652
    %2969 = vmatpush1.bf16.msra.mxu0 %v2651
    %2970 = vmatprep.subr.bf16.mxu0 %v2658
    %2971 = vmatpush1.bf16.msra.mxu0 %v2657
    %2972 = vmatprep.subr.bf16.mxu0 %v2664
    %2973 = vmatpush1.bf16.msra.mxu0 %v2663
    %2974 = vmatprep.subr.bf16.mxu0 %v2670
    %2975 = vmatpush1.bf16.msra.mxu0 %v2669
    %2976 = vmatprep.subr.bf16.mxu0 %v2676
    %2977 = vmatpush1.bf16.msra.mxu0 %v2675
    %2978 = vmatprep.subr.bf16.mxu0 %v2682
    %2979 = vmatpush1.bf16.msra.mxu0 %v2681
    %2980 = vmatprep.subr.bf16.mxu0 %v2688
    %2981 = vmatpush1.bf16.msra.mxu0 %v2687
    %2982 = vmatprep.subr.bf16.mxu0 %v2694
    %2983 = vmatpush1.bf16.msra.mxu0 %v2693
    %2984 = vmatprep.subr.bf16.mxu0 %v2700
    %2985 = vmatpush1.bf16.msra.mxu0 %v2699
    %2986 = vmatprep.subr.bf16.mxu0 %v2706
    %2987 = vmatpush1.bf16.msra.mxu0 %v2705
    %2988 = vmatprep.subr.bf16.mxu0 %v2712
    %2989 = vmatpush1.bf16.msra.mxu0 %v2711
    %2990 = vmatprep.subr.bf16.mxu0 %v2718
    %2991 = vmatpush1.bf16.msra.mxu0 %v2717
    %2992 = vmatprep.subr.bf16.mxu0 %v2724
    %2993 = vmatpush1.bf16.msra.mxu0 %v2723
    %2994 = vmatprep.mubr.bf16.mxu0 %v1768
    %2995 = vmatmul.mubr.bf16.gmra.mrb[0].mxu0 %v1767
    %v2996 = vpop.f32.mrb[0].mxu0
    %v2997 = vadd.f32 %v2956, %v2996
    %v2998 = vpop.f32.mrb[0].mxu0
    %v2999 = vadd.f32 %v2958, %v2998
    %v3000 = vpop.f32.mrb[0].mxu0
    %v3001 = vpop.f32.mrb[0].mxu0
    %3002 = vdwg.mxu0
    %3003 = vmatprep.subr.bf16.mxu0 %v2540
    %3004 = vmatpush1.bf16.msra.mxu0 %v2539
    %3005 = vmatprep.subr.bf16.mxu0 %v2546
    %3006 = vmatpush1.bf16.msra.mxu0 %v2545
    %3007 = vmatprep.subr.bf16.mxu0 %v2552
    %3008 = vmatpush1.bf16.msra.mxu0 %v2551
    %3009 = vmatprep.subr.bf16.mxu0 %v2558
    %3010 = vmatpush1.bf16.msra.mxu0 %v2557
    %3011 = vmatprep.subr.bf16.mxu0 %v2564
    %3012 = vmatpush1.bf16.msra.mxu0 %v2563
    %3013 = vmatprep.subr.bf16.mxu0 %v2570
    %3014 = vmatpush1.bf16.msra.mxu0 %v2569
    %3015 = vmatprep.subr.bf16.mxu0 %v2576
    %3016 = vmatpush1.bf16.msra.mxu0 %v2575
    %3017 = vmatprep.subr.bf16.mxu0 %v2582
    %3018 = vmatpush1.bf16.msra.mxu0 %v2581
    %3019 = vmatprep.subr.bf16.mxu0 %v2588
    %3020 = vmatpush1.bf16.msra.mxu0 %v2587
    %3021 = vmatprep.subr.bf16.mxu0 %v2594
    %3022 = vmatpush1.bf16.msra.mxu0 %v2593
    %3023 = vmatprep.subr.bf16.mxu0 %v2600
    %3024 = vmatpush1.bf16.msra.mxu0 %v2599
    %3025 = vmatprep.subr.bf16.mxu0 %v2606
    %3026 = vmatpush1.bf16.msra.mxu0 %v2605
    %3027 = vmatprep.subr.bf16.mxu0 %v2612
    %3028 = vmatpush1.bf16.msra.mxu0 %v2611
    %3029 = vmatprep.subr.bf16.mxu0 %v2618
    %3030 = vmatpush1.bf16.msra.mxu0 %v2617
    %3031 = vmatprep.subr.bf16.mxu0 %v2624
    %3032 = vmatpush1.bf16.msra.mxu0 %v2623
    %3033 = vmatprep.subr.bf16.mxu0 %v2630
    %3034 = vmatpush1.bf16.msra.mxu0 %v2629
    %3035 = vmatprep.mubr.bf16.mxu0 %v1766
    %3036 = vmatmul.mubr.bf16.gmra.mrb[0].mxu0 %v1765
    %v3037 = vpop.f32.mrb[0].mxu0
    %v3038 = vadd.f32 0.0, %v3037
    %v3039 = vpop.f32.mrb[0].mxu0
    %v3040 = vadd.f32 0.0, %v3039
    %v3041 = vpop.f32.mrb[0].mxu0
    %v3042 = vpop.f32.mrb[0].mxu0
    %3043 = vdwg.mxu0
    %3044 = vmatprep.subr.bf16.mxu0 %v2636
    %3045 = vmatpush1.bf16.msra.mxu0 %v2635
    %3046 = vmatprep.subr.bf16.mxu0 %v2642
    %3047 = vmatpush1.bf16.msra.mxu0 %v2641
    %3048 = vmatprep.subr.bf16.mxu0 %v2648
    %3049 = vmatpush1.bf16.msra.mxu0 %v2647
    %3050 = vmatprep.subr.bf16.mxu0 %v2654
    %3051 = vmatpush1.bf16.msra.mxu0 %v2653
    %3052 = vmatprep.subr.bf16.mxu0 %v2660
    %3053 = vmatpush1.bf16.msra.mxu0 %v2659
    %3054 = vmatprep.subr.bf16.mxu0 %v2666
    %3055 = vmatpush1.bf16.msra.mxu0 %v2665
    %3056 = vmatprep.subr.bf16.mxu0 %v2672
    %3057 = vmatpush1.bf16.msra.mxu0 %v2671
    %3058 = vmatprep.subr.bf16.mxu0 %v2678
    %3059 = vmatpush1.bf16.msra.mxu0 %v2677
    %3060 = vmatprep.subr.bf16.mxu0 %v2684
    %3061 = vmatpush1.bf16.msra.mxu0 %v2683
    %3062 = vmatprep.subr.bf16.mxu0 %v2690
    %3063 = vmatpush1.bf16.msra.mxu0 %v2689
    %3064 = vmatprep.subr.bf16.mxu0 %v2696
    %3065 = vmatpush1.bf16.msra.mxu0 %v2695
    %3066 = vmatprep.subr.bf16.mxu0 %v2702
    %3067 = vmatpush1.bf16.msra.mxu0 %v2701
    %3068 = vmatprep.subr.bf16.mxu0 %v2708
    %3069 = vmatpush1.bf16.msra.mxu0 %v2707
    %3070 = vmatprep.subr.bf16.mxu0 %v2714
    %3071 = vmatpush1.bf16.msra.mxu0 %v2713
    %3072 = vmatprep.subr.bf16.mxu0 %v2720
    %3073 = vmatpush1.bf16.msra.mxu0 %v2719
    %3074 = vmatprep.subr.bf16.mxu0 %v2726
    %3075 = vmatpush1.bf16.msra.mxu0 %v2725
    %3076 = vmatprep.mubr.bf16.mxu0 %v1768
    %3077 = vmatmul.mubr.bf16.gmra.mrb[0].mxu0 %v1767
    %v3078 = vpop.f32.mrb[0].mxu0
    %v3079 = vadd.f32 %v3038, %v3078
    %v3080 = vpop.f32.mrb[0].mxu0
    %v3081 = vadd.f32 %v3040, %v3080
    %v3082 = vpop.f32.mrb[0].mxu0
    %v3083 = vpop.f32.mrb[0].mxu0
    %3084 = vdwg.mxu0
    %3085 = vmatprep.subr.bf16.mxu0 %v2542
    %3086 = vmatpush1.bf16.msra.mxu0 %v2541
    %3087 = vmatprep.subr.bf16.mxu0 %v2548
    %3088 = vmatpush1.bf16.msra.mxu0 %v2547
    %3089 = vmatprep.subr.bf16.mxu0 %v2554
    %3090 = vmatpush1.bf16.msra.mxu0 %v2553
    %3091 = vmatprep.subr.bf16.mxu0 %v2560
    %3092 = vmatpush1.bf16.msra.mxu0 %v2559
    %3093 = vmatprep.subr.bf16.mxu0 %v2566
    %3094 = vmatpush1.bf16.msra.mxu0 %v2565
    %3095 = vmatprep.subr.bf16.mxu0 %v2572
    %3096 = vmatpush1.bf16.msra.mxu0 %v2571
    %3097 = vmatprep.subr.bf16.mxu0 %v2578
    %3098 = vmatpush1.bf16.msra.mxu0 %v2577
    %3099 = vmatprep.subr.bf16.mxu0 %v2584
    %3100 = vmatpush1.bf16.msra.mxu0 %v2583
    %3101 = vmatprep.subr.bf16.mxu0 %v2590
    %3102 = vmatpush1.bf16.msra.mxu0 %v2589
    %3103 = vmatprep.subr.bf16.mxu0 %v2596
    %3104 = vmatpush1.bf16.msra.mxu0 %v2595
    %3105 = vmatprep.subr.bf16.mxu0 %v2602
    %3106 = vmatpush1.bf16.msra.mxu0 %v2601
    %3107 = vmatprep.subr.bf16.mxu0 %v2608
    %3108 = vmatpush1.bf16.msra.mxu0 %v2607
    %3109 = vmatprep.subr.bf16.mxu0 %v2614
    %3110 = vmatpush1.bf16.msra.mxu0 %v2613
    %3111 = vmatprep.subr.bf16.mxu0 %v2620
    %3112 = vmatpush1.bf16.msra.mxu0 %v2619
    %3113 = vmatprep.subr.bf16.mxu0 %v2626
    %3114 = vmatpush1.bf16.msra.mxu0 %v2625
    %3115 = vmatprep.subr.bf16.mxu0 %v2632
    %3116 = vmatpush1.bf16.msra.mxu0 %v2631
    %3117 = vmatprep.mubr.bf16.mxu0 %v1766
    %3118 = vmatmul.mubr.bf16.gmra.mrb[0].mxu0 %v1765
    %v3119 = vpop.f32.mrb[0].mxu0
    %v3120 = vadd.f32 0.0, %v3119
    %v3121 = vpop.f32.mrb[0].mxu0
    %v3122 = vadd.f32 0.0, %v3121
    %v3123 = vpop.f32.mrb[0].mxu0
    %v3124 = vpop.f32.mrb[0].mxu0
    %3125 = vdwg.mxu0
    %3126 = vmatprep.subr.bf16.mxu0 %v2638
    %3127 = vmatpush1.bf16.msra.mxu0 %v2637
    %3128 = vmatprep.subr.bf16.mxu0 %v2644
    %3129 = vmatpush1.bf16.msra.mxu0 %v2643
    %3130 = vmatprep.subr.bf16.mxu0 %v2650
    %3131 = vmatpush1.bf16.msra.mxu0 %v2649
    %3132 = vmatprep.subr.bf16.mxu0 %v2656
    %3133 = vmatpush1.bf16.msra.mxu0 %v2655
    %3134 = vmatprep.subr.bf16.mxu0 %v2662
    %3135 = vmatpush1.bf16.msra.mxu0 %v2661
    %3136 = vmatprep.subr.bf16.mxu0 %v2668
    %3137 = vmatpush1.bf16.msra.mxu0 %v2667
    %3138 = vmatprep.subr.bf16.mxu0 %v2674
    %3139 = vmatpush1.bf16.msra.mxu0 %v2673
    %3140 = vmatprep.subr.bf16.mxu0 %v2680
    %3141 = vmatpush1.bf16.msra.mxu0 %v2679
    %3142 = vmatprep.subr.bf16.mxu0 %v2686
    %3143 = vmatpush1.bf16.msra.mxu0 %v2685
    %3144 = vmatprep.subr.bf16.mxu0 %v2692
    %3145 = vmatpush1.bf16.msra.mxu0 %v2691
    %3146 = vmatprep.subr.bf16.mxu0 %v2698
    %3147 = vmatpush1.bf16.msra.mxu0 %v2697
    %3148 = vmatprep.subr.bf16.mxu0 %v2704
    %3149 = vmatpush1.bf16.msra.mxu0 %v2703
    %3150 = vmatprep.subr.bf16.mxu0 %v2710
    %3151 = vmatpush1.bf16.msra.mxu0 %v2709
    %3152 = vmatprep.subr.bf16.mxu0 %v2716
    %3153 = vmatpush1.bf16.msra.mxu0 %v2715
    %3154 = vmatprep.subr.bf16.mxu0 %v2722
    %3155 = vmatpush1.bf16.msra.mxu0 %v2721
    %3156 = vmatprep.subr.bf16.mxu0 %v2728
    %3157 = vmatpush1.bf16.msra.mxu0 %v2727
    %3158 = vmatprep.mubr.bf16.mxu0 %v1768
    %3159 = vmatmul.mubr.bf16.gmra.mrb[0].mxu0 %v1767
    %v3160 = vpop.f32.mrb[0].mxu0
    %v3161 = vadd.f32 %v3120, %v3160
    %v3162 = vpop.f32.mrb[0].mxu0
    %v3163 = vadd.f32 %v3122, %v3162
    %v3164 = vpop.f32.mrb[0].mxu0
    %v3165 = vpop.f32.mrb[0].mxu0
    %3166 = vdwg.mxu0
    %v3167 = vxor.u32 %v2997, 2147483648
    %v3168 = vxor.u32 %v2999, 2147483648
    %v3169 = vxor.u32 %v3079, 2147483648
    %v3170 = vxor.u32 %v3081, 2147483648
    %v3171 = vxor.u32 %v3161, 2147483648
    %v3172 = vxor.u32 %v3163, 2147483648
    %v3173 = vmul.f32 %v3167, 1.442695
    %v3174 = vpow.pop %v3173
    %v3175 = vmul.f32 %v3168, 1.442695
    %v3176 = vpow.pop %v3175
    %v3177 = vmul.f32 %v3169, 1.442695
    %v3178 = vpow.pop %v3177
    %v3179 = vmul.f32 %v3170, 1.442695
    %v3180 = vpow.pop %v3179
    %v3181 = vmul.f32 %v3171, 1.442695
    %v3182 = vpow.pop %v3181
    %v3183 = vmul.f32 %v3172, 1.442695
    %v3184 = vpow.pop %v3183
    %v3185 = vadd.f32 %v3174, 1.0
    %v3186 = vadd.f32 %v3176, 1.0
    %v3187 = vadd.f32 %v3178, 1.0
    %v3188 = vadd.f32 %v3180, 1.0
    %v3189 = vadd.f32 %v3182, 1.0
    %v3190 = vadd.f32 %v3184, 1.0
    %v3191 = vrcp.pop %v3185
    %v3192 = vmul.f32 1.0, %v3191
    %v3193 = vrcp.pop %v3186
    %v3194 = vmul.f32 1.0, %v3193
    %v3195 = vrcp.pop %v3187
    %v3196 = vmul.f32 1.0, %v3195
    %v3197 = vrcp.pop %v3188
    %v3198 = vmul.f32 1.0, %v3197
    %v3199 = vrcp.pop %v3189
    %v3200 = vmul.f32 1.0, %v3199
    %v3201 = vrcp.pop %v3190
    %v3202 = vmul.f32 1.0, %v3201
    %v3209 = vcombine.low %v3192, %v3194
    %v3210 = vcombine.low %v3196, %v3198
    %v3212 = vunpack.c.l.s4 1983009808
    %v3213 = vunpack.c.0.s8 %v3212
    %v3214 = vlaneseq
    %v3215 = vshrl.u32 %v3214, 7
    %v3216 = vsub.s32 %v3213, %v3215
    %v3217 = vrot.slane %v3209, %v3216
    %v3219 = vunpack.c.l.s4 1983009808
    %v3220 = vunpack.c.0.s8 %v3219
    %v3221 = vlaneseq
    %v3222 = vshrl.u32 %v3221, 7
    %v3223 = vsub.s32 %v3220, %v3222
    %v3224 = vrot.slane %v3210, %v3223
    %v3225 = vcombine.low %v3217, %v3224
    %v3226 = vcombine.low %v3200, %v3202
    %v3228 = vunpack.c.l.s4 1983009808
    %v3229 = vunpack.c.0.s8 %v3228
    %v3230 = vlaneseq
    %v3231 = vshrl.u32 %v3230, 7
    %v3232 = vsub.s32 %v3229, %v3231
    %v3233 = vrot.slane %v3226, %v3232
    %3236 = vst [vmem:[%s10] sm:$0xff] %v3225
    %3237 = vst [vmem:[%s10 + $0x8] sm:$0xf] %v3233
    // Predicated region
    $region70: #{conditioned_generator_forward.1} parent=1 // pred_check
      _
    $region71: #{conditioned_generator_forward.1} parent=1 // pred_check_branch
      %3239 = sbr.rel (0) target = $region73
    $region72: #{conditioned_generator_forward.1} parent=1 // pred_region
      _
    $region73: #{conditioned_generator_forward.1} parent=1 // pred_fallthru
      _
    // Predicated region
    $region74: #{conditioned_generator_forward.1} parent=1 // pred_check
      _
    $region75: #{conditioned_generator_forward.1} parent=1 // pred_check_branch
      %3241 = sbr.rel (0) target = $region77
    $region76: #{conditioned_generator_forward.1} parent=1 // pred_region
      _
    $region77: #{conditioned_generator_forward.1} parent=1 // pred_fallthru
      _
    %3242 = vsyncpa [#allocation3], 1
    %3243 = vsyncpa [#allocation5], 1
    %3244 = vsyncpa [#allocation8], 1
    %3245 = vsyncpa [#allocation11], 1

</llo_original>
